<compile_context>
chip_gen: v7x
topology: tpu7x:2x2x1
jax: 0.10.0
libtpu: 0.0.40
codegen_flags: <defaults>
</compile_context>

<pallas_src>
import functools

import numpy as np
import jax
import jax.numpy as jnp
from jax.experimental import pallas as pl
from jax.experimental.pallas import tpu as pltpu


def _round_up(x, m):
    return ((x + m - 1) // m) * m


def _pick_tile_k(k, max_tile_k):
    """K-tile: largest multiple-of-128 divisor of K (<= max_tile_k) when K is large and
    128-aligned (keeps the resident weight tile bounded for v7x's 64 MiB VMEM); else full K."""
    if k <= max_tile_k or k % 128 != 0:
        return k
    best = 128
    for d in range(128, max_tile_k + 1, 128):
        if k % d == 0:
            best = d
    return best


# ----------------------------------------------------------------------------
# Pallas kernel: out = [relu]((X @ W) * scale + bias), K-tiled with f32 accumulator.
# X / W are fed to the MXU as bf16; accumulation and the affine/ReLU epilogue stay
# in f32; only the final store casts to the requested output dtype.
# ----------------------------------------------------------------------------
def _fused_matmul_kernel(x_ref, w_ref, scale_ref, bias_ref, o_ref, acc_ref, *, relu):
    @pl.when(pl.program_id(1) == 0)
    def _init():
        acc_ref[...] = jnp.zeros_like(acc_ref)

    acc_ref[...] += jnp.dot(x_ref[...], w_ref[...],
                            preferred_element_type=jnp.float32)

    @pl.when(pl.program_id(1) == pl.num_programs(1) - 1)
    def _finalize():
        out = acc_ref[...] * scale_ref[...] + bias_ref[...]
        if relu:
            out = jnp.maximum(out, 0.0)
        o_ref[...] = out.astype(o_ref.dtype)


def fused_matmul_affine(x, w, scale, bias, *, relu, out_dtype=jnp.float32,
                        tile_m=512, max_tile_k=1024):
    """out = [relu]((x @ w) * scale + bias); x:[M,K], w:[K,N], scale/bias:[N]."""
    M, K = x.shape
    _, N = w.shape

    x = x.astype(jnp.bfloat16)
    w = w.astype(jnp.bfloat16)
    scale2 = scale.reshape(1, N).astype(jnp.float32)
    bias2 = bias.reshape(1, N).astype(jnp.float32)

    # M tiling: big tiles (amortize per-step overhead), but keep >=2 tiles when M allows
    # so the 'parallel' axis can shard across v7x's two TensorCores. No wrapper-side pad:
    # ragged last tiles are handled by Pallas partial-block masking.
    tile_m = min(tile_m, _round_up(M, 8))
    if M > 256 and pl.cdiv(M, tile_m) < 2:
        tile_m = _round_up(pl.cdiv(M, 2), 8)
    grid_m = pl.cdiv(M, tile_m)

    tile_k = _pick_tile_k(K, max_tile_k)
    grid_k = K // tile_k  # tile_k divides K by construction

    out = pl.pallas_call(
        functools.partial(_fused_matmul_kernel, relu=relu),
        out_shape=jax.ShapeDtypeStruct((M, N), out_dtype),
        grid=(grid_m, grid_k),
        in_specs=[
            pl.BlockSpec((tile_m, tile_k), lambda i, k: (i, k)),
            pl.BlockSpec((tile_k, N), lambda i, k: (k, 0)),
            pl.BlockSpec((1, N), lambda i, k: (0, 0)),
            pl.BlockSpec((1, N), lambda i, k: (0, 0)),
        ],
        out_specs=pl.BlockSpec((tile_m, N), lambda i, k: (i, 0)),
        scratch_shapes=[pltpu.VMEM((tile_m, N), jnp.float32)],
        compiler_params=pltpu.CompilerParams(
            dimension_semantics=("parallel", "arbitrary"),
            vmem_limit_bytes=32 * 1024 * 1024),
    )(x, w, scale2, bias2)
    return out


# ----------------------------------------------------------------------------
# Conv helpers (im2col glue in plain JAX/bf16, matmul hot path in Pallas)
# ----------------------------------------------------------------------------
def _im2col_3x3(x, stride):
    # x: [N, H, W, C] (bf16) -> ([N*Ho*Wo, 9*C], (N, Ho, Wo))
    n, h, w, c = x.shape
    xp = jnp.pad(x, ((0, 0), (1, 1), (1, 1), (0, 0)))
    ho = (h + 2 - 3) // stride + 1
    wo = (w + 2 - 3) // stride + 1
    cols = []
    for kh in range(3):
        for kw in range(3):
            cols.append(xp[:, kh:kh + stride * (ho - 1) + 1:stride,
                           kw:kw + stride * (wo - 1) + 1:stride, :])
    patches = jnp.concatenate(cols, axis=-1)
    return patches.reshape(n * ho * wo, 9 * c), (n, ho, wo)


def conv3x3_bn(x, p, *, stride, relu, edge_weight=None, out_dtype=jnp.bfloat16):
    """Conv2d(3x3, pad=1, stride) [+bias] -> BatchNorm(eval) -> optional ReLU.

    If `edge_weight` is given, the NAS edge weight is folded into the affine
    epilogue (valid through ReLU because softmax / core-path weights are > 0).
    """
    w = p["w"]                                   # [3,3,Cin,Cout]
    cout = w.shape[-1]
    patches, (n, ho, wo) = _im2col_3x3(x.astype(jnp.bfloat16), stride)
    wm = w.reshape(-1, cout)
    eps = 1e-5
    bn_scale = p["gamma"] * jax.lax.rsqrt(p["var"] + eps)
    cb = p["cb"] if p["cb"] is not None else jnp.zeros((cout,), jnp.float32)
    bias = (cb - p["mean"]) * bn_scale + p["beta"]
    if edge_weight is not None:
        bn_scale = bn_scale * edge_weight
        bias = bias * edge_weight
    out = fused_matmul_affine(patches, wm, bn_scale, bias, relu=relu,
                              out_dtype=out_dtype)
    return out.reshape(n, ho, wo, cout)


def conv3x3_bn_conv1x1_fused(x, p3, w1x1, b1x1):
    """Conv3x3(bias=False) -> BN(eval) -> Dropout(id) -> Conv1x1, folded into ONE matmul.

    Exact (no ReLU between):  ((P@W1)*s1 + b1)@W2 + b2  ==  P@(W1*s1@W2) + (b1@W2 + b2).
    Avoids materializing the 256-channel intermediate in HBM and drops the 1x1 kernel.
    """
    cmid = p3["w"].shape[-1]
    ncls = w1x1.shape[-1]
    eps = 1e-5
    s1 = p3["gamma"] * jax.lax.rsqrt(p3["var"] + eps)
    b1 = (0.0 - p3["mean"]) * s1 + p3["beta"]
    w1 = p3["w"].reshape(-1, cmid).astype(jnp.float32)     # [9*Cin, Cmid]
    w2 = w1x1.reshape(cmid, ncls).astype(jnp.float32)      # [Cmid, Ncls]
    w_f = (w1 * s1[None, :]) @ w2                          # [9*Cin, Ncls]
    b_f = b1 @ w2 + b1x1                                   # [Ncls]
    patches, (n, ho, wo) = _im2col_3x3(x.astype(jnp.bfloat16), 1)
    out = fused_matmul_affine(patches, w_f, jnp.ones((ncls,), jnp.float32), b_f,
                              relu=False, out_dtype=jnp.float32)
    return out.reshape(n, ho, wo, ncls)


# ----------------------------------------------------------------------------
# Bilinear (align_corners=True) upsample as two interpolation matmuls (no gathers).
# ----------------------------------------------------------------------------
def _interp_matrix(out_size, in_size):
    if out_size == 1:
        src = jnp.zeros((1,), jnp.float32)
    else:
        src = jnp.arange(out_size, dtype=jnp.float32) * ((in_size - 1) / (out_size - 1))
    i0 = jnp.clip(jnp.floor(src).astype(jnp.int32), 0, in_size - 1)
    i1 = jnp.minimum(i0 + 1, in_size - 1)
    w1 = src - i0.astype(jnp.float32)
    w0 = 1.0 - w1
    return (w0[:, None] * jax.nn.one_hot(i0, in_size, dtype=jnp.float32)
            + w1[:, None] * jax.nn.one_hot(i1, in_size, dtype=jnp.float32))


def upsample_bilinear_align_corners(x, out_h, out_w):
    # x: [N, H, W, C]
    n, h, w, c = x.shape
    if (h, w) == (out_h, out_w):
        return x
    xf = x.astype(jnp.float32)
    if out_h != h:
        ry = _interp_matrix(out_h, h)                      # [out_h, H]
        xf = jnp.einsum('ph,nhwc->npwc', ry, xf)
    if out_w != w:
        rx = _interp_matrix(out_w, w)                      # [out_w, W]
        xf = jnp.einsum('qw,nhwc->nhqc', rx, xf)
    return xf.astype(x.dtype)


# ----------------------------------------------------------------------------
# Deterministic parameter init
# ----------------------------------------------------------------------------
def init_conv3x3_bn(key, cin, cout, with_conv_bias):
    k1, k2, k3, k4 = jax.random.split(key, 4)
    return {
        "w": 0.1 * jax.random.normal(k1, (3, 3, cin, cout), jnp.float32),
        "cb": (0.1 * jax.random.normal(k2, (cout,), jnp.float32)
               if with_conv_bias else None),
        "gamma": 1.0 + 0.1 * jax.random.normal(k3, (cout,), jnp.float32),
        "beta": 0.1 * jax.random.normal(k4, (cout,), jnp.float32),
        "mean": jnp.zeros((cout,), jnp.float32),
        "var": jnp.ones((cout,), jnp.float32),
    }


# ----------------------------------------------------------------------------
# SearchNet2
# ----------------------------------------------------------------------------
class SearchNet2Pallas:
    def __init__(self, layers, depth, connections, dataset, num_classes,
                 base_multiplier, core_path, key):
        self.layers = layers
        self.num_layers = len(layers)
        self.depth = depth
        self.connections = connections
        self.num_classes = num_classes
        self.base = base_multiplier
        half_base = base_multiplier // 2

        if 'GID' in dataset:
            input_channel = 4
        elif dataset == 'uadataset_dfc':
            input_channel = 5
        else:
            input_channel = 3
        self.input_channel = input_channel

        self.core_path_betas = np.ones(self.num_layers, dtype=np.float32)
        self.core_connections = [np.array([[-1, 0], [0, 0]])]
        for i in range(self.num_layers - 1):
            self.core_connections.append(
                np.array([[i, core_path[i]], [i + 1, core_path[i + 1]]]))

        key, k0, k1, k2 = jax.random.split(key, 4)
        self.stem0 = init_conv3x3_bn(k0, input_channel, half_base, True)
        self.stem1 = init_conv3x3_bn(k1, half_base, half_base, True)
        self.stem2 = init_conv3x3_bn(k2, half_base, base_multiplier, True)

        multi_dict = {0: 1, 1: 2, 2: 4, 3: 8}
        self.cells = {}
        self.node_add_num = np.zeros((self.num_layers, self.depth), dtype=np.int64)
        max_num_connect = 0
        num_last_features = 0
        for i in range(self.num_layers):
            for j in range(self.depth):
                num_connect = 0
                for conn in self.connections:
                    if conn[1][0] == i and conn[1][1] == j:
                        num_connect += 1
                        if conn[0][0] == -1:
                            cin = base_multiplier * multi_dict[0]
                        else:
                            cin = base_multiplier * multi_dict[conn[0][1]]
                        cout = base_multiplier * multi_dict[conn[1][1]]
                        stride = 2 if cout > cin else 1
                        key, sub = jax.random.split(key)
                        self.cells[(i, j, int(conn[0][0]), int(conn[0][1]))] = {
                            "params": init_conv3x3_bn(sub, cin, cout, False),
                            "stride": stride,
                        }
                self.node_add_num[i, j] = num_connect
                if i == self.num_layers - 1 and num_connect != 0:
                    num_last_features += base_multiplier * multi_dict[j]
                max_num_connect = max(max_num_connect, num_connect)
        self.max_num_connect = max_num_connect

        key, kl0, kl1, kl2, kb = jax.random.split(key, 5)
        self.last_conv0 = init_conv3x3_bn(kl0, num_last_features, 256, False)
        self.last_conv1 = init_conv3x3_bn(kl1, 256, 256, False)
        self.last_conv2_w = 0.1 * jax.random.normal(kl2, (1, 1, 256, num_classes),
                                                    jnp.float32)
        self.last_conv2_b = jnp.zeros((num_classes,), jnp.float32)
        self.betas = 0.001 * jax.random.normal(
            kb, (self.num_layers, self.depth, self.max_num_connect), jnp.float32)

    def forward(self, x_nchw):
        x = jnp.transpose(x_nchw, (0, 2, 3, 1))                    # NHWC
        in_h, in_w = x.shape[1], x.shape[2]
        t = conv3x3_bn(x, self.stem0, stride=2, relu=True)
        t = conv3x3_bn(t, self.stem1, stride=1, relu=True)
        pre_feature = conv3x3_bn(t, self.stem2, stride=2, relu=True)

        # normalized betas: softmax over incoming edges of each node
        nb = {}
        for i in range(self.num_layers):
            for j in range(self.depth):
                num = int(self.node_add_num[i, j])
                if num == 0:
                    continue
                nb[(i, j)] = jax.nn.softmax(self.betas[i, j, :num])

        features = []
        for i in range(self.num_layers):
            features.append([])
            for j in range(self.depth):
                features[i].append(0)
                k = 0
                for conn in self.connections:
                    if conn[1][0] == i and conn[1][1] == j:
                        cell = self.cells[(i, j, int(conn[0][0]), int(conn[0][1]))]
                        src = pre_feature if conn[0][0] == -1 \
                            else features[conn[0][0]][conn[0][1]]
                        if np.array_equal(conn, self.core_connections[i]):
                            wgt = float(self.core_path_betas[i])   # = 1.0 (> 0)
                        else:
                            wgt = nb[(i, j)][k]                    # softmax (> 0)
                        # Edge weight folded into the cell's BN epilogue -> plain add here.
                        out = conv3x3_bn(src, cell["params"], stride=cell["stride"],
                                         relu=True, edge_weight=wgt)
                        features[i][j] = features[i][j] + out
                        k += 1

        last_feats = [f for f in features[self.num_layers - 1]
                      if not isinstance(f, int)]
        th, tw = last_feats[0].shape[1], last_feats[0].shape[2]
        last_feats = [upsample_bilinear_align_corners(f, th, tw) for f in last_feats]
        result = jnp.concatenate(last_feats, axis=-1)

        # last_conv: Conv-BN-(Dropout)-Conv-BN-(Dropout)-Conv1x1  (no ReLU anywhere)
        result = conv3x3_bn(result, self.last_conv0, stride=1, relu=False)
        result = conv3x3_bn_conv1x1_fused(result, self.last_conv1,
                                          self.last_conv2_w, self.last_conv2_b)
        result = upsample_bilinear_align_corners(result, in_h, in_w)
        return jnp.transpose(result, (0, 3, 1, 2))                 # back to NCHW


if __name__ == "__main__":
    key = jax.random.PRNGKey(0)
    key, k_x, k_p = jax.random.split(key, 3)

    # Small synthetic architecture: 2 layers, depth 2, base_multiplier 8, GID (4-ch input)
    layers = [1, 1]
    depth = 2
    connections = np.array([
        [[-1, 0], [0, 0]],
        [[-1, 0], [0, 1]],
        [[0, 0], [1, 0]],
        [[0, 0], [1, 1]],
        [[0, 1], [1, 1]],
    ])
    core_path = [0, 1]
    num_classes = 3

    net = SearchNet2Pallas(layers, depth, connections, dataset='GID',
                           num_classes=num_classes, base_multiplier=8,
                           core_path=core_path, key=k_p)

    x = jax.random.normal(k_x, (2, 4, 32, 32), jnp.float32)  # NCHW, like PyTorch
    fwd = jax.jit(net.forward)
    out = fwd(x)
    out = jax.block_until_ready(out)
    assert out.shape == (2, num_classes, 32, 32), out.shape
    assert bool(jnp.all(jnp.isfinite(out)))
    print("KERNEL_OK")
</pallas_src>

<mosaic_0001>
module attributes {stable_mosaic.version = 11 : i64} {
  func.func @_fused_matmul_kernel(%arg0: i32, %arg1: i32, %arg2: memref<256x36xbf16, #tpu.memory_space<vmem>>, %arg3: memref<36x4xbf16, #tpu.memory_space<vmem>>, %arg4: memref<1x4xf32, #tpu.memory_space<vmem>>, %arg5: memref<1x4xf32, #tpu.memory_space<vmem>>, %arg6: memref<256x4xbf16, #tpu.memory_space<vmem>>, %arg7: memref<256x4xf32, #tpu.memory_space<vmem>>) attributes {dimension_semantics = [#tpu.dimension_semantics<parallel>, #tpu.dimension_semantics<arbitrary>], iteration_bounds = array<i64: 2, 1>, scalar_prefetch = 0 : i64, scratch_operands = 1 : i64, tpu.core_type = #tpu.core_type<tc>, window_params = [{transform_indices = @transform_0, window_bounds = array<i64: 256, 36>}, {transform_indices = @transform_1, window_bounds = array<i64: 36, 4>}, {pipeline_mode = #tpu.pipeline_mode<synchronous>, transform_indices = @transform_2, window_bounds = array<i64: 1, 4>}, {pipeline_mode = #tpu.pipeline_mode<synchronous>, transform_indices = @transform_3, window_bounds = array<i64: 1, 4>}, {transform_indices = @transform_4, window_bounds = array<i64: 256, 4>}]} {
    %c0_i32 = arith.constant 0 : i32
    %0 = arith.cmpi eq, %arg1, %c0_i32 : i32
    %1 = arith.extui %0 : i1 to i32
    %c0_i32_0 = arith.constant 0 : i32
    %2 = arith.cmpi ne, %1, %c0_i32_0 : i32
    scf.if %2 {
      %cst_10 = arith.constant 0.000000e+00 : f32
      %12 = vector.broadcast %cst_10 : f32 to vector<256x4xf32>
      %c0_11 = arith.constant 0 : index
      %c0_12 = arith.constant 0 : index
      %13 = vector.load %arg7[%c0_11, %c0_12] : memref<256x4xf32, #tpu.memory_space<vmem>>, vector<256x4xf32>
      tpu.vector_store %arg7[%c0_11, %c0_12], %12 {strides = array<i32>} : memref<256x4xf32, #tpu.memory_space<vmem>>, vector<256x4xf32>,
    } else {
    }
    %c0 = arith.constant 0 : index
    %c0_1 = arith.constant 0 : index
    %3 = vector.load %arg7[%c0, %c0_1] : memref<256x4xf32, #tpu.memory_space<vmem>>, vector<256x4xf32>
    %c0_2 = arith.constant 0 : index
    %c0_3 = arith.constant 0 : index
    %4 = vector.load %arg2[%c0_2, %c0_3] : memref<256x36xbf16, #tpu.memory_space<vmem>>, vector<256x36xbf16>
    %c0_4 = arith.constant 0 : index
    %c0_5 = arith.constant 0 : index
    %5 = vector.load %arg3[%c0_4, %c0_5] : memref<36x4xbf16, #tpu.memory_space<vmem>>, vector<36x4xbf16>
    %cst = arith.constant dense<0.000000e+00> : vector<256x4xf32>
    %6 = tpu.matmul %4, %5, %cst {dimension_numbers = #tpu.dot_dimension_numbers<[1], [0], [0], [1], [0, 0, 1, 1], [], []>} : vector<256x36xbf16>, vector<36x4xbf16>, vector<256x4xf32> -> vector<256x4xf32>
    %7 = arith.addf %3, %6 : vector<256x4xf32>
    %c0_6 = arith.constant 0 : index
    %c0_7 = arith.constant 0 : index
    %8 = vector.load %arg7[%c0_6, %c0_7] : memref<256x4xf32, #tpu.memory_space<vmem>>, vector<256x4xf32>
    tpu.vector_store %arg7[%c0_6, %c0_7], %7 {strides = array<i32>} : memref<256x4xf32, #tpu.memory_space<vmem>>, vector<256x4xf32>,
    %c0_i32_8 = arith.constant 0 : i32
    %9 = arith.cmpi eq, %arg1, %c0_i32_8 : i32
    %10 = arith.extui %9 : i1 to i32
    %c0_i32_9 = arith.constant 0 : i32
    %11 = arith.cmpi ne, %10, %c0_i32_9 : i32
    scf.if %11 {
      %c0_10 = arith.constant 0 : index
      %c0_11 = arith.constant 0 : index
      %12 = vector.load %arg7[%c0_10, %c0_11] : memref<256x4xf32, #tpu.memory_space<vmem>>, vector<256x4xf32>
      %c0_12 = arith.constant 0 : index
      %c0_13 = arith.constant 0 : index
      %13 = vector.load %arg4[%c0_12, %c0_13] : memref<1x4xf32, #tpu.memory_space<vmem>>, vector<1x4xf32>
      %14 = vector.broadcast %13 : vector<1x4xf32> to vector<256x4xf32>
      %15 = arith.mulf %12, %14 : vector<256x4xf32>
      %c0_14 = arith.constant 0 : index
      %c0_15 = arith.constant 0 : index
      %16 = vector.load %arg5[%c0_14, %c0_15] : memref<1x4xf32, #tpu.memory_space<vmem>>, vector<1x4xf32>
      %17 = vector.broadcast %16 : vector<1x4xf32> to vector<256x4xf32>
      %18 = arith.addf %15, %17 : vector<256x4xf32>
      %cst_16 = arith.constant 0.000000e+00 : f32
      %19 = vector.broadcast %cst_16 : f32 to vector<256x4xf32>
      %20 = arith.maximumf %18, %19 : vector<256x4xf32>
      %21 = arith.truncf %20 : vector<256x4xf32> to vector<256x4xbf16>
      %c0_17 = arith.constant 0 : index
      %c0_18 = arith.constant 0 : index
      %22 = vector.load %arg6[%c0_17, %c0_18] : memref<256x4xbf16, #tpu.memory_space<vmem>>, vector<256x4xbf16>
      tpu.vector_store %arg6[%c0_17, %c0_18], %21 {strides = array<i32>} : memref<256x4xbf16, #tpu.memory_space<vmem>>, vector<256x4xbf16>,
    } else {
    }
    return
  }
  func.func @transform_0(%arg0: i32, %arg1: i32) -> (i32, i32) {
    %c0_i32 = arith.constant 0 : i32
    return %arg0, %arg1 : i32, i32
  }
  func.func @transform_1(%arg0: i32, %arg1: i32) -> (i32, i32) {
    %c0_i32 = arith.constant 0 : i32
    %c0_i32_0 = arith.constant 0 : i32
    return %arg1, %c0_i32 : i32, i32
  }
  func.func @transform_2(%arg0: i32, %arg1: i32) -> (i32, i32) {
    %c0_i32 = arith.constant 0 : i32
    %c0_i32_0 = arith.constant 0 : i32
    %c0_i32_1 = arith.constant 0 : i32
    return %c0_i32, %c0_i32_0 : i32, i32
  }
  func.func @transform_3(%arg0: i32, %arg1: i32) -> (i32, i32) {
    %c0_i32 = arith.constant 0 : i32
    %c0_i32_0 = arith.constant 0 : i32
    %c0_i32_1 = arith.constant 0 : i32
    return %c0_i32, %c0_i32_0 : i32, i32
  }
  func.func @transform_4(%arg0: i32, %arg1: i32) -> (i32, i32) {
    %c0_i32 = arith.constant 0 : i32
    %c0_i32_0 = arith.constant 0 : i32
    return %arg0, %c0_i32 : i32, i32
  }
}

module attributes {stable_mosaic.version = 11 : i64} {
  func.func @_fused_matmul_kernel(%arg0: i32, %arg1: i32, %arg2: memref<128x36xbf16, #tpu.memory_space<vmem>>, %arg3: memref<36x8xbf16, #tpu.memory_space<vmem>>, %arg4: memref<1x8xf32, #tpu.memory_space<vmem>>, %arg5: memref<1x8xf32, #tpu.memory_space<vmem>>, %arg6: memref<128x8xbf16, #tpu.memory_space<vmem>>, %arg7: memref<128x8xf32, #tpu.memory_space<vmem>>) attributes {dimension_semantics = [#tpu.dimension_semantics<parallel>, #tpu.dimension_semantics<arbitrary>], iteration_bounds = array<i64: 1, 1>, scalar_prefetch = 0 : i64, scratch_operands = 1 : i64, tpu.core_type = #tpu.core_type<tc>, window_params = [{transform_indices = @transform_0, window_bounds = array<i64: 128, 36>}, {transform_indices = @transform_1, window_bounds = array<i64: 36, 8>}, {pipeline_mode = #tpu.pipeline_mode<synchronous>, transform_indices = @transform_2, window_bounds = array<i64: 1, 8>}, {pipeline_mode = #tpu.pipeline_mode<synchronous>, transform_indices = @transform_3, window_bounds = array<i64: 1, 8>}, {transform_indices = @transform_4, window_bounds = array<i64: 128, 8>}]} {
    %c0_i32 = arith.constant 0 : i32
    %0 = arith.cmpi eq, %arg1, %c0_i32 : i32
    %1 = arith.extui %0 : i1 to i32
    %c0_i32_0 = arith.constant 0 : i32
    %2 = arith.cmpi ne, %1, %c0_i32_0 : i32
    scf.if %2 {
      %cst_10 = arith.constant 0.000000e+00 : f32
      %12 = vector.broadcast %cst_10 : f32 to vector<128x8xf32>
      %c0_11 = arith.constant 0 : index
      %c0_12 = arith.constant 0 : index
      %13 = vector.load %arg7[%c0_11, %c0_12] : memref<128x8xf32, #tpu.memory_space<vmem>>, vector<128x8xf32>
      tpu.vector_store %arg7[%c0_11, %c0_12], %12 {strides = array<i32>} : memref<128x8xf32, #tpu.memory_space<vmem>>, vector<128x8xf32>,
    } else {
    }
    %c0 = arith.constant 0 : index
    %c0_1 = arith.constant 0 : index
    %3 = vector.load %arg7[%c0, %c0_1] : memref<128x8xf32, #tpu.memory_space<vmem>>, vector<128x8xf32>
    %c0_2 = arith.constant 0 : index
    %c0_3 = arith.constant 0 : index
    %4 = vector.load %arg2[%c0_2, %c0_3] : memref<128x36xbf16, #tpu.memory_space<vmem>>, vector<128x36xbf16>
    %c0_4 = arith.constant 0 : index
    %c0_5 = arith.constant 0 : index
    %5 = vector.load %arg3[%c0_4, %c0_5] : memref<36x8xbf16, #tpu.memory_space<vmem>>, vector<36x8xbf16>
    %cst = arith.constant dense<0.000000e+00> : vector<128x8xf32>
    %6 = tpu.matmul %4, %5, %cst {dimension_numbers = #tpu.dot_dimension_numbers<[1], [0], [0], [1], [0, 0, 1, 1], [], []>} : vector<128x36xbf16>, vector<36x8xbf16>, vector<128x8xf32> -> vector<128x8xf32>
    %7 = arith.addf %3, %6 : vector<128x8xf32>
    %c0_6 = arith.constant 0 : index
    %c0_7 = arith.constant 0 : index
    %8 = vector.load %arg7[%c0_6, %c0_7] : memref<128x8xf32, #tpu.memory_space<vmem>>, vector<128x8xf32>
    tpu.vector_store %arg7[%c0_6, %c0_7], %7 {strides = array<i32>} : memref<128x8xf32, #tpu.memory_space<vmem>>, vector<128x8xf32>,
    %c0_i32_8 = arith.constant 0 : i32
    %9 = arith.cmpi eq, %arg1, %c0_i32_8 : i32
    %10 = arith.extui %9 : i1 to i32
    %c0_i32_9 = arith.constant 0 : i32
    %11 = arith.cmpi ne, %10, %c0_i32_9 : i32
    scf.if %11 {
      %c0_10 = arith.constant 0 : index
      %c0_11 = arith.constant 0 : index
      %12 = vector.load %arg7[%c0_10, %c0_11] : memref<128x8xf32, #tpu.memory_space<vmem>>, vector<128x8xf32>
      %c0_12 = arith.constant 0 : index
      %c0_13 = arith.constant 0 : index
      %13 = vector.load %arg4[%c0_12, %c0_13] : memref<1x8xf32, #tpu.memory_space<vmem>>, vector<1x8xf32>
      %14 = vector.broadcast %13 : vector<1x8xf32> to vector<128x8xf32>
      %15 = arith.mulf %12, %14 : vector<128x8xf32>
      %c0_14 = arith.constant 0 : index
      %c0_15 = arith.constant 0 : index
      %16 = vector.load %arg5[%c0_14, %c0_15] : memref<1x8xf32, #tpu.memory_space<vmem>>, vector<1x8xf32>
      %17 = vector.broadcast %16 : vector<1x8xf32> to vector<128x8xf32>
      %18 = arith.addf %15, %17 : vector<128x8xf32>
      %cst_16 = arith.constant 0.000000e+00 : f32
      %19 = vector.broadcast %cst_16 : f32 to vector<128x8xf32>
      %20 = arith.maximumf %18, %19 : vector<128x8xf32>
      %21 = arith.truncf %20 : vector<128x8xf32> to vector<128x8xbf16>
      %c0_17 = arith.constant 0 : index
      %c0_18 = arith.constant 0 : index
      %22 = vector.load %arg6[%c0_17, %c0_18] : memref<128x8xbf16, #tpu.memory_space<vmem>>, vector<128x8xbf16>
      tpu.vector_store %arg6[%c0_17, %c0_18], %21 {strides = array<i32>} : memref<128x8xbf16, #tpu.memory_space<vmem>>, vector<128x8xbf16>,
    } else {
    }
    return
  }
  func.func @transform_0(%arg0: i32, %arg1: i32) -> (i32, i32) {
    %c0_i32 = arith.constant 0 : i32
    return %arg0, %arg1 : i32, i32
  }
  func.func @transform_1(%arg0: i32, %arg1: i32) -> (i32, i32) {
    %c0_i32 = arith.constant 0 : i32
    %c0_i32_0 = arith.constant 0 : i32
    return %arg1, %c0_i32 : i32, i32
  }
  func.func @transform_2(%arg0: i32, %arg1: i32) -> (i32, i32) {
    %c0_i32 = arith.constant 0 : i32
    %c0_i32_0 = arith.constant 0 : i32
    %c0_i32_1 = arith.constant 0 : i32
    return %c0_i32, %c0_i32_0 : i32, i32
  }
  func.func @transform_3(%arg0: i32, %arg1: i32) -> (i32, i32) {
    %c0_i32 = arith.constant 0 : i32
    %c0_i32_0 = arith.constant 0 : i32
    %c0_i32_1 = arith.constant 0 : i32
    return %c0_i32, %c0_i32_0 : i32, i32
  }
  func.func @transform_4(%arg0: i32, %arg1: i32) -> (i32, i32) {
    %c0_i32 = arith.constant 0 : i32
    %c0_i32_0 = arith.constant 0 : i32
    return %arg0, %c0_i32 : i32, i32
  }
}

module attributes {stable_mosaic.version = 11 : i64} {
  func.func @_fused_matmul_kernel(%arg0: i32, %arg1: i32, %arg2: memref<128x72xbf16, #tpu.memory_space<vmem>>, %arg3: memref<72x8xbf16, #tpu.memory_space<vmem>>, %arg4: memref<1x8xf32, #tpu.memory_space<vmem>>, %arg5: memref<1x8xf32, #tpu.memory_space<vmem>>, %arg6: memref<128x8xbf16, #tpu.memory_space<vmem>>, %arg7: memref<128x8xf32, #tpu.memory_space<vmem>>) attributes {dimension_semantics = [#tpu.dimension_semantics<parallel>, #tpu.dimension_semantics<arbitrary>], iteration_bounds = array<i64: 1, 1>, scalar_prefetch = 0 : i64, scratch_operands = 1 : i64, tpu.core_type = #tpu.core_type<tc>, window_params = [{transform_indices = @transform_0, window_bounds = array<i64: 128, 72>}, {transform_indices = @transform_1, window_bounds = array<i64: 72, 8>}, {pipeline_mode = #tpu.pipeline_mode<synchronous>, transform_indices = @transform_2, window_bounds = array<i64: 1, 8>}, {pipeline_mode = #tpu.pipeline_mode<synchronous>, transform_indices = @transform_3, window_bounds = array<i64: 1, 8>}, {transform_indices = @transform_4, window_bounds = array<i64: 128, 8>}]} {
    %c0_i32 = arith.constant 0 : i32
    %0 = arith.cmpi eq, %arg1, %c0_i32 : i32
    %1 = arith.extui %0 : i1 to i32
    %c0_i32_0 = arith.constant 0 : i32
    %2 = arith.cmpi ne, %1, %c0_i32_0 : i32
    scf.if %2 {
      %cst_10 = arith.constant 0.000000e+00 : f32
      %12 = vector.broadcast %cst_10 : f32 to vector<128x8xf32>
      %c0_11 = arith.constant 0 : index
      %c0_12 = arith.constant 0 : index
      %13 = vector.load %arg7[%c0_11, %c0_12] : memref<128x8xf32, #tpu.memory_space<vmem>>, vector<128x8xf32>
      tpu.vector_store %arg7[%c0_11, %c0_12], %12 {strides = array<i32>} : memref<128x8xf32, #tpu.memory_space<vmem>>, vector<128x8xf32>,
    } else {
    }
    %c0 = arith.constant 0 : index
    %c0_1 = arith.constant 0 : index
    %3 = vector.load %arg7[%c0, %c0_1] : memref<128x8xf32, #tpu.memory_space<vmem>>, vector<128x8xf32>
    %c0_2 = arith.constant 0 : index
    %c0_3 = arith.constant 0 : index
    %4 = vector.load %arg2[%c0_2, %c0_3] : memref<128x72xbf16, #tpu.memory_space<vmem>>, vector<128x72xbf16>
    %c0_4 = arith.constant 0 : index
    %c0_5 = arith.constant 0 : index
    %5 = vector.load %arg3[%c0_4, %c0_5] : memref<72x8xbf16, #tpu.memory_space<vmem>>, vector<72x8xbf16>
    %cst = arith.constant dense<0.000000e+00> : vector<128x8xf32>
    %6 = tpu.matmul %4, %5, %cst {dimension_numbers = #tpu.dot_dimension_numbers<[1], [0], [0], [1], [0, 0, 1, 1], [], []>} : vector<128x72xbf16>, vector<72x8xbf16>, vector<128x8xf32> -> vector<128x8xf32>
    %7 = arith.addf %3, %6 : vector<128x8xf32>
    %c0_6 = arith.constant 0 : index
    %c0_7 = arith.constant 0 : index
    %8 = vector.load %arg7[%c0_6, %c0_7] : memref<128x8xf32, #tpu.memory_space<vmem>>, vector<128x8xf32>
    tpu.vector_store %arg7[%c0_6, %c0_7], %7 {strides = array<i32>} : memref<128x8xf32, #tpu.memory_space<vmem>>, vector<128x8xf32>,
    %c0_i32_8 = arith.constant 0 : i32
    %9 = arith.cmpi eq, %arg1, %c0_i32_8 : i32
    %10 = arith.extui %9 : i1 to i32
    %c0_i32_9 = arith.constant 0 : i32
    %11 = arith.cmpi ne, %10, %c0_i32_9 : i32
    scf.if %11 {
      %c0_10 = arith.constant 0 : index
      %c0_11 = arith.constant 0 : index
      %12 = vector.load %arg7[%c0_10, %c0_11] : memref<128x8xf32, #tpu.memory_space<vmem>>, vector<128x8xf32>
      %c0_12 = arith.constant 0 : index
      %c0_13 = arith.constant 0 : index
      %13 = vector.load %arg4[%c0_12, %c0_13] : memref<1x8xf32, #tpu.memory_space<vmem>>, vector<1x8xf32>
      %14 = vector.broadcast %13 : vector<1x8xf32> to vector<128x8xf32>
      %15 = arith.mulf %12, %14 : vector<128x8xf32>
      %c0_14 = arith.constant 0 : index
      %c0_15 = arith.constant 0 : index
      %16 = vector.load %arg5[%c0_14, %c0_15] : memref<1x8xf32, #tpu.memory_space<vmem>>, vector<1x8xf32>
      %17 = vector.broadcast %16 : vector<1x8xf32> to vector<128x8xf32>
      %18 = arith.addf %15, %17 : vector<128x8xf32>
      %cst_16 = arith.constant 0.000000e+00 : f32
      %19 = vector.broadcast %cst_16 : f32 to vector<128x8xf32>
      %20 = arith.maximumf %18, %19 : vector<128x8xf32>
      %21 = arith.truncf %20 : vector<128x8xf32> to vector<128x8xbf16>
      %c0_17 = arith.constant 0 : index
      %c0_18 = arith.constant 0 : index
      %22 = vector.load %arg6[%c0_17, %c0_18] : memref<128x8xbf16, #tpu.memory_space<vmem>>, vector<128x8xbf16>
      tpu.vector_store %arg6[%c0_17, %c0_18], %21 {strides = array<i32>} : memref<128x8xbf16, #tpu.memory_space<vmem>>, vector<128x8xbf16>,
    } else {
    }
    return
  }
  func.func @transform_0(%arg0: i32, %arg1: i32) -> (i32, i32) {
    %c0_i32 = arith.constant 0 : i32
    return %arg0, %arg1 : i32, i32
  }
  func.func @transform_1(%arg0: i32, %arg1: i32) -> (i32, i32) {
    %c0_i32 = arith.constant 0 : i32
    %c0_i32_0 = arith.constant 0 : i32
    return %arg1, %c0_i32 : i32, i32
  }
  func.func @transform_2(%arg0: i32, %arg1: i32) -> (i32, i32) {
    %c0_i32 = arith.constant 0 : i32
    %c0_i32_0 = arith.constant 0 : i32
    %c0_i32_1 = arith.constant 0 : i32
    return %c0_i32, %c0_i32_0 : i32, i32
  }
  func.func @transform_3(%arg0: i32, %arg1: i32) -> (i32, i32) {
    %c0_i32 = arith.constant 0 : i32
    %c0_i32_0 = arith.constant 0 : i32
    %c0_i32_1 = arith.constant 0 : i32
    return %c0_i32, %c0_i32_0 : i32, i32
  }
  func.func @transform_4(%arg0: i32, %arg1: i32) -> (i32, i32) {
    %c0_i32 = arith.constant 0 : i32
    %c0_i32_0 = arith.constant 0 : i32
    return %arg0, %c0_i32 : i32, i32
  }
}

module attributes {stable_mosaic.version = 11 : i64} {
  func.func @_fused_matmul_kernel(%arg0: i32, %arg1: i32, %arg2: memref<32x72xbf16, #tpu.memory_space<vmem>>, %arg3: memref<72x16xbf16, #tpu.memory_space<vmem>>, %arg4: memref<1x16xf32, #tpu.memory_space<vmem>>, %arg5: memref<1x16xf32, #tpu.memory_space<vmem>>, %arg6: memref<32x16xbf16, #tpu.memory_space<vmem>>, %arg7: memref<32x16xf32, #tpu.memory_space<vmem>>) attributes {dimension_semantics = [#tpu.dimension_semantics<parallel>, #tpu.dimension_semantics<arbitrary>], iteration_bounds = array<i64: 1, 1>, scalar_prefetch = 0 : i64, scratch_operands = 1 : i64, tpu.core_type = #tpu.core_type<tc>, window_params = [{transform_indices = @transform_0, window_bounds = array<i64: 32, 72>}, {transform_indices = @transform_1, window_bounds = array<i64: 72, 16>}, {pipeline_mode = #tpu.pipeline_mode<synchronous>, transform_indices = @transform_2, window_bounds = array<i64: 1, 16>}, {pipeline_mode = #tpu.pipeline_mode<synchronous>, transform_indices = @transform_3, window_bounds = array<i64: 1, 16>}, {transform_indices = @transform_4, window_bounds = array<i64: 32, 16>}]} {
    %c0_i32 = arith.constant 0 : i32
    %0 = arith.cmpi eq, %arg1, %c0_i32 : i32
    %1 = arith.extui %0 : i1 to i32
    %c0_i32_0 = arith.constant 0 : i32
    %2 = arith.cmpi ne, %1, %c0_i32_0 : i32
    scf.if %2 {
      %cst_10 = arith.constant 0.000000e+00 : f32
      %12 = vector.broadcast %cst_10 : f32 to vector<32x16xf32>
      %c0_11 = arith.constant 0 : index
      %c0_12 = arith.constant 0 : index
      %13 = vector.load %arg7[%c0_11, %c0_12] : memref<32x16xf32, #tpu.memory_space<vmem>>, vector<32x16xf32>
      tpu.vector_store %arg7[%c0_11, %c0_12], %12 {strides = array<i32>} : memref<32x16xf32, #tpu.memory_space<vmem>>, vector<32x16xf32>,
    } else {
    }
    %c0 = arith.constant 0 : index
    %c0_1 = arith.constant 0 : index
    %3 = vector.load %arg7[%c0, %c0_1] : memref<32x16xf32, #tpu.memory_space<vmem>>, vector<32x16xf32>
    %c0_2 = arith.constant 0 : index
    %c0_3 = arith.constant 0 : index
    %4 = vector.load %arg2[%c0_2, %c0_3] : memref<32x72xbf16, #tpu.memory_space<vmem>>, vector<32x72xbf16>
    %c0_4 = arith.constant 0 : index
    %c0_5 = arith.constant 0 : index
    %5 = vector.load %arg3[%c0_4, %c0_5] : memref<72x16xbf16, #tpu.memory_space<vmem>>, vector<72x16xbf16>
    %cst = arith.constant dense<0.000000e+00> : vector<32x16xf32>
    %6 = tpu.matmul %4, %5, %cst {dimension_numbers = #tpu.dot_dimension_numbers<[1], [0], [0], [1], [0, 0, 1, 1], [], []>} : vector<32x72xbf16>, vector<72x16xbf16>, vector<32x16xf32> -> vector<32x16xf32>
    %7 = arith.addf %3, %6 : vector<32x16xf32>
    %c0_6 = arith.constant 0 : index
    %c0_7 = arith.constant 0 : index
    %8 = vector.load %arg7[%c0_6, %c0_7] : memref<32x16xf32, #tpu.memory_space<vmem>>, vector<32x16xf32>
    tpu.vector_store %arg7[%c0_6, %c0_7], %7 {strides = array<i32>} : memref<32x16xf32, #tpu.memory_space<vmem>>, vector<32x16xf32>,
    %c0_i32_8 = arith.constant 0 : i32
    %9 = arith.cmpi eq, %arg1, %c0_i32_8 : i32
    %10 = arith.extui %9 : i1 to i32
    %c0_i32_9 = arith.constant 0 : i32
    %11 = arith.cmpi ne, %10, %c0_i32_9 : i32
    scf.if %11 {
      %c0_10 = arith.constant 0 : index
      %c0_11 = arith.constant 0 : index
      %12 = vector.load %arg7[%c0_10, %c0_11] : memref<32x16xf32, #tpu.memory_space<vmem>>, vector<32x16xf32>
      %c0_12 = arith.constant 0 : index
      %c0_13 = arith.constant 0 : index
      %13 = vector.load %arg4[%c0_12, %c0_13] : memref<1x16xf32, #tpu.memory_space<vmem>>, vector<1x16xf32>
      %14 = vector.broadcast %13 : vector<1x16xf32> to vector<32x16xf32>
      %15 = arith.mulf %12, %14 : vector<32x16xf32>
      %c0_14 = arith.constant 0 : index
      %c0_15 = arith.constant 0 : index
      %16 = vector.load %arg5[%c0_14, %c0_15] : memref<1x16xf32, #tpu.memory_space<vmem>>, vector<1x16xf32>
      %17 = vector.broadcast %16 : vector<1x16xf32> to vector<32x16xf32>
      %18 = arith.addf %15, %17 : vector<32x16xf32>
      %cst_16 = arith.constant 0.000000e+00 : f32
      %19 = vector.broadcast %cst_16 : f32 to vector<32x16xf32>
      %20 = arith.maximumf %18, %19 : vector<32x16xf32>
      %21 = arith.truncf %20 : vector<32x16xf32> to vector<32x16xbf16>
      %c0_17 = arith.constant 0 : index
      %c0_18 = arith.constant 0 : index
      %22 = vector.load %arg6[%c0_17, %c0_18] : memref<32x16xbf16, #tpu.memory_space<vmem>>, vector<32x16xbf16>
      tpu.vector_store %arg6[%c0_17, %c0_18], %21 {strides = array<i32>} : memref<32x16xbf16, #tpu.memory_space<vmem>>, vector<32x16xbf16>,
    } else {
    }
    return
  }
  func.func @transform_0(%arg0: i32, %arg1: i32) -> (i32, i32) {
    %c0_i32 = arith.constant 0 : i32
    return %arg0, %arg1 : i32, i32
  }
  func.func @transform_1(%arg0: i32, %arg1: i32) -> (i32, i32) {
    %c0_i32 = arith.constant 0 : i32
    %c0_i32_0 = arith.constant 0 : i32
    return %arg1, %c0_i32 : i32, i32
  }
  func.func @transform_2(%arg0: i32, %arg1: i32) -> (i32, i32) {
    %c0_i32 = arith.constant 0 : i32
    %c0_i32_0 = arith.constant 0 : i32
    %c0_i32_1 = arith.constant 0 : i32
    return %c0_i32, %c0_i32_0 : i32, i32
  }
  func.func @transform_3(%arg0: i32, %arg1: i32) -> (i32, i32) {
    %c0_i32 = arith.constant 0 : i32
    %c0_i32_0 = arith.constant 0 : i32
    %c0_i32_1 = arith.constant 0 : i32
    return %c0_i32, %c0_i32_0 : i32, i32
  }
  func.func @transform_4(%arg0: i32, %arg1: i32) -> (i32, i32) {
    %c0_i32 = arith.constant 0 : i32
    %c0_i32_0 = arith.constant 0 : i32
    return %arg0, %c0_i32 : i32, i32
  }
}

module attributes {stable_mosaic.version = 11 : i64} {
  func.func @_fused_matmul_kernel(%arg0: i32, %arg1: i32, %arg2: memref<32x144xbf16, #tpu.memory_space<vmem>>, %arg3: memref<144x16xbf16, #tpu.memory_space<vmem>>, %arg4: memref<1x16xf32, #tpu.memory_space<vmem>>, %arg5: memref<1x16xf32, #tpu.memory_space<vmem>>, %arg6: memref<32x16xbf16, #tpu.memory_space<vmem>>, %arg7: memref<32x16xf32, #tpu.memory_space<vmem>>) attributes {dimension_semantics = [#tpu.dimension_semantics<parallel>, #tpu.dimension_semantics<arbitrary>], iteration_bounds = array<i64: 1, 1>, scalar_prefetch = 0 : i64, scratch_operands = 1 : i64, tpu.core_type = #tpu.core_type<tc>, window_params = [{transform_indices = @transform_0, window_bounds = array<i64: 32, 144>}, {transform_indices = @transform_1, window_bounds = array<i64: 144, 16>}, {pipeline_mode = #tpu.pipeline_mode<synchronous>, transform_indices = @transform_2, window_bounds = array<i64: 1, 16>}, {pipeline_mode = #tpu.pipeline_mode<synchronous>, transform_indices = @transform_3, window_bounds = array<i64: 1, 16>}, {transform_indices = @transform_4, window_bounds = array<i64: 32, 16>}]} {
    %c0_i32 = arith.constant 0 : i32
    %0 = arith.cmpi eq, %arg1, %c0_i32 : i32
    %1 = arith.extui %0 : i1 to i32
    %c0_i32_0 = arith.constant 0 : i32
    %2 = arith.cmpi ne, %1, %c0_i32_0 : i32
    scf.if %2 {
      %cst_10 = arith.constant 0.000000e+00 : f32
      %12 = vector.broadcast %cst_10 : f32 to vector<32x16xf32>
      %c0_11 = arith.constant 0 : index
      %c0_12 = arith.constant 0 : index
      %13 = vector.load %arg7[%c0_11, %c0_12] : memref<32x16xf32, #tpu.memory_space<vmem>>, vector<32x16xf32>
      tpu.vector_store %arg7[%c0_11, %c0_12], %12 {strides = array<i32>} : memref<32x16xf32, #tpu.memory_space<vmem>>, vector<32x16xf32>,
    } else {
    }
    %c0 = arith.constant 0 : index
    %c0_1 = arith.constant 0 : index
    %3 = vector.load %arg7[%c0, %c0_1] : memref<32x16xf32, #tpu.memory_space<vmem>>, vector<32x16xf32>
    %c0_2 = arith.constant 0 : index
    %c0_3 = arith.constant 0 : index
    %4 = vector.load %arg2[%c0_2, %c0_3] : memref<32x144xbf16, #tpu.memory_space<vmem>>, vector<32x144xbf16>
    %c0_4 = arith.constant 0 : index
    %c0_5 = arith.constant 0 : index
    %5 = vector.load %arg3[%c0_4, %c0_5] : memref<144x16xbf16, #tpu.memory_space<vmem>>, vector<144x16xbf16>
    %cst = arith.constant dense<0.000000e+00> : vector<32x16xf32>
    %6 = tpu.matmul %4, %5, %cst {dimension_numbers = #tpu.dot_dimension_numbers<[1], [0], [0], [1], [0, 0, 1, 1], [], []>} : vector<32x144xbf16>, vector<144x16xbf16>, vector<32x16xf32> -> vector<32x16xf32>
    %7 = arith.addf %3, %6 : vector<32x16xf32>
    %c0_6 = arith.constant 0 : index
    %c0_7 = arith.constant 0 : index
    %8 = vector.load %arg7[%c0_6, %c0_7] : memref<32x16xf32, #tpu.memory_space<vmem>>, vector<32x16xf32>
    tpu.vector_store %arg7[%c0_6, %c0_7], %7 {strides = array<i32>} : memref<32x16xf32, #tpu.memory_space<vmem>>, vector<32x16xf32>,
    %c0_i32_8 = arith.constant 0 : i32
    %9 = arith.cmpi eq, %arg1, %c0_i32_8 : i32
    %10 = arith.extui %9 : i1 to i32
    %c0_i32_9 = arith.constant 0 : i32
    %11 = arith.cmpi ne, %10, %c0_i32_9 : i32
    scf.if %11 {
      %c0_10 = arith.constant 0 : index
      %c0_11 = arith.constant 0 : index
      %12 = vector.load %arg7[%c0_10, %c0_11] : memref<32x16xf32, #tpu.memory_space<vmem>>, vector<32x16xf32>
      %c0_12 = arith.constant 0 : index
      %c0_13 = arith.constant 0 : index
      %13 = vector.load %arg4[%c0_12, %c0_13] : memref<1x16xf32, #tpu.memory_space<vmem>>, vector<1x16xf32>
      %14 = vector.broadcast %13 : vector<1x16xf32> to vector<32x16xf32>
      %15 = arith.mulf %12, %14 : vector<32x16xf32>
      %c0_14 = arith.constant 0 : index
      %c0_15 = arith.constant 0 : index
      %16 = vector.load %arg5[%c0_14, %c0_15] : memref<1x16xf32, #tpu.memory_space<vmem>>, vector<1x16xf32>
      %17 = vector.broadcast %16 : vector<1x16xf32> to vector<32x16xf32>
      %18 = arith.addf %15, %17 : vector<32x16xf32>
      %cst_16 = arith.constant 0.000000e+00 : f32
      %19 = vector.broadcast %cst_16 : f32 to vector<32x16xf32>
      %20 = arith.maximumf %18, %19 : vector<32x16xf32>
      %21 = arith.truncf %20 : vector<32x16xf32> to vector<32x16xbf16>
      %c0_17 = arith.constant 0 : index
      %c0_18 = arith.constant 0 : index
      %22 = vector.load %arg6[%c0_17, %c0_18] : memref<32x16xbf16, #tpu.memory_space<vmem>>, vector<32x16xbf16>
      tpu.vector_store %arg6[%c0_17, %c0_18], %21 {strides = array<i32>} : memref<32x16xbf16, #tpu.memory_space<vmem>>, vector<32x16xbf16>,
    } else {
    }
    return
  }
  func.func @transform_0(%arg0: i32, %arg1: i32) -> (i32, i32) {
    %c0_i32 = arith.constant 0 : i32
    return %arg0, %arg1 : i32, i32
  }
  func.func @transform_1(%arg0: i32, %arg1: i32) -> (i32, i32) {
    %c0_i32 = arith.constant 0 : i32
    %c0_i32_0 = arith.constant 0 : i32
    return %arg1, %c0_i32 : i32, i32
  }
  func.func @transform_2(%arg0: i32, %arg1: i32) -> (i32, i32) {
    %c0_i32 = arith.constant 0 : i32
    %c0_i32_0 = arith.constant 0 : i32
    %c0_i32_1 = arith.constant 0 : i32
    return %c0_i32, %c0_i32_0 : i32, i32
  }
  func.func @transform_3(%arg0: i32, %arg1: i32) -> (i32, i32) {
    %c0_i32 = arith.constant 0 : i32
    %c0_i32_0 = arith.constant 0 : i32
    %c0_i32_1 = arith.constant 0 : i32
    return %c0_i32, %c0_i32_0 : i32, i32
  }
  func.func @transform_4(%arg0: i32, %arg1: i32) -> (i32, i32) {
    %c0_i32 = arith.constant 0 : i32
    %c0_i32_0 = arith.constant 0 : i32
    return %arg0, %c0_i32 : i32, i32
  }
}

module attributes {stable_mosaic.version = 11 : i64} {
  func.func @_fused_matmul_kernel(%arg0: i32, %arg1: i32, %arg2: memref<128x216xbf16, #tpu.memory_space<vmem>>, %arg3: memref<216x256xbf16, #tpu.memory_space<vmem>>, %arg4: memref<1x256xf32, #tpu.memory_space<vmem>>, %arg5: memref<1x256xf32, #tpu.memory_space<vmem>>, %arg6: memref<128x256xbf16, #tpu.memory_space<vmem>>, %arg7: memref<128x256xf32, #tpu.memory_space<vmem>>) attributes {dimension_semantics = [#tpu.dimension_semantics<parallel>, #tpu.dimension_semantics<arbitrary>], iteration_bounds = array<i64: 1, 1>, scalar_prefetch = 0 : i64, scratch_operands = 1 : i64, tpu.core_type = #tpu.core_type<tc>, window_params = [{transform_indices = @transform_0, window_bounds = array<i64: 128, 216>}, {transform_indices = @transform_1, window_bounds = array<i64: 216, 256>}, {pipeline_mode = #tpu.pipeline_mode<synchronous>, transform_indices = @transform_2, window_bounds = array<i64: 1, 256>}, {pipeline_mode = #tpu.pipeline_mode<synchronous>, transform_indices = @transform_3, window_bounds = array<i64: 1, 256>}, {transform_indices = @transform_4, window_bounds = array<i64: 128, 256>}]} {
    %c0_i32 = arith.constant 0 : i32
    %0 = arith.cmpi eq, %arg1, %c0_i32 : i32
    %1 = arith.extui %0 : i1 to i32
    %c0_i32_0 = arith.constant 0 : i32
    %2 = arith.cmpi ne, %1, %c0_i32_0 : i32
    scf.if %2 {
      %cst_10 = arith.constant 0.000000e+00 : f32
      %12 = vector.broadcast %cst_10 : f32 to vector<128x256xf32>
      %c0_11 = arith.constant 0 : index
      %c0_12 = arith.constant 0 : index
      %13 = vector.load %arg7[%c0_11, %c0_12] : memref<128x256xf32, #tpu.memory_space<vmem>>, vector<128x256xf32>
      tpu.vector_store %arg7[%c0_11, %c0_12], %12 {strides = array<i32>} : memref<128x256xf32, #tpu.memory_space<vmem>>, vector<128x256xf32>,
    } else {
    }
    %c0 = arith.constant 0 : index
    %c0_1 = arith.constant 0 : index
    %3 = vector.load %arg7[%c0, %c0_1] : memref<128x256xf32, #tpu.memory_space<vmem>>, vector<128x256xf32>
    %c0_2 = arith.constant 0 : index
    %c0_3 = arith.constant 0 : index
    %4 = vector.load %arg2[%c0_2, %c0_3] : memref<128x216xbf16, #tpu.memory_space<vmem>>, vector<128x216xbf16>
    %c0_4 = arith.constant 0 : index
    %c0_5 = arith.constant 0 : index
    %5 = vector.load %arg3[%c0_4, %c0_5] : memref<216x256xbf16, #tpu.memory_space<vmem>>, vector<216x256xbf16>
    %cst = arith.constant dense<0.000000e+00> : vector<128x256xf32>
    %6 = tpu.matmul %4, %5, %cst {dimension_numbers = #tpu.dot_dimension_numbers<[1], [0], [0], [1], [0, 0, 1, 1], [], []>} : vector<128x216xbf16>, vector<216x256xbf16>, vector<128x256xf32> -> vector<128x256xf32>
    %7 = arith.addf %3, %6 : vector<128x256xf32>
    %c0_6 = arith.constant 0 : index
    %c0_7 = arith.constant 0 : index
    %8 = vector.load %arg7[%c0_6, %c0_7] : memref<128x256xf32, #tpu.memory_space<vmem>>, vector<128x256xf32>
    tpu.vector_store %arg7[%c0_6, %c0_7], %7 {strides = array<i32>} : memref<128x256xf32, #tpu.memory_space<vmem>>, vector<128x256xf32>,
    %c0_i32_8 = arith.constant 0 : i32
    %9 = arith.cmpi eq, %arg1, %c0_i32_8 : i32
    %10 = arith.extui %9 : i1 to i32
    %c0_i32_9 = arith.constant 0 : i32
    %11 = arith.cmpi ne, %10, %c0_i32_9 : i32
    scf.if %11 {
      %c0_10 = arith.constant 0 : index
      %c0_11 = arith.constant 0 : index
      %12 = vector.load %arg7[%c0_10, %c0_11] : memref<128x256xf32, #tpu.memory_space<vmem>>, vector<128x256xf32>
      %c0_12 = arith.constant 0 : index
      %c0_13 = arith.constant 0 : index
      %13 = vector.load %arg4[%c0_12, %c0_13] : memref<1x256xf32, #tpu.memory_space<vmem>>, vector<1x256xf32>
      %14 = vector.broadcast %13 : vector<1x256xf32> to vector<128x256xf32>
      %15 = arith.mulf %12, %14 : vector<128x256xf32>
      %c0_14 = arith.constant 0 : index
      %c0_15 = arith.constant 0 : index
      %16 = vector.load %arg5[%c0_14, %c0_15] : memref<1x256xf32, #tpu.memory_space<vmem>>, vector<1x256xf32>
      %17 = vector.broadcast %16 : vector<1x256xf32> to vector<128x256xf32>
      %18 = arith.addf %15, %17 : vector<128x256xf32>
      %19 = arith.truncf %18 : vector<128x256xf32> to vector<128x256xbf16>
      %c0_16 = arith.constant 0 : index
      %c0_17 = arith.constant 0 : index
      %20 = vector.load %arg6[%c0_16, %c0_17] : memref<128x256xbf16, #tpu.memory_space<vmem>>, vector<128x256xbf16>
      tpu.vector_store %arg6[%c0_16, %c0_17], %19 {strides = array<i32>} : memref<128x256xbf16, #tpu.memory_space<vmem>>, vector<128x256xbf16>,
    } else {
    }
    return
  }
  func.func @transform_0(%arg0: i32, %arg1: i32) -> (i32, i32) {
    %c0_i32 = arith.constant 0 : i32
    return %arg0, %arg1 : i32, i32
  }
  func.func @transform_1(%arg0: i32, %arg1: i32) -> (i32, i32) {
    %c0_i32 = arith.constant 0 : i32
    %c0_i32_0 = arith.constant 0 : i32
    return %arg1, %c0_i32 : i32, i32
  }
  func.func @transform_2(%arg0: i32, %arg1: i32) -> (i32, i32) {
    %c0_i32 = arith.constant 0 : i32
    %c0_i32_0 = arith.constant 0 : i32
    %c0_i32_1 = arith.constant 0 : i32
    return %c0_i32, %c0_i32_0 : i32, i32
  }
  func.func @transform_3(%arg0: i32, %arg1: i32) -> (i32, i32) {
    %c0_i32 = arith.constant 0 : i32
    %c0_i32_0 = arith.constant 0 : i32
    %c0_i32_1 = arith.constant 0 : i32
    return %c0_i32, %c0_i32_0 : i32, i32
  }
  func.func @transform_4(%arg0: i32, %arg1: i32) -> (i32, i32) {
    %c0_i32 = arith.constant 0 : i32
    %c0_i32_0 = arith.constant 0 : i32
    return %arg0, %c0_i32 : i32, i32
  }
}

module attributes {stable_mosaic.version = 11 : i64} {
  func.func @_fused_matmul_kernel(%arg0: i32, %arg1: i32, %arg2: memref<128x768xbf16, #tpu.memory_space<vmem>>, %arg3: memref<768x3xbf16, #tpu.memory_space<vmem>>, %arg4: memref<1x3xf32, #tpu.memory_space<vmem>>, %arg5: memref<1x3xf32, #tpu.memory_space<vmem>>, %arg6: memref<128x3xf32, #tpu.memory_space<vmem>>, %arg7: memref<128x3xf32, #tpu.memory_space<vmem>>) attributes {dimension_semantics = [#tpu.dimension_semantics<parallel>, #tpu.dimension_semantics<arbitrary>], iteration_bounds = array<i64: 1, 3>, scalar_prefetch = 0 : i64, scratch_operands = 1 : i64, tpu.core_type = #tpu.core_type<tc>, window_params = [{transform_indices = @transform_0, window_bounds = array<i64: 128, 768>}, {transform_indices = @transform_1, window_bounds = array<i64: 768, 3>}, {pipeline_mode = #tpu.pipeline_mode<synchronous>, transform_indices = @transform_2, window_bounds = array<i64: 1, 3>}, {pipeline_mode = #tpu.pipeline_mode<synchronous>, transform_indices = @transform_3, window_bounds = array<i64: 1, 3>}, {transform_indices = @transform_4, window_bounds = array<i64: 128, 3>}]} {
    %c0_i32 = arith.constant 0 : i32
    %0 = arith.cmpi eq, %arg1, %c0_i32 : i32
    %1 = arith.extui %0 : i1 to i32
    %c0_i32_0 = arith.constant 0 : i32
    %2 = arith.cmpi ne, %1, %c0_i32_0 : i32
    scf.if %2 {
      %cst_9 = arith.constant 0.000000e+00 : f32
      %12 = vector.broadcast %cst_9 : f32 to vector<128x3xf32>
      %c0_10 = arith.constant 0 : index
      %c0_11 = arith.constant 0 : index
      %13 = vector.load %arg7[%c0_10, %c0_11] : memref<128x3xf32, #tpu.memory_space<vmem>>, vector<128x3xf32>
      tpu.vector_store %arg7[%c0_10, %c0_11], %12 {strides = array<i32>} : memref<128x3xf32, #tpu.memory_space<vmem>>, vector<128x3xf32>,
    } else {
    }
    %c0 = arith.constant 0 : index
    %c0_1 = arith.constant 0 : index
    %3 = vector.load %arg7[%c0, %c0_1] : memref<128x3xf32, #tpu.memory_space<vmem>>, vector<128x3xf32>
    %c0_2 = arith.constant 0 : index
    %c0_3 = arith.constant 0 : index
    %4 = vector.load %arg2[%c0_2, %c0_3] : memref<128x768xbf16, #tpu.memory_space<vmem>>, vector<128x768xbf16>
    %c0_4 = arith.constant 0 : index
    %c0_5 = arith.constant 0 : index
    %5 = vector.load %arg3[%c0_4, %c0_5] : memref<768x3xbf16, #tpu.memory_space<vmem>>, vector<768x3xbf16>
    %cst = arith.constant dense<0.000000e+00> : vector<128x3xf32>
    %6 = tpu.matmul %4, %5, %cst {dimension_numbers = #tpu.dot_dimension_numbers<[1], [0], [0], [1], [0, 0, 1, 1], [], []>} : vector<128x768xbf16>, vector<768x3xbf16>, vector<128x3xf32> -> vector<128x3xf32>
    %7 = arith.addf %3, %6 : vector<128x3xf32>
    %c0_6 = arith.constant 0 : index
    %c0_7 = arith.constant 0 : index
    %8 = vector.load %arg7[%c0_6, %c0_7] : memref<128x3xf32, #tpu.memory_space<vmem>>, vector<128x3xf32>
    tpu.vector_store %arg7[%c0_6, %c0_7], %7 {strides = array<i32>} : memref<128x3xf32, #tpu.memory_space<vmem>>, vector<128x3xf32>,
    %c2_i32 = arith.constant 2 : i32
    %9 = arith.cmpi eq, %arg1, %c2_i32 : i32
    %10 = arith.extui %9 : i1 to i32
    %c0_i32_8 = arith.constant 0 : i32
    %11 = arith.cmpi ne, %10, %c0_i32_8 : i32
    scf.if %11 {
      %c0_9 = arith.constant 0 : index
      %c0_10 = arith.constant 0 : index
      %12 = vector.load %arg7[%c0_9, %c0_10] : memref<128x3xf32, #tpu.memory_space<vmem>>, vector<128x3xf32>
      %c0_11 = arith.constant 0 : index
      %c0_12 = arith.constant 0 : index
      %13 = vector.load %arg4[%c0_11, %c0_12] : memref<1x3xf32, #tpu.memory_space<vmem>>, vector<1x3xf32>
      %14 = vector.broadcast %13 : vector<1x3xf32> to vector<128x3xf32>
      %15 = arith.mulf %12, %14 : vector<128x3xf32>
      %c0_13 = arith.constant 0 : index
      %c0_14 = arith.constant 0 : index
      %16 = vector.load %arg5[%c0_13, %c0_14] : memref<1x3xf32, #tpu.memory_space<vmem>>, vector<1x3xf32>
      %17 = vector.broadcast %16 : vector<1x3xf32> to vector<128x3xf32>
      %18 = arith.addf %15, %17 : vector<128x3xf32>
      %c0_15 = arith.constant 0 : index
      %c0_16 = arith.constant 0 : index
      %19 = vector.load %arg6[%c0_15, %c0_16] : memref<128x3xf32, #tpu.memory_space<vmem>>, vector<128x3xf32>
      tpu.vector_store %arg6[%c0_15, %c0_16], %18 {strides = array<i32>} : memref<128x3xf32, #tpu.memory_space<vmem>>, vector<128x3xf32>,
    } else {
    }
    return
  }
  func.func @transform_0(%arg0: i32, %arg1: i32) -> (i32, i32) {
    %c0_i32 = arith.constant 0 : i32
    return %arg0, %arg1 : i32, i32
  }
  func.func @transform_1(%arg0: i32, %arg1: i32) -> (i32, i32) {
    %c0_i32 = arith.constant 0 : i32
    %c0_i32_0 = arith.constant 0 : i32
    return %arg1, %c0_i32 : i32, i32
  }
  func.func @transform_2(%arg0: i32, %arg1: i32) -> (i32, i32) {
    %c0_i32 = arith.constant 0 : i32
    %c0_i32_0 = arith.constant 0 : i32
    %c0_i32_1 = arith.constant 0 : i32
    return %c0_i32, %c0_i32_0 : i32, i32
  }
  func.func @transform_3(%arg0: i32, %arg1: i32) -> (i32, i32) {
    %c0_i32 = arith.constant 0 : i32
    %c0_i32_0 = arith.constant 0 : i32
    %c0_i32_1 = arith.constant 0 : i32
    return %c0_i32, %c0_i32_0 : i32, i32
  }
  func.func @transform_4(%arg0: i32, %arg1: i32) -> (i32, i32) {
    %c0_i32 = arith.constant 0 : i32
    %c0_i32_0 = arith.constant 0 : i32
    return %arg0, %c0_i32 : i32, i32
  }
}

</mosaic_0001>

<llo_original>
// kernel: forward.10
$region0: #{forward.10}
  #allocation0 [shape = 'u32[]', space=smem, size = 0x4, offset = 0x4, fixed_abs, tag = 'smem constant byte address 0x4 - core index']
  #allocation1 [shape = 'u32[144,128]{1,0:T(1,128)}', space=vmem, size = 0x12000, scoped, tag = 'internal scratch']
  #allocation2 [shape = 'f32[256,4]{1,0:T(8,128)}', space=vmem, size = 0x20000, scoped, tag = 'scratch operand']
  %s0 = inlined_call_operand.vmem [shape: bf16[512,36], index: 0, kind: input, shape index: {}]
  %s1 = inlined_call_operand.vmem [shape: bf16[36,4], index: 1, kind: input, shape index: {}]
  %s2 = inlined_call_operand.vmem [shape: f32[1,4], index: 2, kind: input, shape index: {}]
  %s3 = inlined_call_operand.vmem [shape: f32[1,4], index: 3, kind: input, shape index: {}]
  %s4 = inlined_call_operand.vmem [shape: bf16[512,4], index: 4, kind: output, shape index: {}]
  %s5 = sld [smem:[#allocation0]]
  $region57: #{forward.10} parent=0
    _
  %s7 = ssub.s32 1, %s5
  %s8 = scalar_select 0, %s7, %s5
  loop: start=0, step=1, limit=4
  $region2: #{forward.10} parent=0 // loop_pre_header
    _
  $region3: #{forward.10} parent=0 // loop_header
    %s10 = sphi 0, %s14
    %p11 = scmp.ge.s32.totalorder %s10, 4
    %s17 = sphi 0, %s29
    %s18 = sphi 0, %s25
    %s19 = sphi 0, %s17
    %s20 = sphi 0, %s18
    %s21 = sphi 0, %s19
    %s22 = sphi 0, %s20
    %s34 = sphi 0, %s36
    %s37 = sphi 0, %s34
    %s38 = sphi 0, %s37
    %s54 = sphi 0, %s38
    %s60 = sphi 0, %s62
    %s63 = sphi 0, %s60
    %s64 = sphi 0, %s63
    %s80 = sphi 0, %s64
    %s84 = sphi 0, %s84
    %s86 = sphi 0, %s84
    %s87 = sphi 0, %s86
    %s101 = sphi 0, %s87
    %s105 = sphi 0, %s105
    %s107 = sphi 0, %s105
    %s108 = sphi 0, %s107
    %s122 = sphi 0, %s108
    %s128 = sphi 0, %s130
    %s131 = sphi 0, %s128
    %s132 = sphi 0, %s131
    %s148 = sphi 0, %s132
  $region4: #{forward.10} parent=0 // loop_header_branch
    %13 = sbr.rel (%p11) target = $region8
  $region5: #{forward.10} parent=0 // loop_body
    %s15 = ssub.s32 %s10, 1
    %s16 = ssub.s32 %s10, 2
    %s23 = sadd.s32 1, %s18
    %p24 = scmp.ge.s32.totalorder %s23, 1
    %s25 = scalar_select %p24, 0, %s23
    %s26 = sadd.s32 1, %s17
    %s27 = scalar_select %p24, %s26, %s17
    %p28 = scmp.ge.s32.totalorder %s27, 2
    %s29 = scalar_select %p28, 0, %s27
    %s30 = ssub.s32 %s17, %s29
    %s31 = ssub.s32 %s18, %s25
    %s32 = sor.u32 %s30, %s31
    %p33 = scmp.eq.s32.totalorder %s32, 0
    %s35 = sadd.s32 %s34, 1
    %s36 = scalar_select %p33, %s34, %s35
    %p39 = pneg %p33
    %p40 = scmp.eq.s32.totalorder %s10, 1
    %p41 = por %p39, %p40
    %p42 = scmp.ne.s32.totalorder %s34, %s37
    %p43 = scmp.eq.s32.totalorder %s10, 0
    %p44 = por %p42, %p43
    %p45 = scmp.ne.s32.totalorder %s34, %s37
    %p46 = scmp.eq.s32.totalorder %s15, 1
    %p47 = por %p45, %p46
    %p48 = scmp.ne.s32.totalorder %s37, %s38
    %p49 = scmp.eq.s32.totalorder %s15, 0
    %p50 = por %p48, %p49
    %p51 = scmp.ne.s32.totalorder %s37, %s38
    %p52 = scmp.eq.s32.totalorder %s16, 1
    %p53 = por %p51, %p52
    %p55 = scmp.ne.s32.totalorder %s38, %s54
    %p56 = scmp.eq.s32.totalorder %s16, 0
    %p57 = por %p55, %p56
    %s58 = ssub.s32 %s18, %s25
    %p59 = scmp.eq.s32.totalorder %s58, 0
    %s61 = sadd.s32 %s60, 1
    %s62 = scalar_select %p59, %s60, %s61
    %p65 = pneg %p59
    %p66 = scmp.eq.s32.totalorder %s10, 1
    %p67 = por %p65, %p66
    %p68 = scmp.ne.s32.totalorder %s60, %s63
    %p69 = scmp.eq.s32.totalorder %s10, 0
    %p70 = por %p68, %p69
    %p71 = scmp.ne.s32.totalorder %s60, %s63
    %p72 = scmp.eq.s32.totalorder %s15, 1
    %p73 = por %p71, %p72
    %p74 = scmp.ne.s32.totalorder %s63, %s64
    %p75 = scmp.eq.s32.totalorder %s15, 0
    %p76 = por %p74, %p75
    %p77 = scmp.ne.s32.totalorder %s63, %s64
    %p78 = scmp.eq.s32.totalorder %s16, 1
    %p79 = por %p77, %p78
    %p81 = scmp.ne.s32.totalorder %s64, %s80
    %p82 = scmp.eq.s32.totalorder %s16, 0
    %p83 = por %p81, %p82
    %s85 = sadd.s32 %s84, 1
    %p88 = scmp.eq.s32.totalorder %s10, 1
    %p89 = scmp.ne.s32.totalorder %s84, %s86
    %p90 = scmp.eq.s32.totalorder %s10, 0
    %p91 = por %p89, %p90
    %p92 = scmp.ne.s32.totalorder %s84, %s86
    %p93 = scmp.eq.s32.totalorder %s15, 1
    %p94 = por %p92, %p93
    %p95 = scmp.ne.s32.totalorder %s86, %s87
    %p96 = scmp.eq.s32.totalorder %s15, 0
    %p97 = por %p95, %p96
    %p98 = scmp.ne.s32.totalorder %s86, %s87
    %p99 = scmp.eq.s32.totalorder %s16, 1
    %p100 = por %p98, %p99
    %p102 = scmp.ne.s32.totalorder %s87, %s101
    %p103 = scmp.eq.s32.totalorder %s16, 0
    %p104 = por %p102, %p103
    %s106 = sadd.s32 %s105, 1
    %p109 = scmp.eq.s32.totalorder %s10, 1
    %p110 = scmp.ne.s32.totalorder %s105, %s107
    %p111 = scmp.eq.s32.totalorder %s10, 0
    %p112 = por %p110, %p111
    %p113 = scmp.ne.s32.totalorder %s105, %s107
    %p114 = scmp.eq.s32.totalorder %s15, 1
    %p115 = por %p113, %p114
    %p116 = scmp.ne.s32.totalorder %s107, %s108
    %p117 = scmp.eq.s32.totalorder %s15, 0
    %p118 = por %p116, %p117
    %p119 = scmp.ne.s32.totalorder %s107, %s108
    %p120 = scmp.eq.s32.totalorder %s16, 1
    %p121 = por %p119, %p120
    %p123 = scmp.ne.s32.totalorder %s108, %s122
    %p124 = scmp.eq.s32.totalorder %s16, 0
    %p125 = por %p123, %p124
    %s126 = ssub.s32 %s17, %s29
    %p127 = scmp.eq.s32.totalorder %s126, 0
    %s129 = sadd.s32 %s128, 1
    %s130 = scalar_select %p127, %s128, %s129
    %p133 = pneg %p127
    %p134 = scmp.eq.s32.totalorder %s10, 1
    %p135 = por %p133, %p134
    %p136 = scmp.ne.s32.totalorder %s128, %s131
    %p137 = scmp.eq.s32.totalorder %s10, 0
    %p138 = por %p136, %p137
    %p139 = scmp.ne.s32.totalorder %s128, %s131
    %p140 = scmp.eq.s32.totalorder %s15, 1
    %p141 = por %p139, %p140
    %p142 = scmp.ne.s32.totalorder %s131, %s132
    %p143 = scmp.eq.s32.totalorder %s15, 0
    %p144 = por %p142, %p143
    %p145 = scmp.ne.s32.totalorder %s131, %s132
    %p146 = scmp.eq.s32.totalorder %s16, 1
    %p147 = por %p145, %p146
    %p149 = scmp.ne.s32.totalorder %s132, %s148
    %p150 = scmp.eq.s32.totalorder %s16, 0
    %p151 = por %p149, %p150
    %p152 = scmp.le.s32.totalorder 1, %s10
    %p153 = scmp.lt.s32.totalorder %s10, 3
    %p154 = pnand %p152, %p153
    %p155 = pneg %p154
    // Predicated region
    $region9: #{forward.10} parent=5 // pred_check
      _
    $region10: #{forward.10} parent=5 // pred_check_branch
      %157 = sbr.rel (%p154) target = $region12
    $region11: #{forward.10} parent=5 // pred_region
      %s158 = ssub.s32 %s10, 1
      // Predicated region
      $region13: #{forward.10} parent=11 // pred_check
        %p159 = pneg %p76
      $region14: #{forward.10} parent=11 // pred_check_branch
        %161 = sbr.rel (%p159) target = $region16
      $region15: #{forward.10} parent=11 // pred_region
        %s162 = smul.u32 5, %s20
        %p163 = scmp.lt.s32.totalorder %s162, 4
        %s164 = scalar_select %p163, %s162, 4
        %s165 = smul.addr %s164, 4
        %s166 = scalar_lea.vmem %s1, %s165
        %s167 = smul.u32 5, %s20
      $region16: #{forward.10} parent=11 // pred_fallthru
        _
      // Predicated region
      $region17: #{forward.10} parent=11 // pred_check
        %p168 = pneg %p97
      $region18: #{forward.10} parent=11 // pred_check_branch
        %170 = sbr.rel (%p168) target = $region20
      $region19: #{forward.10} parent=11 // pred_region
        _
      $region20: #{forward.10} parent=11 // pred_fallthru
        _
      // Predicated region
      $region21: #{forward.10} parent=11 // pred_check
        %p171 = pneg %p118
      $region22: #{forward.10} parent=11 // pred_check_branch
        %173 = sbr.rel (%p171) target = $region24
      $region23: #{forward.10} parent=11 // pred_region
        _
      $region24: #{forward.10} parent=11 // pred_fallthru
        _
    $region12: #{forward.10} parent=5 // pred_fallthru
      _
    %p174 = scmp.lt.s32.totalorder %s10, 2
    // Predicated region
    $region25: #{forward.10} parent=5 // pred_check
      %p175 = pneg %p174
    $region26: #{forward.10} parent=5 // pred_check_branch
      %177 = sbr.rel (%p175) target = $region28
    $region27: #{forward.10} parent=5 // pred_region
      // Predicated region
      $region29: #{forward.10} parent=27 // pred_check
        %p178 = pneg %p44
      $region30: #{forward.10} parent=27 // pred_check_branch
        %180 = sbr.rel (%p178) target = $region32
      $region31: #{forward.10} parent=27 // pred_region
        %s181 = smul.u32 32, %s17
        %p182 = scmp.lt.s32.totalorder %s181, 63
        %s183 = scalar_select %p182, %s181, 63
        %p184 = scmp.lt.s32.totalorder %s18, 0
        %s185 = scalar_select %p184, %s18, 0
        %s186 = sadd.s32 %s185, %s183
        %s187 = smul.addr %s186, 4
        %s188 = scalar_lea.vmem %s0, %s187
        %s189 = smul.u32 32, %s17
      $region32: #{forward.10} parent=27 // pred_fallthru
        _
    $region28: #{forward.10} parent=5 // pred_fallthru
      _
    %p190 = scmp.le.s32.totalorder 1, %s10
    %p191 = scmp.lt.s32.totalorder %s10, 3
    %p192 = pnand %p190, %p191
    %p193 = pneg %p192
    // Predicated region
    $region33: #{forward.10} parent=5 // pred_check
      _
    $region34: #{forward.10} parent=5 // pred_check_branch
      %195 = sbr.rel (%p192) target = $region36
    $region35: #{forward.10} parent=5 // pred_region
      %s196 = ssub.s32 %s10, 1
      %s197 = smul.u32 32, %s19
      %p198 = scmp.lt.s32.totalorder %s197, 63
      %s199 = scalar_select %p198, %s197, 63
      %p200 = scmp.lt.s32.totalorder %s20, 0
      %s201 = scalar_select %p200, %s20, 0
      %s202 = sadd.s32 %s201, %s199
      %s203 = smul.addr %s202, 4
      %s204 = scalar_lea.vmem %s0, %s203
      %p205 = pneg %p50
      %p206 = pneg %p47
      %s207 = smul.u32 5, %s20
      %p208 = scmp.lt.s32.totalorder %s207, 4
      %s209 = scalar_select %p208, %s207, 4
      %s210 = smul.addr %s209, 4
      %s211 = scalar_lea.vmem %s1, %s210
      %p212 = pneg %p76
      %p213 = pneg %p73
      %p214 = pneg %p97
      %p215 = pneg %p94
      %p216 = pneg %p118
      %p217 = pneg %p115
      %p218 = pneg %p144
      %p219 = pneg %p141
      %s220 = smul.u32 32, %s19
      %p221 = scmp.lt.s32.totalorder %s220, 63
      %s222 = scalar_select %p221, %s220, 63
      %s223 = smul.addr %s222, 4
      %s224 = scalar_lea.vmem %s4, %s223
      %s225 = smul.u32 32, %s19
      %p226 = scmp.lt.s32.totalorder %s225, 63
      %s227 = scalar_select %p226, %s225, 63
      %p228 = scmp.lt.s32.totalorder %s20, 0
      %s229 = scalar_select %p228, %s20, 0
      %s230 = sadd.s32 %s229, %s227
      %s231 = smul.addr %s230, 4
      %s232 = scalar_lea.vmem %s0, %s231
      %s233 = smul.u32 32, %s19
      %s234 = smul.u32 5, %s20
      %p235 = scmp.lt.s32.totalorder %s234, 4
      %s236 = scalar_select %p235, %s234, 4
      %s237 = smul.addr %s236, 4
      %s238 = scalar_lea.vmem %s1, %s237
      %s239 = smul.u32 5, %s20
      %s240 = smul.u32 32, %s19
      %p241 = scmp.lt.s32.totalorder %s240, 63
      %s242 = scalar_select %p241, %s240, 63
      %s243 = smul.addr %s242, 4
      %s244 = scalar_lea.vmem %s4, %s243
      %s245 = smul.u32 32, %s19
      %p247 = scmp.eq.s32.totalorder %s20, 0
      // Predicated region
      $region37: #{forward.10} parent=35 // pred_check
        %p248 = pneg %p247
      $region38: #{forward.10} parent=35 // pred_check_branch
        %250 = sbr.rel (%p248) target = $region40
      $region39: #{forward.10} parent=35 // pred_region
        %vm251 = vcmask 31744
        %252 = vst.msk [vmem:[#allocation2] sm:$0xff] %vm251, 0.0
        %253 = vst.msk [vmem:[#allocation2 + $0x8] sm:$0xff] %vm251, 0.0
        %254 = vst.msk [vmem:[#allocation2 + $0x10] sm:$0xff] %vm251, 0.0
        %255 = vst.msk [vmem:[#allocation2 + $0x18] sm:$0xff] %vm251, 0.0
        %256 = vst.msk [vmem:[#allocation2 + $0x20] sm:$0xff] %vm251, 0.0
        %257 = vst.msk [vmem:[#allocation2 + $0x28] sm:$0xff] %vm251, 0.0
        %258 = vst.msk [vmem:[#allocation2 + $0x30] sm:$0xff] %vm251, 0.0
        %259 = vst.msk [vmem:[#allocation2 + $0x38] sm:$0xff] %vm251, 0.0
        %260 = vst.msk [vmem:[#allocation2 + $0x40] sm:$0xff] %vm251, 0.0
        %261 = vst.msk [vmem:[#allocation2 + $0x48] sm:$0xff] %vm251, 0.0
        %262 = vst.msk [vmem:[#allocation2 + $0x50] sm:$0xff] %vm251, 0.0
        %263 = vst.msk [vmem:[#allocation2 + $0x58] sm:$0xff] %vm251, 0.0
        %264 = vst.msk [vmem:[#allocation2 + $0x60] sm:$0xff] %vm251, 0.0
        %265 = vst.msk [vmem:[#allocation2 + $0x68] sm:$0xff] %vm251, 0.0
        %266 = vst.msk [vmem:[#allocation2 + $0x70] sm:$0xff] %vm251, 0.0
        %267 = vst.msk [vmem:[#allocation2 + $0x78] sm:$0xff] %vm251, 0.0
        %268 = vst.msk [vmem:[#allocation2 + $0x80] sm:$0xff] %vm251, 0.0
        %269 = vst.msk [vmem:[#allocation2 + $0x88] sm:$0xff] %vm251, 0.0
        %270 = vst.msk [vmem:[#allocation2 + $0x90] sm:$0xff] %vm251, 0.0
        %271 = vst.msk [vmem:[#allocation2 + $0x98] sm:$0xff] %vm251, 0.0
        %272 = vst.msk [vmem:[#allocation2 + $0xa0] sm:$0xff] %vm251, 0.0
        %273 = vst.msk [vmem:[#allocation2 + $0xa8] sm:$0xff] %vm251, 0.0
        %274 = vst.msk [vmem:[#allocation2 + $0xb0] sm:$0xff] %vm251, 0.0
        %275 = vst.msk [vmem:[#allocation2 + $0xb8] sm:$0xff] %vm251, 0.0
        %276 = vst.msk [vmem:[#allocation2 + $0xc0] sm:$0xff] %vm251, 0.0
        %277 = vst.msk [vmem:[#allocation2 + $0xc8] sm:$0xff] %vm251, 0.0
        %278 = vst.msk [vmem:[#allocation2 + $0xd0] sm:$0xff] %vm251, 0.0
        %279 = vst.msk [vmem:[#allocation2 + $0xd8] sm:$0xff] %vm251, 0.0
        %280 = vst.msk [vmem:[#allocation2 + $0xe0] sm:$0xff] %vm251, 0.0
        %281 = vst.msk [vmem:[#allocation2 + $0xe8] sm:$0xff] %vm251, 0.0
        %282 = vst.msk [vmem:[#allocation2 + $0xf0] sm:$0xff] %vm251, 0.0
        %283 = vst.msk [vmem:[#allocation2 + $0xf8] sm:$0xff] %vm251, 0.0
      $region40: #{forward.10} parent=35 // pred_fallthru
        _
      %v284 = vld [vmem:[#allocation2] sm:$0xff]
      %v285 = vld [vmem:[#allocation2 + $0x8] sm:$0xff]
      %v286 = vld [vmem:[#allocation2 + $0x10] sm:$0xff]
      %v287 = vld [vmem:[#allocation2 + $0x18] sm:$0xff]
      %v288 = vld [vmem:[#allocation2 + $0x20] sm:$0xff]
      %v289 = vld [vmem:[#allocation2 + $0x28] sm:$0xff]
      %v290 = vld [vmem:[#allocation2 + $0x30] sm:$0xff]
      %v291 = vld [vmem:[#allocation2 + $0x38] sm:$0xff]
      %v292 = vld [vmem:[#allocation2 + $0x40] sm:$0xff]
      %v293 = vld [vmem:[#allocation2 + $0x48] sm:$0xff]
      %v294 = vld [vmem:[#allocation2 + $0x50] sm:$0xff]
      %v295 = vld [vmem:[#allocation2 + $0x58] sm:$0xff]
      %v296 = vld [vmem:[#allocation2 + $0x60] sm:$0xff]
      %v297 = vld [vmem:[#allocation2 + $0x68] sm:$0xff]
      %v298 = vld [vmem:[#allocation2 + $0x70] sm:$0xff]
      %v299 = vld [vmem:[#allocation2 + $0x78] sm:$0xff]
      %v300 = vld [vmem:[#allocation2 + $0x80] sm:$0xff]
      %v301 = vld [vmem:[#allocation2 + $0x88] sm:$0xff]
      %v302 = vld [vmem:[#allocation2 + $0x90] sm:$0xff]
      %v303 = vld [vmem:[#allocation2 + $0x98] sm:$0xff]
      %v304 = vld [vmem:[#allocation2 + $0xa0] sm:$0xff]
      %v305 = vld [vmem:[#allocation2 + $0xa8] sm:$0xff]
      %v306 = vld [vmem:[#allocation2 + $0xb0] sm:$0xff]
      %v307 = vld [vmem:[#allocation2 + $0xb8] sm:$0xff]
      %v308 = vld [vmem:[#allocation2 + $0xc0] sm:$0xff]
      %v309 = vld [vmem:[#allocation2 + $0xc8] sm:$0xff]
      %v310 = vld [vmem:[#allocation2 + $0xd0] sm:$0xff]
      %v311 = vld [vmem:[#allocation2 + $0xd8] sm:$0xff]
      %v312 = vld [vmem:[#allocation2 + $0xe0] sm:$0xff]
      %v313 = vld [vmem:[#allocation2 + $0xe8] sm:$0xff]
      %v314 = vld [vmem:[#allocation2 + $0xf0] sm:$0xff]
      %v315 = vld [vmem:[#allocation2 + $0xf8] sm:$0xff]
      %v316 = vld [vmem:[%s232] sm:$0xf]
      %v317 = vld [vmem:[%s232 + $0x4] sm:$0xf]
      %v318 = vld [vmem:[%s232 + $0x8] sm:$0xf]
      %v319 = vld [vmem:[%s232 + $0xc] sm:$0xf]
      %v320 = vld [vmem:[%s232 + $0x10] sm:$0xf]
      %v321 = vld [vmem:[%s232 + $0x14] sm:$0xf]
      %v322 = vld [vmem:[%s232 + $0x18] sm:$0xf]
      %v323 = vld [vmem:[%s232 + $0x1c] sm:$0xf]
      %v324 = vld [vmem:[%s232 + $0x20] sm:$0xf]
      %v325 = vld [vmem:[%s232 + $0x24] sm:$0xf]
      %v326 = vld [vmem:[%s232 + $0x28] sm:$0xf]
      %v327 = vld [vmem:[%s232 + $0x2c] sm:$0xf]
      %v328 = vld [vmem:[%s232 + $0x30] sm:$0xf]
      %v329 = vld [vmem:[%s232 + $0x34] sm:$0xf]
      %v330 = vld [vmem:[%s232 + $0x38] sm:$0xf]
      %v331 = vld [vmem:[%s232 + $0x3c] sm:$0xf]
      %v332 = vld [vmem:[%s232 + $0x40] sm:$0xf]
      %v333 = vld [vmem:[%s232 + $0x44] sm:$0xf]
      %v334 = vld [vmem:[%s232 + $0x48] sm:$0xf]
      %v335 = vld [vmem:[%s232 + $0x4c] sm:$0xf]
      %v336 = vld [vmem:[%s232 + $0x50] sm:$0xf]
      %v337 = vld [vmem:[%s232 + $0x54] sm:$0xf]
      %v338 = vld [vmem:[%s232 + $0x58] sm:$0xf]
      %v339 = vld [vmem:[%s232 + $0x5c] sm:$0xf]
      %v340 = vld [vmem:[%s232 + $0x60] sm:$0xf]
      %v341 = vld [vmem:[%s232 + $0x64] sm:$0xf]
      %v342 = vld [vmem:[%s232 + $0x68] sm:$0xf]
      %v343 = vld [vmem:[%s232 + $0x6c] sm:$0xf]
      %v344 = vld [vmem:[%s232 + $0x70] sm:$0xf]
      %v345 = vld [vmem:[%s232 + $0x74] sm:$0xf]
      %v346 = vld [vmem:[%s232 + $0x78] sm:$0xf]
      %v347 = vld [vmem:[%s232 + $0x7c] sm:$0xf]
      %v348 = vld [vmem:[%s238] sm:$0xf]
      %v349 = vld [vmem:[%s238 + $0x4] sm:$0xf]
      %v350 = vld [vmem:[%s238 + $0x8] sm:$0xf]
      %v351 = vld [vmem:[%s238 + $0xc] sm:$0xf]
      %v352 = vld [vmem:[%s238 + $0x10] sm:$0x3]
      %v385 = vunpack.c.l.b16 %v316
      %v386 = vunpack.c.l.b16 %v317
      %v387 = vunpack.c.l.b16 %v318
      %v388 = vunpack.c.l.b16 %v319
      %v389 = vunpack.c.l.b16 %v320
      %v390 = vunpack.c.l.b16 %v321
      %v391 = vunpack.c.l.b16 %v322
      %v392 = vunpack.c.l.b16 %v323
      %v393 = vunpack.c.l.b16 %v324
      %v394 = vunpack.c.l.b16 %v325
      %v395 = vunpack.c.l.b16 %v326
      %v396 = vunpack.c.l.b16 %v327
      %v397 = vunpack.c.l.b16 %v328
      %v398 = vunpack.c.l.b16 %v329
      %v399 = vunpack.c.l.b16 %v330
      %v400 = vunpack.c.l.b16 %v331
      %v401 = vunpack.c.l.b16 %v332
      %v402 = vunpack.c.l.b16 %v333
      %v403 = vunpack.c.l.b16 %v334
      %v404 = vunpack.c.l.b16 %v335
      %v405 = vunpack.c.l.b16 %v336
      %v406 = vunpack.c.l.b16 %v337
      %v407 = vunpack.c.l.b16 %v338
      %v408 = vunpack.c.l.b16 %v339
      %v409 = vunpack.c.l.b16 %v340
      %v410 = vunpack.c.l.b16 %v341
      %v411 = vunpack.c.l.b16 %v342
      %v412 = vunpack.c.l.b16 %v343
      %v413 = vunpack.c.l.b16 %v344
      %v414 = vunpack.c.l.b16 %v345
      %v415 = vunpack.c.l.b16 %v346
      %v416 = vunpack.c.l.b16 %v347
      %v417 = vpack.c.b16 %v386, %v385
      %v418 = vpack.c.b16 %v388, %v387
      %v419 = vpack.c.b16 %v390, %v389
      %v420 = vpack.c.b16 %v392, %v391
      %v421 = vpack.c.b16 %v394, %v393
      %v422 = vpack.c.b16 %v396, %v395
      %v423 = vpack.c.b16 %v398, %v397
      %v424 = vpack.c.b16 %v400, %v399
      %v425 = vpack.c.b16 %v402, %v401
      %v426 = vpack.c.b16 %v404, %v403
      %v427 = vpack.c.b16 %v406, %v405
      %v428 = vpack.c.b16 %v408, %v407
      %v429 = vpack.c.b16 %v410, %v409
      %v430 = vpack.c.b16 %v412, %v411
      %v431 = vpack.c.b16 %v414, %v413
      %v432 = vpack.c.b16 %v416, %v415
      %v438 = vunpack.c.l.b16 %v348
      %v439 = vunpack.c.l.b16 %v349
      %v440 = vunpack.c.l.b16 %v350
      %v441 = vunpack.c.l.b16 %v351
      %v442 = vunpack.c.l.b16 %v352
      %v443 = vpack.c.b16 %v439, %v438
      %v444 = vpack.c.b16 %v441, %v440
      %v445 = vpack.c.b16 %v442, %v442
      %vm448 = vcmask 293888
      %v450 = vsel %vm448, %v417, 0
      %v453 = vsel %vm448, %v418, 0
      %v456 = vsel %vm448, %v419, 0
      %v459 = vsel %vm448, %v420, 0
      %v462 = vsel %vm448, %v421, 0
      %v465 = vsel %vm448, %v422, 0
      %v468 = vsel %vm448, %v423, 0
      %v471 = vsel %vm448, %v424, 0
      %v474 = vsel %vm448, %v425, 0
      %v477 = vsel %vm448, %v426, 0
      %v480 = vsel %vm448, %v427, 0
      %v483 = vsel %vm448, %v428, 0
      %v486 = vsel %vm448, %v429, 0
      %v489 = vsel %vm448, %v430, 0
      %v492 = vsel %vm448, %v431, 0
      %v495 = vsel %vm448, %v432, 0
      %vm497 = vcmask 1041408
      %v499 = vsel %vm497, %v445, 0
      %501 = vmatprep.subr.bf16.mxu0 0
      %502 = vmatpush1.bf16.msra.mxu0 %v443
      %503 = vmatprep.subr.bf16.mxu0 0
      %504 = vmatpush1.bf16.msra.mxu0 %v444
      %505 = vmatprep.subr.bf16.mxu0 0
      %506 = vmatpush1.bf16.msra.mxu0 %v499
      %507 = vmatprep.subr.bf16.mxu0 0
      %508 = vmatpush1.bf16.msra.mxu0 0
      %509 = vmatprep.subr.bf16.mxu0 0
      %510 = vmatpush1.bf16.msra.mxu0 0
      %511 = vmatprep.subr.bf16.mxu0 0
      %512 = vmatpush1.bf16.msra.mxu0 0
      %513 = vmatprep.subr.bf16.mxu0 0
      %514 = vmatpush1.bf16.msra.mxu0 0
      %515 = vmatprep.subr.bf16.mxu0 0
      %516 = vmatpush1.bf16.msra.mxu0 0
      %517 = vmatprep.subr.bf16.mxu0 0
      %518 = vmatpush1.bf16.msra.mxu0 0
      %519 = vmatprep.subr.bf16.mxu0 0
      %520 = vmatpush1.bf16.msra.mxu0 0
      %521 = vmatprep.subr.bf16.mxu0 0
      %522 = vmatpush1.bf16.msra.mxu0 0
      %523 = vmatprep.subr.bf16.mxu0 0
      %524 = vmatpush1.bf16.msra.mxu0 0
      %525 = vmatprep.subr.bf16.mxu0 0
      %526 = vmatpush1.bf16.msra.mxu0 0
      %527 = vmatprep.subr.bf16.mxu0 0
      %528 = vmatpush1.bf16.msra.mxu0 0
      %529 = vmatprep.subr.bf16.mxu0 0
      %530 = vmatpush1.bf16.msra.mxu0 0
      %531 = vmatprep.subr.bf16.mxu0 0
      %532 = vmatpush1.bf16.msra.mxu0 0
      %533 = vmatprep.mubr.bf16.mxu0 0
      %534 = vmatmul.mubr.bf16.gmra.mrb[0].mxu0 %v450
      %v535 = vpop.f32.mrb[0].mxu0
      %v536 = vadd.f32 0.0, %v535
      %v537 = vpop.f32.mrb[0].mxu0
      %v538 = vpop.f32.mrb[0].mxu0
      %v539 = vadd.f32 0.0, %v538
      %v540 = vpop.f32.mrb[0].mxu0
      %541 = vmatprep.mubr.bf16.mxu0 0
      %542 = vmatmul.mubr.bf16.gmra.mrb[0].mxu0 %v453
      %v543 = vpop.f32.mrb[0].mxu0
      %v544 = vadd.f32 0.0, %v543
      %v545 = vpop.f32.mrb[0].mxu0
      %v546 = vpop.f32.mrb[0].mxu0
      %v547 = vadd.f32 0.0, %v546
      %v548 = vpop.f32.mrb[0].mxu0
      %549 = vmatprep.mubr.bf16.mxu0 0
      %550 = vmatmul.mubr.bf16.gmra.mrb[0].mxu0 %v456
      %v551 = vpop.f32.mrb[0].mxu0
      %v552 = vadd.f32 0.0, %v551
      %v553 = vpop.f32.mrb[0].mxu0
      %v554 = vpop.f32.mrb[0].mxu0
      %v555 = vadd.f32 0.0, %v554
      %v556 = vpop.f32.mrb[0].mxu0
      %557 = vmatprep.mubr.bf16.mxu0 0
      %558 = vmatmul.mubr.bf16.gmra.mrb[0].mxu0 %v459
      %v559 = vpop.f32.mrb[0].mxu0
      %v560 = vadd.f32 0.0, %v559
      %v561 = vpop.f32.mrb[0].mxu0
      %v562 = vpop.f32.mrb[0].mxu0
      %v563 = vadd.f32 0.0, %v562
      %v564 = vpop.f32.mrb[0].mxu0
      %565 = vmatprep.mubr.bf16.mxu0 0
      %566 = vmatmul.mubr.bf16.gmra.mrb[0].mxu0 %v462
      %v567 = vpop.f32.mrb[0].mxu0
      %v568 = vadd.f32 0.0, %v567
      %v569 = vpop.f32.mrb[0].mxu0
      %v570 = vpop.f32.mrb[0].mxu0
      %v571 = vadd.f32 0.0, %v570
      %v572 = vpop.f32.mrb[0].mxu0
      %573 = vmatprep.mubr.bf16.mxu0 0
      %574 = vmatmul.mubr.bf16.gmra.mrb[0].mxu0 %v465
      %v575 = vpop.f32.mrb[0].mxu0
      %v576 = vadd.f32 0.0, %v575
      %v577 = vpop.f32.mrb[0].mxu0
      %v578 = vpop.f32.mrb[0].mxu0
      %v579 = vadd.f32 0.0, %v578
      %v580 = vpop.f32.mrb[0].mxu0
      %581 = vmatprep.mubr.bf16.mxu0 0
      %582 = vmatmul.mubr.bf16.gmra.mrb[0].mxu0 %v468
      %v583 = vpop.f32.mrb[0].mxu0
      %v584 = vadd.f32 0.0, %v583
      %v585 = vpop.f32.mrb[0].mxu0
      %v586 = vpop.f32.mrb[0].mxu0
      %v587 = vadd.f32 0.0, %v586
      %v588 = vpop.f32.mrb[0].mxu0
      %589 = vmatprep.mubr.bf16.mxu0 0
      %590 = vmatmul.mubr.bf16.gmra.mrb[0].mxu0 %v471
      %v591 = vpop.f32.mrb[0].mxu0
      %v592 = vadd.f32 0.0, %v591
      %v593 = vpop.f32.mrb[0].mxu0
      %v594 = vpop.f32.mrb[0].mxu0
      %v595 = vadd.f32 0.0, %v594
      %v596 = vpop.f32.mrb[0].mxu0
      %597 = vmatprep.mubr.bf16.mxu0 0
      %598 = vmatmul.mubr.bf16.gmra.mrb[0].mxu0 %v474
      %v599 = vpop.f32.mrb[0].mxu0
      %v600 = vadd.f32 0.0, %v599
      %v601 = vpop.f32.mrb[0].mxu0
      %v602 = vpop.f32.mrb[0].mxu0
      %v603 = vadd.f32 0.0, %v602
      %v604 = vpop.f32.mrb[0].mxu0
      %605 = vmatprep.mubr.bf16.mxu0 0
      %606 = vmatmul.mubr.bf16.gmra.mrb[0].mxu0 %v477
      %v607 = vpop.f32.mrb[0].mxu0
      %v608 = vadd.f32 0.0, %v607
      %v609 = vpop.f32.mrb[0].mxu0
      %v610 = vpop.f32.mrb[0].mxu0
      %v611 = vadd.f32 0.0, %v610
      %v612 = vpop.f32.mrb[0].mxu0
      %613 = vmatprep.mubr.bf16.mxu0 0
      %614 = vmatmul.mubr.bf16.gmra.mrb[0].mxu0 %v480
      %v615 = vpop.f32.mrb[0].mxu0
      %v616 = vadd.f32 0.0, %v615
      %v617 = vpop.f32.mrb[0].mxu0
      %v618 = vpop.f32.mrb[0].mxu0
      %v619 = vadd.f32 0.0, %v618
      %v620 = vpop.f32.mrb[0].mxu0
      %621 = vmatprep.mubr.bf16.mxu0 0
      %622 = vmatmul.mubr.bf16.gmra.mrb[0].mxu0 %v483
      %v623 = vpop.f32.mrb[0].mxu0
      %v624 = vadd.f32 0.0, %v623
      %v625 = vpop.f32.mrb[0].mxu0
      %v626 = vpop.f32.mrb[0].mxu0
      %v627 = vadd.f32 0.0, %v626
      %v628 = vpop.f32.mrb[0].mxu0
      %629 = vmatprep.mubr.bf16.mxu0 0
      %630 = vmatmul.mubr.bf16.gmra.mrb[0].mxu0 %v486
      %v631 = vpop.f32.mrb[0].mxu0
      %v632 = vadd.f32 0.0, %v631
      %v633 = vpop.f32.mrb[0].mxu0
      %v634 = vpop.f32.mrb[0].mxu0
      %v635 = vadd.f32 0.0, %v634
      %v636 = vpop.f32.mrb[0].mxu0
      %637 = vmatprep.mubr.bf16.mxu0 0
      %638 = vmatmul.mubr.bf16.gmra.mrb[0].mxu0 %v489
      %v639 = vpop.f32.mrb[0].mxu0
      %v640 = vadd.f32 0.0, %v639
      %v641 = vpop.f32.mrb[0].mxu0
      %v642 = vpop.f32.mrb[0].mxu0
      %v643 = vadd.f32 0.0, %v642
      %v644 = vpop.f32.mrb[0].mxu0
      %645 = vmatprep.mubr.bf16.mxu0 0
      %646 = vmatmul.mubr.bf16.gmra.mrb[0].mxu0 %v492
      %v647 = vpop.f32.mrb[0].mxu0
      %v648 = vadd.f32 0.0, %v647
      %v649 = vpop.f32.mrb[0].mxu0
      %v650 = vpop.f32.mrb[0].mxu0
      %v651 = vadd.f32 0.0, %v650
      %v652 = vpop.f32.mrb[0].mxu0
      %653 = vmatprep.mubr.bf16.mxu0 0
      %654 = vmatmul.mubr.bf16.gmra.mrb[0].mxu0 %v495
      %v655 = vpop.f32.mrb[0].mxu0
      %v656 = vadd.f32 0.0, %v655
      %v657 = vpop.f32.mrb[0].mxu0
      %v658 = vpop.f32.mrb[0].mxu0
      %v659 = vadd.f32 0.0, %v658
      %v660 = vpop.f32.mrb[0].mxu0
      %661 = vdwg.mxu0
      %v662 = vadd.f32 %v284, %v536
      %v663 = vadd.f32 %v285, %v539
      %v664 = vadd.f32 %v286, %v544
      %v665 = vadd.f32 %v287, %v547
      %v666 = vadd.f32 %v288, %v552
      %v667 = vadd.f32 %v289, %v555
      %v668 = vadd.f32 %v290, %v560
      %v669 = vadd.f32 %v291, %v563
      %v670 = vadd.f32 %v292, %v568
      %v671 = vadd.f32 %v293, %v571
      %v672 = vadd.f32 %v294, %v576
      %v673 = vadd.f32 %v295, %v579
      %v674 = vadd.f32 %v296, %v584
      %v675 = vadd.f32 %v297, %v587
      %v676 = vadd.f32 %v298, %v592
      %v677 = vadd.f32 %v299, %v595
      %v678 = vadd.f32 %v300, %v600
      %v679 = vadd.f32 %v301, %v603
      %v680 = vadd.f32 %v302, %v608
      %v681 = vadd.f32 %v303, %v611
      %v682 = vadd.f32 %v304, %v616
      %v683 = vadd.f32 %v305, %v619
      %v684 = vadd.f32 %v306, %v624
      %v685 = vadd.f32 %v307, %v627
      %v686 = vadd.f32 %v308, %v632
      %v687 = vadd.f32 %v309, %v635
      %v688 = vadd.f32 %v310, %v640
      %v689 = vadd.f32 %v311, %v643
      %v690 = vadd.f32 %v312, %v648
      %v691 = vadd.f32 %v313, %v651
      %v692 = vadd.f32 %v314, %v656
      %v693 = vadd.f32 %v315, %v659
      %vm694 = vcmask 31744
      %695 = vst.msk [vmem:[#allocation2] sm:$0xff] %vm694, %v662
      %696 = vst.msk [vmem:[#allocation2 + $0x8] sm:$0xff] %vm694, %v663
      %697 = vst.msk [vmem:[#allocation2 + $0x10] sm:$0xff] %vm694, %v664
      %698 = vst.msk [vmem:[#allocation2 + $0x18] sm:$0xff] %vm694, %v665
      %699 = vst.msk [vmem:[#allocation2 + $0x20] sm:$0xff] %vm694, %v666
      %700 = vst.msk [vmem:[#allocation2 + $0x28] sm:$0xff] %vm694, %v667
      %701 = vst.msk [vmem:[#allocation2 + $0x30] sm:$0xff] %vm694, %v668
      %702 = vst.msk [vmem:[#allocation2 + $0x38] sm:$0xff] %vm694, %v669
      %703 = vst.msk [vmem:[#allocation2 + $0x40] sm:$0xff] %vm694, %v670
      %704 = vst.msk [vmem:[#allocation2 + $0x48] sm:$0xff] %vm694, %v671
      %705 = vst.msk [vmem:[#allocation2 + $0x50] sm:$0xff] %vm694, %v672
      %706 = vst.msk [vmem:[#allocation2 + $0x58] sm:$0xff] %vm694, %v673
      %707 = vst.msk [vmem:[#allocation2 + $0x60] sm:$0xff] %vm694, %v674
      %708 = vst.msk [vmem:[#allocation2 + $0x68] sm:$0xff] %vm694, %v675
      %709 = vst.msk [vmem:[#allocation2 + $0x70] sm:$0xff] %vm694, %v676
      %710 = vst.msk [vmem:[#allocation2 + $0x78] sm:$0xff] %vm694, %v677
      %711 = vst.msk [vmem:[#allocation2 + $0x80] sm:$0xff] %vm694, %v678
      %712 = vst.msk [vmem:[#allocation2 + $0x88] sm:$0xff] %vm694, %v679
      %713 = vst.msk [vmem:[#allocation2 + $0x90] sm:$0xff] %vm694, %v680
      %714 = vst.msk [vmem:[#allocation2 + $0x98] sm:$0xff] %vm694, %v681
      %715 = vst.msk [vmem:[#allocation2 + $0xa0] sm:$0xff] %vm694, %v682
      %716 = vst.msk [vmem:[#allocation2 + $0xa8] sm:$0xff] %vm694, %v683
      %717 = vst.msk [vmem:[#allocation2 + $0xb0] sm:$0xff] %vm694, %v684
      %718 = vst.msk [vmem:[#allocation2 + $0xb8] sm:$0xff] %vm694, %v685
      %719 = vst.msk [vmem:[#allocation2 + $0xc0] sm:$0xff] %vm694, %v686
      %720 = vst.msk [vmem:[#allocation2 + $0xc8] sm:$0xff] %vm694, %v687
      %721 = vst.msk [vmem:[#allocation2 + $0xd0] sm:$0xff] %vm694, %v688
      %722 = vst.msk [vmem:[#allocation2 + $0xd8] sm:$0xff] %vm694, %v689
      %723 = vst.msk [vmem:[#allocation2 + $0xe0] sm:$0xff] %vm694, %v690
      %724 = vst.msk [vmem:[#allocation2 + $0xe8] sm:$0xff] %vm694, %v691
      %725 = vst.msk [vmem:[#allocation2 + $0xf0] sm:$0xff] %vm694, %v692
      %726 = vst.msk [vmem:[#allocation2 + $0xf8] sm:$0xff] %vm694, %v693
      // Predicated region
      $region41: #{forward.10} parent=35 // pred_check
        %p727 = pneg %p247
      $region42: #{forward.10} parent=35 // pred_check_branch
        %729 = sbr.rel (%p727) target = $region44
      $region43: #{forward.10} parent=35 // pred_region
        %v730 = vld [vmem:[#allocation2] sm:$0xff]
        %v731 = vld [vmem:[#allocation2 + $0x8] sm:$0xff]
        %v732 = vld [vmem:[#allocation2 + $0x10] sm:$0xff]
        %v733 = vld [vmem:[#allocation2 + $0x18] sm:$0xff]
        %v734 = vld [vmem:[#allocation2 + $0x20] sm:$0xff]
        %v735 = vld [vmem:[#allocation2 + $0x28] sm:$0xff]
        %v736 = vld [vmem:[#allocation2 + $0x30] sm:$0xff]
        %v737 = vld [vmem:[#allocation2 + $0x38] sm:$0xff]
        %v738 = vld [vmem:[#allocation2 + $0x40] sm:$0xff]
        %v739 = vld [vmem:[#allocation2 + $0x48] sm:$0xff]
        %v740 = vld [vmem:[#allocation2 + $0x50] sm:$0xff]
        %v741 = vld [vmem:[#allocation2 + $0x58] sm:$0xff]
        %v742 = vld [vmem:[#allocation2 + $0x60] sm:$0xff]
        %v743 = vld [vmem:[#allocation2 + $0x68] sm:$0xff]
        %v744 = vld [vmem:[#allocation2 + $0x70] sm:$0xff]
        %v745 = vld [vmem:[#allocation2 + $0x78] sm:$0xff]
        %v746 = vld [vmem:[#allocation2 + $0x80] sm:$0xff]
        %v747 = vld [vmem:[#allocation2 + $0x88] sm:$0xff]
        %v748 = vld [vmem:[#allocation2 + $0x90] sm:$0xff]
        %v749 = vld [vmem:[#allocation2 + $0x98] sm:$0xff]
        %v750 = vld [vmem:[#allocation2 + $0xa0] sm:$0xff]
        %v751 = vld [vmem:[#allocation2 + $0xa8] sm:$0xff]
        %v752 = vld [vmem:[#allocation2 + $0xb0] sm:$0xff]
        %v753 = vld [vmem:[#allocation2 + $0xb8] sm:$0xff]
        %v754 = vld [vmem:[#allocation2 + $0xc0] sm:$0xff]
        %v755 = vld [vmem:[#allocation2 + $0xc8] sm:$0xff]
        %v756 = vld [vmem:[#allocation2 + $0xd0] sm:$0xff]
        %v757 = vld [vmem:[#allocation2 + $0xd8] sm:$0xff]
        %v758 = vld [vmem:[#allocation2 + $0xe0] sm:$0xff]
        %v759 = vld [vmem:[#allocation2 + $0xe8] sm:$0xff]
        %v760 = vld [vmem:[#allocation2 + $0xf0] sm:$0xff]
        %v761 = vld [vmem:[#allocation2 + $0xf8] sm:$0xff]
        %v762 = vld [vmem:[%s2] sm:$0x1]
        %v764 = vlaneseq
        %v765 = vshrl.u32 %v764, 7
        %v766 = vsub.s32 0, %v765
        %v767 = vrot.slane %v762, %v766
        %v769 = vmul.f32 %v730, %v767
        %v770 = vmul.f32 %v731, %v767
        %v771 = vmul.f32 %v732, %v767
        %v772 = vmul.f32 %v733, %v767
        %v773 = vmul.f32 %v734, %v767
        %v774 = vmul.f32 %v735, %v767
        %v775 = vmul.f32 %v736, %v767
        %v776 = vmul.f32 %v737, %v767
        %v777 = vmul.f32 %v738, %v767
        %v778 = vmul.f32 %v739, %v767
        %v779 = vmul.f32 %v740, %v767
        %v780 = vmul.f32 %v741, %v767
        %v781 = vmul.f32 %v742, %v767
        %v782 = vmul.f32 %v743, %v767
        %v783 = vmul.f32 %v744, %v767
        %v784 = vmul.f32 %v745, %v767
        %v785 = vmul.f32 %v746, %v767
        %v786 = vmul.f32 %v747, %v767
        %v787 = vmul.f32 %v748, %v767
        %v788 = vmul.f32 %v749, %v767
        %v789 = vmul.f32 %v750, %v767
        %v790 = vmul.f32 %v751, %v767
        %v791 = vmul.f32 %v752, %v767
        %v792 = vmul.f32 %v753, %v767
        %v793 = vmul.f32 %v754, %v767
        %v794 = vmul.f32 %v755, %v767
        %v795 = vmul.f32 %v756, %v767
        %v796 = vmul.f32 %v757, %v767
        %v797 = vmul.f32 %v758, %v767
        %v798 = vmul.f32 %v759, %v767
        %v799 = vmul.f32 %v760, %v767
        %v800 = vmul.f32 %v761, %v767
        %v801 = vld [vmem:[%s3] sm:$0x1]
        %v803 = vlaneseq
        %v804 = vshrl.u32 %v803, 7
        %v805 = vsub.s32 0, %v804
        %v806 = vrot.slane %v801, %v805
        %v808 = vadd.f32 %v769, %v806
        %v809 = vadd.f32 %v770, %v806
        %v810 = vadd.f32 %v771, %v806
        %v811 = vadd.f32 %v772, %v806
        %v812 = vadd.f32 %v773, %v806
        %v813 = vadd.f32 %v774, %v806
        %v814 = vadd.f32 %v775, %v806
        %v815 = vadd.f32 %v776, %v806
        %v816 = vadd.f32 %v777, %v806
        %v817 = vadd.f32 %v778, %v806
        %v818 = vadd.f32 %v779, %v806
        %v819 = vadd.f32 %v780, %v806
        %v820 = vadd.f32 %v781, %v806
        %v821 = vadd.f32 %v782, %v806
        %v822 = vadd.f32 %v783, %v806
        %v823 = vadd.f32 %v784, %v806
        %v824 = vadd.f32 %v785, %v806
        %v825 = vadd.f32 %v786, %v806
        %v826 = vadd.f32 %v787, %v806
        %v827 = vadd.f32 %v788, %v806
        %v828 = vadd.f32 %v789, %v806
        %v829 = vadd.f32 %v790, %v806
        %v830 = vadd.f32 %v791, %v806
        %v831 = vadd.f32 %v792, %v806
        %v832 = vadd.f32 %v793, %v806
        %v833 = vadd.f32 %v794, %v806
        %v834 = vadd.f32 %v795, %v806
        %v835 = vadd.f32 %v796, %v806
        %v836 = vadd.f32 %v797, %v806
        %v837 = vadd.f32 %v798, %v806
        %v838 = vadd.f32 %v799, %v806
        %v839 = vadd.f32 %v800, %v806
        %v840 = vmax.f32 %v808, 0.0
        %v841 = vmax.f32 %v809, 0.0
        %v842 = vmax.f32 %v810, 0.0
        %v843 = vmax.f32 %v811, 0.0
        %v844 = vmax.f32 %v812, 0.0
        %v845 = vmax.f32 %v813, 0.0
        %v846 = vmax.f32 %v814, 0.0
        %v847 = vmax.f32 %v815, 0.0
        %v848 = vmax.f32 %v816, 0.0
        %v849 = vmax.f32 %v817, 0.0
        %v850 = vmax.f32 %v818, 0.0
        %v851 = vmax.f32 %v819, 0.0
        %v852 = vmax.f32 %v820, 0.0
        %v853 = vmax.f32 %v821, 0.0
        %v854 = vmax.f32 %v822, 0.0
        %v855 = vmax.f32 %v823, 0.0
        %v856 = vmax.f32 %v824, 0.0
        %v857 = vmax.f32 %v825, 0.0
        %v858 = vmax.f32 %v826, 0.0
        %v859 = vmax.f32 %v827, 0.0
        %v860 = vmax.f32 %v828, 0.0
        %v861 = vmax.f32 %v829, 0.0
        %v862 = vmax.f32 %v830, 0.0
        %v863 = vmax.f32 %v831, 0.0
        %v864 = vmax.f32 %v832, 0.0
        %v865 = vmax.f32 %v833, 0.0
        %v866 = vmax.f32 %v834, 0.0
        %v867 = vmax.f32 %v835, 0.0
        %v868 = vmax.f32 %v836, 0.0
        %v869 = vmax.f32 %v837, 0.0
        %v870 = vmax.f32 %v838, 0.0
        %v871 = vmax.f32 %v839, 0.0
        %v872 = vpack.c.bf16 %v841, %v840
        %v873 = vpack.c.bf16 %v843, %v842
        %v874 = vpack.c.bf16 %v845, %v844
        %v875 = vpack.c.bf16 %v847, %v846
        %v876 = vpack.c.bf16 %v849, %v848
        %v877 = vpack.c.bf16 %v851, %v850
        %v878 = vpack.c.bf16 %v853, %v852
        %v879 = vpack.c.bf16 %v855, %v854
        %v880 = vpack.c.bf16 %v857, %v856
        %v881 = vpack.c.bf16 %v859, %v858
        %v882 = vpack.c.bf16 %v861, %v860
        %v883 = vpack.c.bf16 %v863, %v862
        %v884 = vpack.c.bf16 %v865, %v864
        %v885 = vpack.c.bf16 %v867, %v866
        %v886 = vpack.c.bf16 %v869, %v868
        %v887 = vpack.c.bf16 %v871, %v870
        %v904 = vunpack.c.l.b16 %v872
        %v905 = vunpack.c.h.b16 %v872
        %v906 = vunpack.c.l.b16 %v873
        %v907 = vunpack.c.h.b16 %v873
        %v908 = vunpack.c.l.b16 %v874
        %v909 = vunpack.c.h.b16 %v874
        %v910 = vunpack.c.l.b16 %v875
        %v911 = vunpack.c.h.b16 %v875
        %v912 = vunpack.c.l.b16 %v876
        %v913 = vunpack.c.h.b16 %v876
        %v914 = vunpack.c.l.b16 %v877
        %v915 = vunpack.c.h.b16 %v877
        %v916 = vunpack.c.l.b16 %v878
        %v917 = vunpack.c.h.b16 %v878
        %v918 = vunpack.c.l.b16 %v879
        %v919 = vunpack.c.h.b16 %v879
        %v920 = vunpack.c.l.b16 %v880
        %v921 = vunpack.c.h.b16 %v880
        %v922 = vunpack.c.l.b16 %v881
        %v923 = vunpack.c.h.b16 %v881
        %v924 = vunpack.c.l.b16 %v882
        %v925 = vunpack.c.h.b16 %v882
        %v926 = vunpack.c.l.b16 %v883
        %v927 = vunpack.c.h.b16 %v883
        %v928 = vunpack.c.l.b16 %v884
        %v929 = vunpack.c.h.b16 %v884
        %v930 = vunpack.c.l.b16 %v885
        %v931 = vunpack.c.h.b16 %v885
        %v932 = vunpack.c.l.b16 %v886
        %v933 = vunpack.c.h.b16 %v886
        %v934 = vunpack.c.l.b16 %v887
        %v935 = vunpack.c.h.b16 %v887
        %v936 = vpack.c.b16 %v904, %v904
        %v937 = vpack.c.b16 %v905, %v905
        %v938 = vpack.c.b16 %v906, %v906
        %v939 = vpack.c.b16 %v907, %v907
        %v940 = vpack.c.b16 %v908, %v908
        %v941 = vpack.c.b16 %v909, %v909
        %v942 = vpack.c.b16 %v910, %v910
        %v943 = vpack.c.b16 %v911, %v911
        %v944 = vpack.c.b16 %v912, %v912
        %v945 = vpack.c.b16 %v913, %v913
        %v946 = vpack.c.b16 %v914, %v914
        %v947 = vpack.c.b16 %v915, %v915
        %v948 = vpack.c.b16 %v916, %v916
        %v949 = vpack.c.b16 %v917, %v917
        %v950 = vpack.c.b16 %v918, %v918
        %v951 = vpack.c.b16 %v919, %v919
        %v952 = vpack.c.b16 %v920, %v920
        %v953 = vpack.c.b16 %v921, %v921
        %v954 = vpack.c.b16 %v922, %v922
        %v955 = vpack.c.b16 %v923, %v923
        %v956 = vpack.c.b16 %v924, %v924
        %v957 = vpack.c.b16 %v925, %v925
        %v958 = vpack.c.b16 %v926, %v926
        %v959 = vpack.c.b16 %v927, %v927
        %v960 = vpack.c.b16 %v928, %v928
        %v961 = vpack.c.b16 %v929, %v929
        %v962 = vpack.c.b16 %v930, %v930
        %v963 = vpack.c.b16 %v931, %v931
        %v964 = vpack.c.b16 %v932, %v932
        %v965 = vpack.c.b16 %v933, %v933
        %v966 = vpack.c.b16 %v934, %v934
        %v967 = vpack.c.b16 %v935, %v935
        %vm1000 = vcmask 27648
        %1001 = vst.msk [vmem:[%s244] sm:$0xf] %vm1000, %v936
        %1002 = vst.msk [vmem:[%s244 + $0x4] sm:$0xf] %vm1000, %v937
        %1003 = vst.msk [vmem:[%s244 + $0x8] sm:$0xf] %vm1000, %v938
        %1004 = vst.msk [vmem:[%s244 + $0xc] sm:$0xf] %vm1000, %v939
        %1005 = vst.msk [vmem:[%s244 + $0x10] sm:$0xf] %vm1000, %v940
        %1006 = vst.msk [vmem:[%s244 + $0x14] sm:$0xf] %vm1000, %v941
        %1007 = vst.msk [vmem:[%s244 + $0x18] sm:$0xf] %vm1000, %v942
        %1008 = vst.msk [vmem:[%s244 + $0x1c] sm:$0xf] %vm1000, %v943
        %1009 = vst.msk [vmem:[%s244 + $0x20] sm:$0xf] %vm1000, %v944
        %1010 = vst.msk [vmem:[%s244 + $0x24] sm:$0xf] %vm1000, %v945
        %1011 = vst.msk [vmem:[%s244 + $0x28] sm:$0xf] %vm1000, %v946
        %1012 = vst.msk [vmem:[%s244 + $0x2c] sm:$0xf] %vm1000, %v947
        %1013 = vst.msk [vmem:[%s244 + $0x30] sm:$0xf] %vm1000, %v948
        %1014 = vst.msk [vmem:[%s244 + $0x34] sm:$0xf] %vm1000, %v949
        %1015 = vst.msk [vmem:[%s244 + $0x38] sm:$0xf] %vm1000, %v950
        %1016 = vst.msk [vmem:[%s244 + $0x3c] sm:$0xf] %vm1000, %v951
        %1017 = vst.msk [vmem:[%s244 + $0x40] sm:$0xf] %vm1000, %v952
        %1018 = vst.msk [vmem:[%s244 + $0x44] sm:$0xf] %vm1000, %v953
        %1019 = vst.msk [vmem:[%s244 + $0x48] sm:$0xf] %vm1000, %v954
        %1020 = vst.msk [vmem:[%s244 + $0x4c] sm:$0xf] %vm1000, %v955
        %1021 = vst.msk [vmem:[%s244 + $0x50] sm:$0xf] %vm1000, %v956
        %1022 = vst.msk [vmem:[%s244 + $0x54] sm:$0xf] %vm1000, %v957
        %1023 = vst.msk [vmem:[%s244 + $0x58] sm:$0xf] %vm1000, %v958
        %1024 = vst.msk [vmem:[%s244 + $0x5c] sm:$0xf] %vm1000, %v959
        %1025 = vst.msk [vmem:[%s244 + $0x60] sm:$0xf] %vm1000, %v960
        %1026 = vst.msk [vmem:[%s244 + $0x64] sm:$0xf] %vm1000, %v961
        %1027 = vst.msk [vmem:[%s244 + $0x68] sm:$0xf] %vm1000, %v962
        %1028 = vst.msk [vmem:[%s244 + $0x6c] sm:$0xf] %vm1000, %v963
        %1029 = vst.msk [vmem:[%s244 + $0x70] sm:$0xf] %vm1000, %v964
        %1030 = vst.msk [vmem:[%s244 + $0x74] sm:$0xf] %vm1000, %v965
        %1031 = vst.msk [vmem:[%s244 + $0x78] sm:$0xf] %vm1000, %v966
        %1032 = vst.msk [vmem:[%s244 + $0x7c] sm:$0xf] %vm1000, %v967
      $region44: #{forward.10} parent=35 // pred_fallthru
        _
      %s1033 = smul.u32 32, %s19
      %p1034 = scmp.lt.s32.totalorder %s1033, 63
      %s1035 = scalar_select %p1034, %s1033, 63
      %s1036 = smul.addr %s1035, 4
      %s1037 = scalar_lea.vmem %s4, %s1036
      // Predicated region
      $region45: #{forward.10} parent=35 // pred_check
        %p1038 = pneg %p141
      $region46: #{forward.10} parent=35 // pred_check_branch
        %1040 = sbr.rel (%p1038) target = $region48
      $region47: #{forward.10} parent=35 // pred_region
        %s1041 = smul.u32 32, %s19
      $region48: #{forward.10} parent=35 // pred_fallthru
        _
    $region36: #{forward.10} parent=5 // pred_fallthru
      _
    %p1042 = scmp.le.s32.totalorder 2, %s10
    // Predicated region
    $region49: #{forward.10} parent=5 // pred_check
      %p1043 = pneg %p1042
    $region50: #{forward.10} parent=5 // pred_check_branch
      %1045 = sbr.rel (%p1043) target = $region52
    $region51: #{forward.10} parent=5 // pred_region
      %s1046 = ssub.s32 %s10, 2
      // Predicated region
      $region53: #{forward.10} parent=51 // pred_check
        %p1047 = pneg %p147
      $region54: #{forward.10} parent=51 // pred_check_branch
        %1049 = sbr.rel (%p1047) target = $region56
      $region55: #{forward.10} parent=51 // pred_region
        %s1050 = smul.u32 32, %s21
        %p1051 = scmp.lt.s32.totalorder %s1050, 63
        %s1052 = scalar_select %p1051, %s1050, 63
        %s1053 = smul.addr %s1052, 4
        %s1054 = scalar_lea.vmem %s4, %s1053
      $region56: #{forward.10} parent=51 // pred_fallthru
        _
    $region52: #{forward.10} parent=5 // pred_fallthru
      _
  $region6: #{forward.10} parent=0 // loop_footer
    %s14 = sadd.s32 1, %s10
  $region7: #{forward.10} parent=0 // loop_footer_branch
    %9 = sbr.rel target = $region3
  $region8: #{forward.10} parent=0 // loop_exit
    _

// kernel: forward.12
$region0: #{forward.12}
  #allocation0 [shape = 'u32[]', space=smem, size = 0x4, offset = 0x4, fixed_abs, tag = 'smem constant byte address 0x4 - core index']
  #allocation1 [shape = 'u32[144,128]{1,0:T(1,128)}', space=vmem, size = 0x12000, scoped, tag = 'internal scratch']
  #allocation2 [shape = 'f32[128,8]{1,0:T(8,128)}', space=vmem, size = 0x10000, scoped, tag = 'scratch operand']
  %s0 = inlined_call_operand.vmem [shape: bf16[128,36], index: 0, kind: input, shape index: {}]
  %s1 = inlined_call_operand.vmem [shape: bf16[36,8], index: 1, kind: input, shape index: {}]
  %s2 = inlined_call_operand.vmem [shape: f32[1,8], index: 2, kind: input, shape index: {}]
  %s3 = inlined_call_operand.vmem [shape: f32[1,8], index: 3, kind: input, shape index: {}]
  %s4 = inlined_call_operand.vmem [shape: bf16[128,8], index: 4, kind: output, shape index: {}]
  %s5 = sld [smem:[#allocation0]]
  $region34: #{forward.12} parent=0
    _
  %s7 = ssub.s32 1, %s5
  %s8 = scalar_select 0, %s7, %s5
  // Predicated region
  $region2: #{forward.12} parent=0 // pred_check
    _
  $region3: #{forward.12} parent=0 // pred_check_branch
    %10 = sbr.rel (0) target = $region5
  $region4: #{forward.12} parent=0 // pred_region
    _
  $region5: #{forward.12} parent=0 // pred_fallthru
    _
  // Predicated region
  $region6: #{forward.12} parent=0 // pred_check
    _
  $region7: #{forward.12} parent=0 // pred_check_branch
    %12 = sbr.rel (0) target = $region9
  $region8: #{forward.12} parent=0 // pred_region
    _
  $region9: #{forward.12} parent=0 // pred_fallthru
    _
  // Predicated region
  $region10: #{forward.12} parent=0 // pred_check
    _
  $region11: #{forward.12} parent=0 // pred_check_branch
    %14 = sbr.rel (0) target = $region13
  $region12: #{forward.12} parent=0 // pred_region
    _
  $region13: #{forward.12} parent=0 // pred_fallthru
    _
  // Predicated region
  $region14: #{forward.12} parent=0 // pred_check
    _
  $region15: #{forward.12} parent=0 // pred_check_branch
    %16 = sbr.rel (0) target = $region17
  $region16: #{forward.12} parent=0 // pred_region
    _
  $region17: #{forward.12} parent=0 // pred_fallthru
    _
  %p18 = scmp.eq.s32.totalorder 0, 0
  // Predicated region
  $region18: #{forward.12} parent=0 // pred_check
    %p19 = pneg %p18
  $region19: #{forward.12} parent=0 // pred_check_branch
    %21 = sbr.rel (%p19) target = $region21
  $region20: #{forward.12} parent=0 // pred_region
    %vm22 = vcmask 64512
    %23 = vst.msk [vmem:[#allocation2] sm:$0xff] %vm22, 0.0
    %24 = vst.msk [vmem:[#allocation2 + $0x8] sm:$0xff] %vm22, 0.0
    %25 = vst.msk [vmem:[#allocation2 + $0x10] sm:$0xff] %vm22, 0.0
    %26 = vst.msk [vmem:[#allocation2 + $0x18] sm:$0xff] %vm22, 0.0
    %27 = vst.msk [vmem:[#allocation2 + $0x20] sm:$0xff] %vm22, 0.0
    %28 = vst.msk [vmem:[#allocation2 + $0x28] sm:$0xff] %vm22, 0.0
    %29 = vst.msk [vmem:[#allocation2 + $0x30] sm:$0xff] %vm22, 0.0
    %30 = vst.msk [vmem:[#allocation2 + $0x38] sm:$0xff] %vm22, 0.0
    %31 = vst.msk [vmem:[#allocation2 + $0x40] sm:$0xff] %vm22, 0.0
    %32 = vst.msk [vmem:[#allocation2 + $0x48] sm:$0xff] %vm22, 0.0
    %33 = vst.msk [vmem:[#allocation2 + $0x50] sm:$0xff] %vm22, 0.0
    %34 = vst.msk [vmem:[#allocation2 + $0x58] sm:$0xff] %vm22, 0.0
    %35 = vst.msk [vmem:[#allocation2 + $0x60] sm:$0xff] %vm22, 0.0
    %36 = vst.msk [vmem:[#allocation2 + $0x68] sm:$0xff] %vm22, 0.0
    %37 = vst.msk [vmem:[#allocation2 + $0x70] sm:$0xff] %vm22, 0.0
    %38 = vst.msk [vmem:[#allocation2 + $0x78] sm:$0xff] %vm22, 0.0
  $region21: #{forward.12} parent=0 // pred_fallthru
    _
  %v39 = vld [vmem:[#allocation2] sm:$0xff]
  %v40 = vld [vmem:[#allocation2 + $0x8] sm:$0xff]
  %v41 = vld [vmem:[#allocation2 + $0x10] sm:$0xff]
  %v42 = vld [vmem:[#allocation2 + $0x18] sm:$0xff]
  %v43 = vld [vmem:[#allocation2 + $0x20] sm:$0xff]
  %v44 = vld [vmem:[#allocation2 + $0x28] sm:$0xff]
  %v45 = vld [vmem:[#allocation2 + $0x30] sm:$0xff]
  %v46 = vld [vmem:[#allocation2 + $0x38] sm:$0xff]
  %v47 = vld [vmem:[#allocation2 + $0x40] sm:$0xff]
  %v48 = vld [vmem:[#allocation2 + $0x48] sm:$0xff]
  %v49 = vld [vmem:[#allocation2 + $0x50] sm:$0xff]
  %v50 = vld [vmem:[#allocation2 + $0x58] sm:$0xff]
  %v51 = vld [vmem:[#allocation2 + $0x60] sm:$0xff]
  %v52 = vld [vmem:[#allocation2 + $0x68] sm:$0xff]
  %v53 = vld [vmem:[#allocation2 + $0x70] sm:$0xff]
  %v54 = vld [vmem:[#allocation2 + $0x78] sm:$0xff]
  %v55 = vld [vmem:[%s0] sm:$0xf]
  %v56 = vld [vmem:[%s0 + $0x4] sm:$0xf]
  %v57 = vld [vmem:[%s0 + $0x8] sm:$0xf]
  %v58 = vld [vmem:[%s0 + $0xc] sm:$0xf]
  %v59 = vld [vmem:[%s0 + $0x10] sm:$0xf]
  %v60 = vld [vmem:[%s0 + $0x14] sm:$0xf]
  %v61 = vld [vmem:[%s0 + $0x18] sm:$0xf]
  %v62 = vld [vmem:[%s0 + $0x1c] sm:$0xf]
  %v63 = vld [vmem:[%s0 + $0x20] sm:$0xf]
  %v64 = vld [vmem:[%s0 + $0x24] sm:$0xf]
  %v65 = vld [vmem:[%s0 + $0x28] sm:$0xf]
  %v66 = vld [vmem:[%s0 + $0x2c] sm:$0xf]
  %v67 = vld [vmem:[%s0 + $0x30] sm:$0xf]
  %v68 = vld [vmem:[%s0 + $0x34] sm:$0xf]
  %v69 = vld [vmem:[%s0 + $0x38] sm:$0xf]
  %v70 = vld [vmem:[%s0 + $0x3c] sm:$0xf]
  %v71 = vld [vmem:[%s1] sm:$0xf]
  %v72 = vld [vmem:[%s1 + $0x4] sm:$0xf]
  %v73 = vld [vmem:[%s1 + $0x8] sm:$0xf]
  %v74 = vld [vmem:[%s1 + $0xc] sm:$0xf]
  %v75 = vld [vmem:[%s1 + $0x10] sm:$0x3]
  %v92 = vunpack.c.l.b16 %v55
  %v93 = vunpack.c.l.b16 %v56
  %v94 = vunpack.c.l.b16 %v57
  %v95 = vunpack.c.l.b16 %v58
  %v96 = vunpack.c.l.b16 %v59
  %v97 = vunpack.c.l.b16 %v60
  %v98 = vunpack.c.l.b16 %v61
  %v99 = vunpack.c.l.b16 %v62
  %v100 = vunpack.c.l.b16 %v63
  %v101 = vunpack.c.l.b16 %v64
  %v102 = vunpack.c.l.b16 %v65
  %v103 = vunpack.c.l.b16 %v66
  %v104 = vunpack.c.l.b16 %v67
  %v105 = vunpack.c.l.b16 %v68
  %v106 = vunpack.c.l.b16 %v69
  %v107 = vunpack.c.l.b16 %v70
  %v108 = vpack.c.b16 %v93, %v92
  %v109 = vpack.c.b16 %v95, %v94
  %v110 = vpack.c.b16 %v97, %v96
  %v111 = vpack.c.b16 %v99, %v98
  %v112 = vpack.c.b16 %v101, %v100
  %v113 = vpack.c.b16 %v103, %v102
  %v114 = vpack.c.b16 %v105, %v104
  %v115 = vpack.c.b16 %v107, %v106
  %v121 = vunpack.c.l.b16 %v71
  %v122 = vunpack.c.l.b16 %v72
  %v123 = vunpack.c.l.b16 %v73
  %v124 = vunpack.c.l.b16 %v74
  %v125 = vunpack.c.l.b16 %v75
  %v126 = vpack.c.b16 %v122, %v121
  %v127 = vpack.c.b16 %v124, %v123
  %v128 = vpack.c.b16 %v125, %v125
  %vm131 = vcmask 293888
  %v133 = vsel %vm131, %v108, 0
  %v136 = vsel %vm131, %v109, 0
  %v139 = vsel %vm131, %v110, 0
  %v142 = vsel %vm131, %v111, 0
  %v145 = vsel %vm131, %v112, 0
  %v148 = vsel %vm131, %v113, 0
  %v151 = vsel %vm131, %v114, 0
  %v154 = vsel %vm131, %v115, 0
  %vm156 = vcmask 1041408
  %v158 = vsel %vm156, %v128, 0
  %160 = vmatprep.subr.bf16.mxu0 0
  %161 = vmatpush1.bf16.msra.mxu0 %v126
  %162 = vmatprep.subr.bf16.mxu0 0
  %163 = vmatpush1.bf16.msra.mxu0 %v127
  %164 = vmatprep.subr.bf16.mxu0 0
  %165 = vmatpush1.bf16.msra.mxu0 %v158
  %166 = vmatprep.subr.bf16.mxu0 0
  %167 = vmatpush1.bf16.msra.mxu0 0
  %168 = vmatprep.subr.bf16.mxu0 0
  %169 = vmatpush1.bf16.msra.mxu0 0
  %170 = vmatprep.subr.bf16.mxu0 0
  %171 = vmatpush1.bf16.msra.mxu0 0
  %172 = vmatprep.subr.bf16.mxu0 0
  %173 = vmatpush1.bf16.msra.mxu0 0
  %174 = vmatprep.subr.bf16.mxu0 0
  %175 = vmatpush1.bf16.msra.mxu0 0
  %176 = vmatprep.subr.bf16.mxu0 0
  %177 = vmatpush1.bf16.msra.mxu0 0
  %178 = vmatprep.subr.bf16.mxu0 0
  %179 = vmatpush1.bf16.msra.mxu0 0
  %180 = vmatprep.subr.bf16.mxu0 0
  %181 = vmatpush1.bf16.msra.mxu0 0
  %182 = vmatprep.subr.bf16.mxu0 0
  %183 = vmatpush1.bf16.msra.mxu0 0
  %184 = vmatprep.subr.bf16.mxu0 0
  %185 = vmatpush1.bf16.msra.mxu0 0
  %186 = vmatprep.subr.bf16.mxu0 0
  %187 = vmatpush1.bf16.msra.mxu0 0
  %188 = vmatprep.subr.bf16.mxu0 0
  %189 = vmatpush1.bf16.msra.mxu0 0
  %190 = vmatprep.subr.bf16.mxu0 0
  %191 = vmatpush1.bf16.msra.mxu0 0
  %192 = vmatprep.mubr.bf16.mxu0 0
  %193 = vmatmul.mubr.bf16.gmra.mrb[0].mxu0 %v133
  %v194 = vpop.f32.mrb[0].mxu0
  %v195 = vadd.f32 0.0, %v194
  %v196 = vpop.f32.mrb[0].mxu0
  %v197 = vpop.f32.mrb[0].mxu0
  %v198 = vadd.f32 0.0, %v197
  %v199 = vpop.f32.mrb[0].mxu0
  %200 = vmatprep.mubr.bf16.mxu0 0
  %201 = vmatmul.mubr.bf16.gmra.mrb[0].mxu0 %v136
  %v202 = vpop.f32.mrb[0].mxu0
  %v203 = vadd.f32 0.0, %v202
  %v204 = vpop.f32.mrb[0].mxu0
  %v205 = vpop.f32.mrb[0].mxu0
  %v206 = vadd.f32 0.0, %v205
  %v207 = vpop.f32.mrb[0].mxu0
  %208 = vmatprep.mubr.bf16.mxu0 0
  %209 = vmatmul.mubr.bf16.gmra.mrb[0].mxu0 %v139
  %v210 = vpop.f32.mrb[0].mxu0
  %v211 = vadd.f32 0.0, %v210
  %v212 = vpop.f32.mrb[0].mxu0
  %v213 = vpop.f32.mrb[0].mxu0
  %v214 = vadd.f32 0.0, %v213
  %v215 = vpop.f32.mrb[0].mxu0
  %216 = vmatprep.mubr.bf16.mxu0 0
  %217 = vmatmul.mubr.bf16.gmra.mrb[0].mxu0 %v142
  %v218 = vpop.f32.mrb[0].mxu0
  %v219 = vadd.f32 0.0, %v218
  %v220 = vpop.f32.mrb[0].mxu0
  %v221 = vpop.f32.mrb[0].mxu0
  %v222 = vadd.f32 0.0, %v221
  %v223 = vpop.f32.mrb[0].mxu0
  %224 = vmatprep.mubr.bf16.mxu0 0
  %225 = vmatmul.mubr.bf16.gmra.mrb[0].mxu0 %v145
  %v226 = vpop.f32.mrb[0].mxu0
  %v227 = vadd.f32 0.0, %v226
  %v228 = vpop.f32.mrb[0].mxu0
  %v229 = vpop.f32.mrb[0].mxu0
  %v230 = vadd.f32 0.0, %v229
  %v231 = vpop.f32.mrb[0].mxu0
  %232 = vmatprep.mubr.bf16.mxu0 0
  %233 = vmatmul.mubr.bf16.gmra.mrb[0].mxu0 %v148
  %v234 = vpop.f32.mrb[0].mxu0
  %v235 = vadd.f32 0.0, %v234
  %v236 = vpop.f32.mrb[0].mxu0
  %v237 = vpop.f32.mrb[0].mxu0
  %v238 = vadd.f32 0.0, %v237
  %v239 = vpop.f32.mrb[0].mxu0
  %240 = vmatprep.mubr.bf16.mxu0 0
  %241 = vmatmul.mubr.bf16.gmra.mrb[0].mxu0 %v151
  %v242 = vpop.f32.mrb[0].mxu0
  %v243 = vadd.f32 0.0, %v242
  %v244 = vpop.f32.mrb[0].mxu0
  %v245 = vpop.f32.mrb[0].mxu0
  %v246 = vadd.f32 0.0, %v245
  %v247 = vpop.f32.mrb[0].mxu0
  %248 = vmatprep.mubr.bf16.mxu0 0
  %249 = vmatmul.mubr.bf16.gmra.mrb[0].mxu0 %v154
  %v250 = vpop.f32.mrb[0].mxu0
  %v251 = vadd.f32 0.0, %v250
  %v252 = vpop.f32.mrb[0].mxu0
  %v253 = vpop.f32.mrb[0].mxu0
  %v254 = vadd.f32 0.0, %v253
  %v255 = vpop.f32.mrb[0].mxu0
  %256 = vdwg.mxu0
  %v257 = vadd.f32 %v39, %v195
  %v258 = vadd.f32 %v40, %v198
  %v259 = vadd.f32 %v41, %v203
  %v260 = vadd.f32 %v42, %v206
  %v261 = vadd.f32 %v43, %v211
  %v262 = vadd.f32 %v44, %v214
  %v263 = vadd.f32 %v45, %v219
  %v264 = vadd.f32 %v46, %v222
  %v265 = vadd.f32 %v47, %v227
  %v266 = vadd.f32 %v48, %v230
  %v267 = vadd.f32 %v49, %v235
  %v268 = vadd.f32 %v50, %v238
  %v269 = vadd.f32 %v51, %v243
  %v270 = vadd.f32 %v52, %v246
  %v271 = vadd.f32 %v53, %v251
  %v272 = vadd.f32 %v54, %v254
  %vm273 = vcmask 64512
  %274 = vst.msk [vmem:[#allocation2] sm:$0xff] %vm273, %v257
  %275 = vst.msk [vmem:[#allocation2 + $0x8] sm:$0xff] %vm273, %v258
  %276 = vst.msk [vmem:[#allocation2 + $0x10] sm:$0xff] %vm273, %v259
  %277 = vst.msk [vmem:[#allocation2 + $0x18] sm:$0xff] %vm273, %v260
  %278 = vst.msk [vmem:[#allocation2 + $0x20] sm:$0xff] %vm273, %v261
  %279 = vst.msk [vmem:[#allocation2 + $0x28] sm:$0xff] %vm273, %v262
  %280 = vst.msk [vmem:[#allocation2 + $0x30] sm:$0xff] %vm273, %v263
  %281 = vst.msk [vmem:[#allocation2 + $0x38] sm:$0xff] %vm273, %v264
  %282 = vst.msk [vmem:[#allocation2 + $0x40] sm:$0xff] %vm273, %v265
  %283 = vst.msk [vmem:[#allocation2 + $0x48] sm:$0xff] %vm273, %v266
  %284 = vst.msk [vmem:[#allocation2 + $0x50] sm:$0xff] %vm273, %v267
  %285 = vst.msk [vmem:[#allocation2 + $0x58] sm:$0xff] %vm273, %v268
  %286 = vst.msk [vmem:[#allocation2 + $0x60] sm:$0xff] %vm273, %v269
  %287 = vst.msk [vmem:[#allocation2 + $0x68] sm:$0xff] %vm273, %v270
  %288 = vst.msk [vmem:[#allocation2 + $0x70] sm:$0xff] %vm273, %v271
  %289 = vst.msk [vmem:[#allocation2 + $0x78] sm:$0xff] %vm273, %v272
  // Predicated region
  $region22: #{forward.12} parent=0 // pred_check
    %p290 = pneg %p18
  $region23: #{forward.12} parent=0 // pred_check_branch
    %292 = sbr.rel (%p290) target = $region25
  $region24: #{forward.12} parent=0 // pred_region
    %v293 = vld [vmem:[#allocation2] sm:$0xff]
    %v294 = vld [vmem:[#allocation2 + $0x8] sm:$0xff]
    %v295 = vld [vmem:[#allocation2 + $0x10] sm:$0xff]
    %v296 = vld [vmem:[#allocation2 + $0x18] sm:$0xff]
    %v297 = vld [vmem:[#allocation2 + $0x20] sm:$0xff]
    %v298 = vld [vmem:[#allocation2 + $0x28] sm:$0xff]
    %v299 = vld [vmem:[#allocation2 + $0x30] sm:$0xff]
    %v300 = vld [vmem:[#allocation2 + $0x38] sm:$0xff]
    %v301 = vld [vmem:[#allocation2 + $0x40] sm:$0xff]
    %v302 = vld [vmem:[#allocation2 + $0x48] sm:$0xff]
    %v303 = vld [vmem:[#allocation2 + $0x50] sm:$0xff]
    %v304 = vld [vmem:[#allocation2 + $0x58] sm:$0xff]
    %v305 = vld [vmem:[#allocation2 + $0x60] sm:$0xff]
    %v306 = vld [vmem:[#allocation2 + $0x68] sm:$0xff]
    %v307 = vld [vmem:[#allocation2 + $0x70] sm:$0xff]
    %v308 = vld [vmem:[#allocation2 + $0x78] sm:$0xff]
    %v309 = vld [vmem:[%s2] sm:$0x1]
    %v311 = vlaneseq
    %v312 = vshrl.u32 %v311, 7
    %v313 = vsub.s32 0, %v312
    %v314 = vrot.slane %v309, %v313
    %v316 = vmul.f32 %v293, %v314
    %v317 = vmul.f32 %v294, %v314
    %v318 = vmul.f32 %v295, %v314
    %v319 = vmul.f32 %v296, %v314
    %v320 = vmul.f32 %v297, %v314
    %v321 = vmul.f32 %v298, %v314
    %v322 = vmul.f32 %v299, %v314
    %v323 = vmul.f32 %v300, %v314
    %v324 = vmul.f32 %v301, %v314
    %v325 = vmul.f32 %v302, %v314
    %v326 = vmul.f32 %v303, %v314
    %v327 = vmul.f32 %v304, %v314
    %v328 = vmul.f32 %v305, %v314
    %v329 = vmul.f32 %v306, %v314
    %v330 = vmul.f32 %v307, %v314
    %v331 = vmul.f32 %v308, %v314
    %v332 = vld [vmem:[%s3] sm:$0x1]
    %v334 = vlaneseq
    %v335 = vshrl.u32 %v334, 7
    %v336 = vsub.s32 0, %v335
    %v337 = vrot.slane %v332, %v336
    %v339 = vadd.f32 %v316, %v337
    %v340 = vadd.f32 %v317, %v337
    %v341 = vadd.f32 %v318, %v337
    %v342 = vadd.f32 %v319, %v337
    %v343 = vadd.f32 %v320, %v337
    %v344 = vadd.f32 %v321, %v337
    %v345 = vadd.f32 %v322, %v337
    %v346 = vadd.f32 %v323, %v337
    %v347 = vadd.f32 %v324, %v337
    %v348 = vadd.f32 %v325, %v337
    %v349 = vadd.f32 %v326, %v337
    %v350 = vadd.f32 %v327, %v337
    %v351 = vadd.f32 %v328, %v337
    %v352 = vadd.f32 %v329, %v337
    %v353 = vadd.f32 %v330, %v337
    %v354 = vadd.f32 %v331, %v337
    %v355 = vmax.f32 %v339, 0.0
    %v356 = vmax.f32 %v340, 0.0
    %v357 = vmax.f32 %v341, 0.0
    %v358 = vmax.f32 %v342, 0.0
    %v359 = vmax.f32 %v343, 0.0
    %v360 = vmax.f32 %v344, 0.0
    %v361 = vmax.f32 %v345, 0.0
    %v362 = vmax.f32 %v346, 0.0
    %v363 = vmax.f32 %v347, 0.0
    %v364 = vmax.f32 %v348, 0.0
    %v365 = vmax.f32 %v349, 0.0
    %v366 = vmax.f32 %v350, 0.0
    %v367 = vmax.f32 %v351, 0.0
    %v368 = vmax.f32 %v352, 0.0
    %v369 = vmax.f32 %v353, 0.0
    %v370 = vmax.f32 %v354, 0.0
    %v371 = vpack.c.bf16 %v356, %v355
    %v372 = vpack.c.bf16 %v358, %v357
    %v373 = vpack.c.bf16 %v360, %v359
    %v374 = vpack.c.bf16 %v362, %v361
    %v375 = vpack.c.bf16 %v364, %v363
    %v376 = vpack.c.bf16 %v366, %v365
    %v377 = vpack.c.bf16 %v368, %v367
    %v378 = vpack.c.bf16 %v370, %v369
    %v387 = vunpack.c.l.b16 %v371
    %v388 = vunpack.c.h.b16 %v371
    %v389 = vunpack.c.l.b16 %v372
    %v390 = vunpack.c.h.b16 %v372
    %v391 = vunpack.c.l.b16 %v373
    %v392 = vunpack.c.h.b16 %v373
    %v393 = vunpack.c.l.b16 %v374
    %v394 = vunpack.c.h.b16 %v374
    %v395 = vunpack.c.l.b16 %v375
    %v396 = vunpack.c.h.b16 %v375
    %v397 = vunpack.c.l.b16 %v376
    %v398 = vunpack.c.h.b16 %v376
    %v399 = vunpack.c.l.b16 %v377
    %v400 = vunpack.c.h.b16 %v377
    %v401 = vunpack.c.l.b16 %v378
    %v402 = vunpack.c.h.b16 %v378
    %v403 = vpack.c.b16 %v387, %v387
    %v404 = vpack.c.b16 %v388, %v388
    %v405 = vpack.c.b16 %v389, %v389
    %v406 = vpack.c.b16 %v390, %v390
    %v407 = vpack.c.b16 %v391, %v391
    %v408 = vpack.c.b16 %v392, %v392
    %v409 = vpack.c.b16 %v393, %v393
    %v410 = vpack.c.b16 %v394, %v394
    %v411 = vpack.c.b16 %v395, %v395
    %v412 = vpack.c.b16 %v396, %v396
    %v413 = vpack.c.b16 %v397, %v397
    %v414 = vpack.c.b16 %v398, %v398
    %v415 = vpack.c.b16 %v399, %v399
    %v416 = vpack.c.b16 %v400, %v400
    %v417 = vpack.c.b16 %v401, %v401
    %v418 = vpack.c.b16 %v402, %v402
    %vm435 = vcmask 60416
    %436 = vst.msk [vmem:[%s4] sm:$0xf] %vm435, %v403
    %437 = vst.msk [vmem:[%s4 + $0x4] sm:$0xf] %vm435, %v404
    %438 = vst.msk [vmem:[%s4 + $0x8] sm:$0xf] %vm435, %v405
    %439 = vst.msk [vmem:[%s4 + $0xc] sm:$0xf] %vm435, %v406
    %440 = vst.msk [vmem:[%s4 + $0x10] sm:$0xf] %vm435, %v407
    %441 = vst.msk [vmem:[%s4 + $0x14] sm:$0xf] %vm435, %v408
    %442 = vst.msk [vmem:[%s4 + $0x18] sm:$0xf] %vm435, %v409
    %443 = vst.msk [vmem:[%s4 + $0x1c] sm:$0xf] %vm435, %v410
    %444 = vst.msk [vmem:[%s4 + $0x20] sm:$0xf] %vm435, %v411
    %445 = vst.msk [vmem:[%s4 + $0x24] sm:$0xf] %vm435, %v412
    %446 = vst.msk [vmem:[%s4 + $0x28] sm:$0xf] %vm435, %v413
    %447 = vst.msk [vmem:[%s4 + $0x2c] sm:$0xf] %vm435, %v414
    %448 = vst.msk [vmem:[%s4 + $0x30] sm:$0xf] %vm435, %v415
    %449 = vst.msk [vmem:[%s4 + $0x34] sm:$0xf] %vm435, %v416
    %450 = vst.msk [vmem:[%s4 + $0x38] sm:$0xf] %vm435, %v417
    %451 = vst.msk [vmem:[%s4 + $0x3c] sm:$0xf] %vm435, %v418
  $region25: #{forward.12} parent=0 // pred_fallthru
    _
  // Predicated region
  $region26: #{forward.12} parent=0 // pred_check
    _
  $region27: #{forward.12} parent=0 // pred_check_branch
    %453 = sbr.rel (0) target = $region29
  $region28: #{forward.12} parent=0 // pred_region
    _
  $region29: #{forward.12} parent=0 // pred_fallthru
    _
  // Predicated region
  $region30: #{forward.12} parent=0 // pred_check
    _
  $region31: #{forward.12} parent=0 // pred_check_branch
    %455 = sbr.rel (0) target = $region33
  $region32: #{forward.12} parent=0 // pred_region
    _
  $region33: #{forward.12} parent=0 // pred_fallthru
    _

// kernel: forward.13
$region0: #{forward.13}
  #allocation0 [shape = 'u32[]', space=smem, size = 0x4, offset = 0x4, fixed_abs, tag = 'smem constant byte address 0x4 - core index']
  #allocation1 [shape = 'u32[144,128]{1,0:T(1,128)}', space=vmem, size = 0x12000, scoped, tag = 'internal scratch']
  #allocation2 [shape = 'f32[128,8]{1,0:T(8,128)}', space=vmem, size = 0x10000, scoped, tag = 'scratch operand']
  %s0 = inlined_call_operand.vmem [shape: bf16[128,72], index: 0, kind: input, shape index: {}]
  %s1 = inlined_call_operand.vmem [shape: bf16[72,8], index: 1, kind: input, shape index: {}]
  %s2 = inlined_call_operand.vmem [shape: f32[1,8], index: 2, kind: input, shape index: {}]
  %s3 = inlined_call_operand.vmem [shape: f32[1,8], index: 3, kind: input, shape index: {}]
  %s4 = inlined_call_operand.vmem [shape: bf16[128,8], index: 4, kind: output, shape index: {}]
  %s5 = sld [smem:[#allocation0]]
  $region34: #{forward.13} parent=0
    _
  %s7 = ssub.s32 1, %s5
  %s8 = scalar_select 0, %s7, %s5
  // Predicated region
  $region2: #{forward.13} parent=0 // pred_check
    _
  $region3: #{forward.13} parent=0 // pred_check_branch
    %10 = sbr.rel (0) target = $region5
  $region4: #{forward.13} parent=0 // pred_region
    _
  $region5: #{forward.13} parent=0 // pred_fallthru
    _
  // Predicated region
  $region6: #{forward.13} parent=0 // pred_check
    _
  $region7: #{forward.13} parent=0 // pred_check_branch
    %12 = sbr.rel (0) target = $region9
  $region8: #{forward.13} parent=0 // pred_region
    _
  $region9: #{forward.13} parent=0 // pred_fallthru
    _
  // Predicated region
  $region10: #{forward.13} parent=0 // pred_check
    _
  $region11: #{forward.13} parent=0 // pred_check_branch
    %14 = sbr.rel (0) target = $region13
  $region12: #{forward.13} parent=0 // pred_region
    _
  $region13: #{forward.13} parent=0 // pred_fallthru
    _
  // Predicated region
  $region14: #{forward.13} parent=0 // pred_check
    _
  $region15: #{forward.13} parent=0 // pred_check_branch
    %16 = sbr.rel (0) target = $region17
  $region16: #{forward.13} parent=0 // pred_region
    _
  $region17: #{forward.13} parent=0 // pred_fallthru
    _
  %p18 = scmp.eq.s32.totalorder 0, 0
  // Predicated region
  $region18: #{forward.13} parent=0 // pred_check
    %p19 = pneg %p18
  $region19: #{forward.13} parent=0 // pred_check_branch
    %21 = sbr.rel (%p19) target = $region21
  $region20: #{forward.13} parent=0 // pred_region
    %vm22 = vcmask 64512
    %23 = vst.msk [vmem:[#allocation2] sm:$0xff] %vm22, 0.0
    %24 = vst.msk [vmem:[#allocation2 + $0x8] sm:$0xff] %vm22, 0.0
    %25 = vst.msk [vmem:[#allocation2 + $0x10] sm:$0xff] %vm22, 0.0
    %26 = vst.msk [vmem:[#allocation2 + $0x18] sm:$0xff] %vm22, 0.0
    %27 = vst.msk [vmem:[#allocation2 + $0x20] sm:$0xff] %vm22, 0.0
    %28 = vst.msk [vmem:[#allocation2 + $0x28] sm:$0xff] %vm22, 0.0
    %29 = vst.msk [vmem:[#allocation2 + $0x30] sm:$0xff] %vm22, 0.0
    %30 = vst.msk [vmem:[#allocation2 + $0x38] sm:$0xff] %vm22, 0.0
    %31 = vst.msk [vmem:[#allocation2 + $0x40] sm:$0xff] %vm22, 0.0
    %32 = vst.msk [vmem:[#allocation2 + $0x48] sm:$0xff] %vm22, 0.0
    %33 = vst.msk [vmem:[#allocation2 + $0x50] sm:$0xff] %vm22, 0.0
    %34 = vst.msk [vmem:[#allocation2 + $0x58] sm:$0xff] %vm22, 0.0
    %35 = vst.msk [vmem:[#allocation2 + $0x60] sm:$0xff] %vm22, 0.0
    %36 = vst.msk [vmem:[#allocation2 + $0x68] sm:$0xff] %vm22, 0.0
    %37 = vst.msk [vmem:[#allocation2 + $0x70] sm:$0xff] %vm22, 0.0
    %38 = vst.msk [vmem:[#allocation2 + $0x78] sm:$0xff] %vm22, 0.0
  $region21: #{forward.13} parent=0 // pred_fallthru
    _
  %v39 = vld [vmem:[#allocation2] sm:$0xff]
  %v40 = vld [vmem:[#allocation2 + $0x8] sm:$0xff]
  %v41 = vld [vmem:[#allocation2 + $0x10] sm:$0xff]
  %v42 = vld [vmem:[#allocation2 + $0x18] sm:$0xff]
  %v43 = vld [vmem:[#allocation2 + $0x20] sm:$0xff]
  %v44 = vld [vmem:[#allocation2 + $0x28] sm:$0xff]
  %v45 = vld [vmem:[#allocation2 + $0x30] sm:$0xff]
  %v46 = vld [vmem:[#allocation2 + $0x38] sm:$0xff]
  %v47 = vld [vmem:[#allocation2 + $0x40] sm:$0xff]
  %v48 = vld [vmem:[#allocation2 + $0x48] sm:$0xff]
  %v49 = vld [vmem:[#allocation2 + $0x50] sm:$0xff]
  %v50 = vld [vmem:[#allocation2 + $0x58] sm:$0xff]
  %v51 = vld [vmem:[#allocation2 + $0x60] sm:$0xff]
  %v52 = vld [vmem:[#allocation2 + $0x68] sm:$0xff]
  %v53 = vld [vmem:[#allocation2 + $0x70] sm:$0xff]
  %v54 = vld [vmem:[#allocation2 + $0x78] sm:$0xff]
  %v55 = vld [vmem:[%s0] sm:$0xf]
  %v56 = vld [vmem:[%s0 + $0x4] sm:$0xf]
  %v57 = vld [vmem:[%s0 + $0x8] sm:$0xf]
  %v58 = vld [vmem:[%s0 + $0xc] sm:$0xf]
  %v59 = vld [vmem:[%s0 + $0x10] sm:$0xf]
  %v60 = vld [vmem:[%s0 + $0x14] sm:$0xf]
  %v61 = vld [vmem:[%s0 + $0x18] sm:$0xf]
  %v62 = vld [vmem:[%s0 + $0x1c] sm:$0xf]
  %v63 = vld [vmem:[%s0 + $0x20] sm:$0xf]
  %v64 = vld [vmem:[%s0 + $0x24] sm:$0xf]
  %v65 = vld [vmem:[%s0 + $0x28] sm:$0xf]
  %v66 = vld [vmem:[%s0 + $0x2c] sm:$0xf]
  %v67 = vld [vmem:[%s0 + $0x30] sm:$0xf]
  %v68 = vld [vmem:[%s0 + $0x34] sm:$0xf]
  %v69 = vld [vmem:[%s0 + $0x38] sm:$0xf]
  %v70 = vld [vmem:[%s0 + $0x3c] sm:$0xf]
  %v71 = vld [vmem:[%s1] sm:$0xf]
  %v72 = vld [vmem:[%s1 + $0x4] sm:$0xf]
  %v73 = vld [vmem:[%s1 + $0x8] sm:$0xf]
  %v74 = vld [vmem:[%s1 + $0xc] sm:$0xf]
  %v75 = vld [vmem:[%s1 + $0x10] sm:$0xf]
  %v76 = vld [vmem:[%s1 + $0x14] sm:$0xf]
  %v77 = vld [vmem:[%s1 + $0x18] sm:$0xf]
  %v78 = vld [vmem:[%s1 + $0x1c] sm:$0xf]
  %v79 = vld [vmem:[%s1 + $0x20] sm:$0xf]
  %v96 = vunpack.c.l.b16 %v55
  %v97 = vunpack.c.l.b16 %v56
  %v98 = vunpack.c.l.b16 %v57
  %v99 = vunpack.c.l.b16 %v58
  %v100 = vunpack.c.l.b16 %v59
  %v101 = vunpack.c.l.b16 %v60
  %v102 = vunpack.c.l.b16 %v61
  %v103 = vunpack.c.l.b16 %v62
  %v104 = vunpack.c.l.b16 %v63
  %v105 = vunpack.c.l.b16 %v64
  %v106 = vunpack.c.l.b16 %v65
  %v107 = vunpack.c.l.b16 %v66
  %v108 = vunpack.c.l.b16 %v67
  %v109 = vunpack.c.l.b16 %v68
  %v110 = vunpack.c.l.b16 %v69
  %v111 = vunpack.c.l.b16 %v70
  %v112 = vpack.c.b16 %v97, %v96
  %v113 = vpack.c.b16 %v99, %v98
  %v114 = vpack.c.b16 %v101, %v100
  %v115 = vpack.c.b16 %v103, %v102
  %v116 = vpack.c.b16 %v105, %v104
  %v117 = vpack.c.b16 %v107, %v106
  %v118 = vpack.c.b16 %v109, %v108
  %v119 = vpack.c.b16 %v111, %v110
  %v129 = vunpack.c.l.b16 %v71
  %v130 = vunpack.c.l.b16 %v72
  %v131 = vunpack.c.l.b16 %v73
  %v132 = vunpack.c.l.b16 %v74
  %v133 = vunpack.c.l.b16 %v75
  %v134 = vunpack.c.l.b16 %v76
  %v135 = vunpack.c.l.b16 %v77
  %v136 = vunpack.c.l.b16 %v78
  %v137 = vunpack.c.l.b16 %v79
  %v138 = vpack.c.b16 %v130, %v129
  %v139 = vpack.c.b16 %v132, %v131
  %v140 = vpack.c.b16 %v134, %v133
  %v141 = vpack.c.b16 %v136, %v135
  %v142 = vpack.c.b16 %v137, %v137
  %vm147 = vcmask 588800
  %v149 = vsel %vm147, %v112, 0
  %v152 = vsel %vm147, %v113, 0
  %v155 = vsel %vm147, %v114, 0
  %v158 = vsel %vm147, %v115, 0
  %v161 = vsel %vm147, %v116, 0
  %v164 = vsel %vm147, %v117, 0
  %v167 = vsel %vm147, %v118, 0
  %v170 = vsel %vm147, %v119, 0
  %vm172 = vcmask 1043456
  %v174 = vsel %vm172, %v142, 0
  %176 = vmatprep.subr.bf16.mxu0 0
  %177 = vmatpush1.bf16.msra.mxu0 %v138
  %178 = vmatprep.subr.bf16.mxu0 0
  %179 = vmatpush1.bf16.msra.mxu0 %v139
  %180 = vmatprep.subr.bf16.mxu0 0
  %181 = vmatpush1.bf16.msra.mxu0 %v140
  %182 = vmatprep.subr.bf16.mxu0 0
  %183 = vmatpush1.bf16.msra.mxu0 %v141
  %184 = vmatprep.subr.bf16.mxu0 0
  %185 = vmatpush1.bf16.msra.mxu0 %v174
  %186 = vmatprep.subr.bf16.mxu0 0
  %187 = vmatpush1.bf16.msra.mxu0 0
  %188 = vmatprep.subr.bf16.mxu0 0
  %189 = vmatpush1.bf16.msra.mxu0 0
  %190 = vmatprep.subr.bf16.mxu0 0
  %191 = vmatpush1.bf16.msra.mxu0 0
  %192 = vmatprep.subr.bf16.mxu0 0
  %193 = vmatpush1.bf16.msra.mxu0 0
  %194 = vmatprep.subr.bf16.mxu0 0
  %195 = vmatpush1.bf16.msra.mxu0 0
  %196 = vmatprep.subr.bf16.mxu0 0
  %197 = vmatpush1.bf16.msra.mxu0 0
  %198 = vmatprep.subr.bf16.mxu0 0
  %199 = vmatpush1.bf16.msra.mxu0 0
  %200 = vmatprep.subr.bf16.mxu0 0
  %201 = vmatpush1.bf16.msra.mxu0 0
  %202 = vmatprep.subr.bf16.mxu0 0
  %203 = vmatpush1.bf16.msra.mxu0 0
  %204 = vmatprep.subr.bf16.mxu0 0
  %205 = vmatpush1.bf16.msra.mxu0 0
  %206 = vmatprep.subr.bf16.mxu0 0
  %207 = vmatpush1.bf16.msra.mxu0 0
  %208 = vmatprep.mubr.bf16.mxu0 0
  %209 = vmatmul.mubr.bf16.gmra.mrb[0].mxu0 %v149
  %v210 = vpop.f32.mrb[0].mxu0
  %v211 = vadd.f32 0.0, %v210
  %v212 = vpop.f32.mrb[0].mxu0
  %v213 = vpop.f32.mrb[0].mxu0
  %v214 = vadd.f32 0.0, %v213
  %v215 = vpop.f32.mrb[0].mxu0
  %216 = vmatprep.mubr.bf16.mxu0 0
  %217 = vmatmul.mubr.bf16.gmra.mrb[0].mxu0 %v152
  %v218 = vpop.f32.mrb[0].mxu0
  %v219 = vadd.f32 0.0, %v218
  %v220 = vpop.f32.mrb[0].mxu0
  %v221 = vpop.f32.mrb[0].mxu0
  %v222 = vadd.f32 0.0, %v221
  %v223 = vpop.f32.mrb[0].mxu0
  %224 = vmatprep.mubr.bf16.mxu0 0
  %225 = vmatmul.mubr.bf16.gmra.mrb[0].mxu0 %v155
  %v226 = vpop.f32.mrb[0].mxu0
  %v227 = vadd.f32 0.0, %v226
  %v228 = vpop.f32.mrb[0].mxu0
  %v229 = vpop.f32.mrb[0].mxu0
  %v230 = vadd.f32 0.0, %v229
  %v231 = vpop.f32.mrb[0].mxu0
  %232 = vmatprep.mubr.bf16.mxu0 0
  %233 = vmatmul.mubr.bf16.gmra.mrb[0].mxu0 %v158
  %v234 = vpop.f32.mrb[0].mxu0
  %v235 = vadd.f32 0.0, %v234
  %v236 = vpop.f32.mrb[0].mxu0
  %v237 = vpop.f32.mrb[0].mxu0
  %v238 = vadd.f32 0.0, %v237
  %v239 = vpop.f32.mrb[0].mxu0
  %240 = vmatprep.mubr.bf16.mxu0 0
  %241 = vmatmul.mubr.bf16.gmra.mrb[0].mxu0 %v161
  %v242 = vpop.f32.mrb[0].mxu0
  %v243 = vadd.f32 0.0, %v242
  %v244 = vpop.f32.mrb[0].mxu0
  %v245 = vpop.f32.mrb[0].mxu0
  %v246 = vadd.f32 0.0, %v245
  %v247 = vpop.f32.mrb[0].mxu0
  %248 = vmatprep.mubr.bf16.mxu0 0
  %249 = vmatmul.mubr.bf16.gmra.mrb[0].mxu0 %v164
  %v250 = vpop.f32.mrb[0].mxu0
  %v251 = vadd.f32 0.0, %v250
  %v252 = vpop.f32.mrb[0].mxu0
  %v253 = vpop.f32.mrb[0].mxu0
  %v254 = vadd.f32 0.0, %v253
  %v255 = vpop.f32.mrb[0].mxu0
  %256 = vmatprep.mubr.bf16.mxu0 0
  %257 = vmatmul.mubr.bf16.gmra.mrb[0].mxu0 %v167
  %v258 = vpop.f32.mrb[0].mxu0
  %v259 = vadd.f32 0.0, %v258
  %v260 = vpop.f32.mrb[0].mxu0
  %v261 = vpop.f32.mrb[0].mxu0
  %v262 = vadd.f32 0.0, %v261
  %v263 = vpop.f32.mrb[0].mxu0
  %264 = vmatprep.mubr.bf16.mxu0 0
  %265 = vmatmul.mubr.bf16.gmra.mrb[0].mxu0 %v170
  %v266 = vpop.f32.mrb[0].mxu0
  %v267 = vadd.f32 0.0, %v266
  %v268 = vpop.f32.mrb[0].mxu0
  %v269 = vpop.f32.mrb[0].mxu0
  %v270 = vadd.f32 0.0, %v269
  %v271 = vpop.f32.mrb[0].mxu0
  %272 = vdwg.mxu0
  %v273 = vadd.f32 %v39, %v211
  %v274 = vadd.f32 %v40, %v214
  %v275 = vadd.f32 %v41, %v219
  %v276 = vadd.f32 %v42, %v222
  %v277 = vadd.f32 %v43, %v227
  %v278 = vadd.f32 %v44, %v230
  %v279 = vadd.f32 %v45, %v235
  %v280 = vadd.f32 %v46, %v238
  %v281 = vadd.f32 %v47, %v243
  %v282 = vadd.f32 %v48, %v246
  %v283 = vadd.f32 %v49, %v251
  %v284 = vadd.f32 %v50, %v254
  %v285 = vadd.f32 %v51, %v259
  %v286 = vadd.f32 %v52, %v262
  %v287 = vadd.f32 %v53, %v267
  %v288 = vadd.f32 %v54, %v270
  %vm289 = vcmask 64512
  %290 = vst.msk [vmem:[#allocation2] sm:$0xff] %vm289, %v273
  %291 = vst.msk [vmem:[#allocation2 + $0x8] sm:$0xff] %vm289, %v274
  %292 = vst.msk [vmem:[#allocation2 + $0x10] sm:$0xff] %vm289, %v275
  %293 = vst.msk [vmem:[#allocation2 + $0x18] sm:$0xff] %vm289, %v276
  %294 = vst.msk [vmem:[#allocation2 + $0x20] sm:$0xff] %vm289, %v277
  %295 = vst.msk [vmem:[#allocation2 + $0x28] sm:$0xff] %vm289, %v278
  %296 = vst.msk [vmem:[#allocation2 + $0x30] sm:$0xff] %vm289, %v279
  %297 = vst.msk [vmem:[#allocation2 + $0x38] sm:$0xff] %vm289, %v280
  %298 = vst.msk [vmem:[#allocation2 + $0x40] sm:$0xff] %vm289, %v281
  %299 = vst.msk [vmem:[#allocation2 + $0x48] sm:$0xff] %vm289, %v282
  %300 = vst.msk [vmem:[#allocation2 + $0x50] sm:$0xff] %vm289, %v283
  %301 = vst.msk [vmem:[#allocation2 + $0x58] sm:$0xff] %vm289, %v284
  %302 = vst.msk [vmem:[#allocation2 + $0x60] sm:$0xff] %vm289, %v285
  %303 = vst.msk [vmem:[#allocation2 + $0x68] sm:$0xff] %vm289, %v286
  %304 = vst.msk [vmem:[#allocation2 + $0x70] sm:$0xff] %vm289, %v287
  %305 = vst.msk [vmem:[#allocation2 + $0x78] sm:$0xff] %vm289, %v288
  // Predicated region
  $region22: #{forward.13} parent=0 // pred_check
    %p306 = pneg %p18
  $region23: #{forward.13} parent=0 // pred_check_branch
    %308 = sbr.rel (%p306) target = $region25
  $region24: #{forward.13} parent=0 // pred_region
    %v309 = vld [vmem:[#allocation2] sm:$0xff]
    %v310 = vld [vmem:[#allocation2 + $0x8] sm:$0xff]
    %v311 = vld [vmem:[#allocation2 + $0x10] sm:$0xff]
    %v312 = vld [vmem:[#allocation2 + $0x18] sm:$0xff]
    %v313 = vld [vmem:[#allocation2 + $0x20] sm:$0xff]
    %v314 = vld [vmem:[#allocation2 + $0x28] sm:$0xff]
    %v315 = vld [vmem:[#allocation2 + $0x30] sm:$0xff]
    %v316 = vld [vmem:[#allocation2 + $0x38] sm:$0xff]
    %v317 = vld [vmem:[#allocation2 + $0x40] sm:$0xff]
    %v318 = vld [vmem:[#allocation2 + $0x48] sm:$0xff]
    %v319 = vld [vmem:[#allocation2 + $0x50] sm:$0xff]
    %v320 = vld [vmem:[#allocation2 + $0x58] sm:$0xff]
    %v321 = vld [vmem:[#allocation2 + $0x60] sm:$0xff]
    %v322 = vld [vmem:[#allocation2 + $0x68] sm:$0xff]
    %v323 = vld [vmem:[#allocation2 + $0x70] sm:$0xff]
    %v324 = vld [vmem:[#allocation2 + $0x78] sm:$0xff]
    %v325 = vld [vmem:[%s2] sm:$0x1]
    %v327 = vlaneseq
    %v328 = vshrl.u32 %v327, 7
    %v329 = vsub.s32 0, %v328
    %v330 = vrot.slane %v325, %v329
    %v332 = vmul.f32 %v309, %v330
    %v333 = vmul.f32 %v310, %v330
    %v334 = vmul.f32 %v311, %v330
    %v335 = vmul.f32 %v312, %v330
    %v336 = vmul.f32 %v313, %v330
    %v337 = vmul.f32 %v314, %v330
    %v338 = vmul.f32 %v315, %v330
    %v339 = vmul.f32 %v316, %v330
    %v340 = vmul.f32 %v317, %v330
    %v341 = vmul.f32 %v318, %v330
    %v342 = vmul.f32 %v319, %v330
    %v343 = vmul.f32 %v320, %v330
    %v344 = vmul.f32 %v321, %v330
    %v345 = vmul.f32 %v322, %v330
    %v346 = vmul.f32 %v323, %v330
    %v347 = vmul.f32 %v324, %v330
    %v348 = vld [vmem:[%s3] sm:$0x1]
    %v350 = vlaneseq
    %v351 = vshrl.u32 %v350, 7
    %v352 = vsub.s32 0, %v351
    %v353 = vrot.slane %v348, %v352
    %v355 = vadd.f32 %v332, %v353
    %v356 = vadd.f32 %v333, %v353
    %v357 = vadd.f32 %v334, %v353
    %v358 = vadd.f32 %v335, %v353
    %v359 = vadd.f32 %v336, %v353
    %v360 = vadd.f32 %v337, %v353
    %v361 = vadd.f32 %v338, %v353
    %v362 = vadd.f32 %v339, %v353
    %v363 = vadd.f32 %v340, %v353
    %v364 = vadd.f32 %v341, %v353
    %v365 = vadd.f32 %v342, %v353
    %v366 = vadd.f32 %v343, %v353
    %v367 = vadd.f32 %v344, %v353
    %v368 = vadd.f32 %v345, %v353
    %v369 = vadd.f32 %v346, %v353
    %v370 = vadd.f32 %v347, %v353
    %v371 = vmax.f32 %v355, 0.0
    %v372 = vmax.f32 %v356, 0.0
    %v373 = vmax.f32 %v357, 0.0
    %v374 = vmax.f32 %v358, 0.0
    %v375 = vmax.f32 %v359, 0.0
    %v376 = vmax.f32 %v360, 0.0
    %v377 = vmax.f32 %v361, 0.0
    %v378 = vmax.f32 %v362, 0.0
    %v379 = vmax.f32 %v363, 0.0
    %v380 = vmax.f32 %v364, 0.0
    %v381 = vmax.f32 %v365, 0.0
    %v382 = vmax.f32 %v366, 0.0
    %v383 = vmax.f32 %v367, 0.0
    %v384 = vmax.f32 %v368, 0.0
    %v385 = vmax.f32 %v369, 0.0
    %v386 = vmax.f32 %v370, 0.0
    %v387 = vpack.c.bf16 %v372, %v371
    %v388 = vpack.c.bf16 %v374, %v373
    %v389 = vpack.c.bf16 %v376, %v375
    %v390 = vpack.c.bf16 %v378, %v377
    %v391 = vpack.c.bf16 %v380, %v379
    %v392 = vpack.c.bf16 %v382, %v381
    %v393 = vpack.c.bf16 %v384, %v383
    %v394 = vpack.c.bf16 %v386, %v385
    %v403 = vunpack.c.l.b16 %v387
    %v404 = vunpack.c.h.b16 %v387
    %v405 = vunpack.c.l.b16 %v388
    %v406 = vunpack.c.h.b16 %v388
    %v407 = vunpack.c.l.b16 %v389
    %v408 = vunpack.c.h.b16 %v389
    %v409 = vunpack.c.l.b16 %v390
    %v410 = vunpack.c.h.b16 %v390
    %v411 = vunpack.c.l.b16 %v391
    %v412 = vunpack.c.h.b16 %v391
    %v413 = vunpack.c.l.b16 %v392
    %v414 = vunpack.c.h.b16 %v392
    %v415 = vunpack.c.l.b16 %v393
    %v416 = vunpack.c.h.b16 %v393
    %v417 = vunpack.c.l.b16 %v394
    %v418 = vunpack.c.h.b16 %v394
    %v419 = vpack.c.b16 %v403, %v403
    %v420 = vpack.c.b16 %v404, %v404
    %v421 = vpack.c.b16 %v405, %v405
    %v422 = vpack.c.b16 %v406, %v406
    %v423 = vpack.c.b16 %v407, %v407
    %v424 = vpack.c.b16 %v408, %v408
    %v425 = vpack.c.b16 %v409, %v409
    %v426 = vpack.c.b16 %v410, %v410
    %v427 = vpack.c.b16 %v411, %v411
    %v428 = vpack.c.b16 %v412, %v412
    %v429 = vpack.c.b16 %v413, %v413
    %v430 = vpack.c.b16 %v414, %v414
    %v431 = vpack.c.b16 %v415, %v415
    %v432 = vpack.c.b16 %v416, %v416
    %v433 = vpack.c.b16 %v417, %v417
    %v434 = vpack.c.b16 %v418, %v418
    %vm451 = vcmask 60416
    %452 = vst.msk [vmem:[%s4] sm:$0xf] %vm451, %v419
    %453 = vst.msk [vmem:[%s4 + $0x4] sm:$0xf] %vm451, %v420
    %454 = vst.msk [vmem:[%s4 + $0x8] sm:$0xf] %vm451, %v421
    %455 = vst.msk [vmem:[%s4 + $0xc] sm:$0xf] %vm451, %v422
    %456 = vst.msk [vmem:[%s4 + $0x10] sm:$0xf] %vm451, %v423
    %457 = vst.msk [vmem:[%s4 + $0x14] sm:$0xf] %vm451, %v424
    %458 = vst.msk [vmem:[%s4 + $0x18] sm:$0xf] %vm451, %v425
    %459 = vst.msk [vmem:[%s4 + $0x1c] sm:$0xf] %vm451, %v426
    %460 = vst.msk [vmem:[%s4 + $0x20] sm:$0xf] %vm451, %v427
    %461 = vst.msk [vmem:[%s4 + $0x24] sm:$0xf] %vm451, %v428
    %462 = vst.msk [vmem:[%s4 + $0x28] sm:$0xf] %vm451, %v429
    %463 = vst.msk [vmem:[%s4 + $0x2c] sm:$0xf] %vm451, %v430
    %464 = vst.msk [vmem:[%s4 + $0x30] sm:$0xf] %vm451, %v431
    %465 = vst.msk [vmem:[%s4 + $0x34] sm:$0xf] %vm451, %v432
    %466 = vst.msk [vmem:[%s4 + $0x38] sm:$0xf] %vm451, %v433
    %467 = vst.msk [vmem:[%s4 + $0x3c] sm:$0xf] %vm451, %v434
  $region25: #{forward.13} parent=0 // pred_fallthru
    _
  // Predicated region
  $region26: #{forward.13} parent=0 // pred_check
    _
  $region27: #{forward.13} parent=0 // pred_check_branch
    %469 = sbr.rel (0) target = $region29
  $region28: #{forward.13} parent=0 // pred_region
    _
  $region29: #{forward.13} parent=0 // pred_fallthru
    _
  // Predicated region
  $region30: #{forward.13} parent=0 // pred_check
    _
  $region31: #{forward.13} parent=0 // pred_check_branch
    %471 = sbr.rel (0) target = $region33
  $region32: #{forward.13} parent=0 // pred_region
    _
  $region33: #{forward.13} parent=0 // pred_fallthru
    _

// kernel: forward.14
$region0: #{forward.14}
  #allocation0 [shape = 'u32[]', space=smem, size = 0x4, offset = 0x4, fixed_abs, tag = 'smem constant byte address 0x4 - core index']
  #allocation1 [shape = 'u32[144,128]{1,0:T(1,128)}', space=vmem, size = 0x12000, scoped, tag = 'internal scratch']
  #allocation2 [shape = 'f32[32,16]{1,0:T(8,128)}', space=vmem, size = 0x4000, scoped, tag = 'scratch operand']
  %s0 = inlined_call_operand.vmem [shape: bf16[32,72], index: 0, kind: input, shape index: {}]
  %s1 = inlined_call_operand.vmem [shape: bf16[72,16], index: 1, kind: input, shape index: {}]
  %s2 = inlined_call_operand.vmem [shape: f32[1,16], index: 2, kind: input, shape index: {}]
  %s3 = inlined_call_operand.vmem [shape: f32[1,16], index: 3, kind: input, shape index: {}]
  %s4 = inlined_call_operand.vmem [shape: bf16[32,16], index: 4, kind: output, shape index: {}]
  %s5 = sld [smem:[#allocation0]]
  $region34: #{forward.14} parent=0
    _
  %s7 = ssub.s32 1, %s5
  %s8 = scalar_select 0, %s7, %s5
  // Predicated region
  $region2: #{forward.14} parent=0 // pred_check
    _
  $region3: #{forward.14} parent=0 // pred_check_branch
    %10 = sbr.rel (0) target = $region5
  $region4: #{forward.14} parent=0 // pred_region
    _
  $region5: #{forward.14} parent=0 // pred_fallthru
    _
  // Predicated region
  $region6: #{forward.14} parent=0 // pred_check
    _
  $region7: #{forward.14} parent=0 // pred_check_branch
    %12 = sbr.rel (0) target = $region9
  $region8: #{forward.14} parent=0 // pred_region
    _
  $region9: #{forward.14} parent=0 // pred_fallthru
    _
  // Predicated region
  $region10: #{forward.14} parent=0 // pred_check
    _
  $region11: #{forward.14} parent=0 // pred_check_branch
    %14 = sbr.rel (0) target = $region13
  $region12: #{forward.14} parent=0 // pred_region
    _
  $region13: #{forward.14} parent=0 // pred_fallthru
    _
  // Predicated region
  $region14: #{forward.14} parent=0 // pred_check
    _
  $region15: #{forward.14} parent=0 // pred_check_branch
    %16 = sbr.rel (0) target = $region17
  $region16: #{forward.14} parent=0 // pred_region
    _
  $region17: #{forward.14} parent=0 // pred_fallthru
    _
  %p18 = scmp.eq.s32.totalorder 0, 0
  // Predicated region
  $region18: #{forward.14} parent=0 // pred_check
    %p19 = pneg %p18
  $region19: #{forward.14} parent=0 // pred_check_branch
    %21 = sbr.rel (%p19) target = $region21
  $region20: #{forward.14} parent=0 // pred_region
    %vm22 = vcmask 130048
    %23 = vst.msk [vmem:[#allocation2] sm:$0xff] %vm22, 0.0
    %24 = vst.msk [vmem:[#allocation2 + $0x8] sm:$0xff] %vm22, 0.0
    %25 = vst.msk [vmem:[#allocation2 + $0x10] sm:$0xff] %vm22, 0.0
    %26 = vst.msk [vmem:[#allocation2 + $0x18] sm:$0xff] %vm22, 0.0
  $region21: #{forward.14} parent=0 // pred_fallthru
    _
  %v27 = vld [vmem:[#allocation2] sm:$0xff]
  %v28 = vld [vmem:[#allocation2 + $0x8] sm:$0xff]
  %v29 = vld [vmem:[#allocation2 + $0x10] sm:$0xff]
  %v30 = vld [vmem:[#allocation2 + $0x18] sm:$0xff]
  %v31 = vld [vmem:[%s0] sm:$0xf]
  %v32 = vld [vmem:[%s0 + $0x4] sm:$0xf]
  %v33 = vld [vmem:[%s0 + $0x8] sm:$0xf]
  %v34 = vld [vmem:[%s0 + $0xc] sm:$0xf]
  %v35 = vld [vmem:[%s1] sm:$0xf]
  %v36 = vld [vmem:[%s1 + $0x4] sm:$0xf]
  %v37 = vld [vmem:[%s1 + $0x8] sm:$0xf]
  %v38 = vld [vmem:[%s1 + $0xc] sm:$0xf]
  %v39 = vld [vmem:[%s1 + $0x10] sm:$0xf]
  %v40 = vld [vmem:[%s1 + $0x14] sm:$0xf]
  %v41 = vld [vmem:[%s1 + $0x18] sm:$0xf]
  %v42 = vld [vmem:[%s1 + $0x1c] sm:$0xf]
  %v43 = vld [vmem:[%s1 + $0x20] sm:$0xf]
  %v48 = vunpack.c.l.b16 %v31
  %v49 = vunpack.c.l.b16 %v32
  %v50 = vunpack.c.l.b16 %v33
  %v51 = vunpack.c.l.b16 %v34
  %v52 = vpack.c.b16 %v49, %v48
  %v53 = vpack.c.b16 %v51, %v50
  %v63 = vunpack.c.l.b16 %v35
  %v64 = vunpack.c.l.b16 %v36
  %v65 = vunpack.c.l.b16 %v37
  %v66 = vunpack.c.l.b16 %v38
  %v67 = vunpack.c.l.b16 %v39
  %v68 = vunpack.c.l.b16 %v40
  %v69 = vunpack.c.l.b16 %v41
  %v70 = vunpack.c.l.b16 %v42
  %v71 = vunpack.c.l.b16 %v43
  %v72 = vpack.c.b16 %v64, %v63
  %v73 = vpack.c.b16 %v66, %v65
  %v74 = vpack.c.b16 %v68, %v67
  %v75 = vpack.c.b16 %v70, %v69
  %v76 = vpack.c.b16 %v71, %v71
  %vm81 = vcmask 588800
  %v83 = vsel %vm81, %v52, 0
  %v86 = vsel %vm81, %v53, 0
  %vm88 = vcmask 1043456
  %v90 = vsel %vm88, %v76, 0
  %92 = vmatprep.subr.bf16.mxu0 0
  %93 = vmatpush1.bf16.msra.mxu0 %v72
  %94 = vmatprep.subr.bf16.mxu0 0
  %95 = vmatpush1.bf16.msra.mxu0 %v73
  %96 = vmatprep.subr.bf16.mxu0 0
  %97 = vmatpush1.bf16.msra.mxu0 %v74
  %98 = vmatprep.subr.bf16.mxu0 0
  %99 = vmatpush1.bf16.msra.mxu0 %v75
  %100 = vmatprep.subr.bf16.mxu0 0
  %101 = vmatpush1.bf16.msra.mxu0 %v90
  %102 = vmatprep.subr.bf16.mxu0 0
  %103 = vmatpush1.bf16.msra.mxu0 0
  %104 = vmatprep.subr.bf16.mxu0 0
  %105 = vmatpush1.bf16.msra.mxu0 0
  %106 = vmatprep.subr.bf16.mxu0 0
  %107 = vmatpush1.bf16.msra.mxu0 0
  %108 = vmatprep.subr.bf16.mxu0 0
  %109 = vmatpush1.bf16.msra.mxu0 0
  %110 = vmatprep.subr.bf16.mxu0 0
  %111 = vmatpush1.bf16.msra.mxu0 0
  %112 = vmatprep.subr.bf16.mxu0 0
  %113 = vmatpush1.bf16.msra.mxu0 0
  %114 = vmatprep.subr.bf16.mxu0 0
  %115 = vmatpush1.bf16.msra.mxu0 0
  %116 = vmatprep.subr.bf16.mxu0 0
  %117 = vmatpush1.bf16.msra.mxu0 0
  %118 = vmatprep.subr.bf16.mxu0 0
  %119 = vmatpush1.bf16.msra.mxu0 0
  %120 = vmatprep.subr.bf16.mxu0 0
  %121 = vmatpush1.bf16.msra.mxu0 0
  %122 = vmatprep.subr.bf16.mxu0 0
  %123 = vmatpush1.bf16.msra.mxu0 0
  %124 = vmatprep.mubr.bf16.mxu0 0
  %125 = vmatmul.mubr.bf16.gmra.mrb[0].mxu0 %v83
  %v126 = vpop.f32.mrb[0].mxu0
  %v127 = vadd.f32 0.0, %v126
  %v128 = vpop.f32.mrb[0].mxu0
  %v129 = vpop.f32.mrb[0].mxu0
  %v130 = vadd.f32 0.0, %v129
  %v131 = vpop.f32.mrb[0].mxu0
  %132 = vmatprep.mubr.bf16.mxu0 0
  %133 = vmatmul.mubr.bf16.gmra.mrb[0].mxu0 %v86
  %v134 = vpop.f32.mrb[0].mxu0
  %v135 = vadd.f32 0.0, %v134
  %v136 = vpop.f32.mrb[0].mxu0
  %v137 = vpop.f32.mrb[0].mxu0
  %v138 = vadd.f32 0.0, %v137
  %v139 = vpop.f32.mrb[0].mxu0
  %140 = vdwg.mxu0
  %v141 = vadd.f32 %v27, %v127
  %v142 = vadd.f32 %v28, %v130
  %v143 = vadd.f32 %v29, %v135
  %v144 = vadd.f32 %v30, %v138
  %vm145 = vcmask 130048
  %146 = vst.msk [vmem:[#allocation2] sm:$0xff] %vm145, %v141
  %147 = vst.msk [vmem:[#allocation2 + $0x8] sm:$0xff] %vm145, %v142
  %148 = vst.msk [vmem:[#allocation2 + $0x10] sm:$0xff] %vm145, %v143
  %149 = vst.msk [vmem:[#allocation2 + $0x18] sm:$0xff] %vm145, %v144
  // Predicated region
  $region22: #{forward.14} parent=0 // pred_check
    %p150 = pneg %p18
  $region23: #{forward.14} parent=0 // pred_check_branch
    %152 = sbr.rel (%p150) target = $region25
  $region24: #{forward.14} parent=0 // pred_region
    %v153 = vld [vmem:[#allocation2] sm:$0xff]
    %v154 = vld [vmem:[#allocation2 + $0x8] sm:$0xff]
    %v155 = vld [vmem:[#allocation2 + $0x10] sm:$0xff]
    %v156 = vld [vmem:[#allocation2 + $0x18] sm:$0xff]
    %v157 = vld [vmem:[%s2] sm:$0x1]
    %v159 = vlaneseq
    %v160 = vshrl.u32 %v159, 7
    %v161 = vsub.s32 0, %v160
    %v162 = vrot.slane %v157, %v161
    %v164 = vmul.f32 %v153, %v162
    %v165 = vmul.f32 %v154, %v162
    %v166 = vmul.f32 %v155, %v162
    %v167 = vmul.f32 %v156, %v162
    %v168 = vld [vmem:[%s3] sm:$0x1]
    %v170 = vlaneseq
    %v171 = vshrl.u32 %v170, 7
    %v172 = vsub.s32 0, %v171
    %v173 = vrot.slane %v168, %v172
    %v175 = vadd.f32 %v164, %v173
    %v176 = vadd.f32 %v165, %v173
    %v177 = vadd.f32 %v166, %v173
    %v178 = vadd.f32 %v167, %v173
    %v179 = vmax.f32 %v175, 0.0
    %v180 = vmax.f32 %v176, 0.0
    %v181 = vmax.f32 %v177, 0.0
    %v182 = vmax.f32 %v178, 0.0
    %v183 = vpack.c.bf16 %v180, %v179
    %v184 = vpack.c.bf16 %v182, %v181
    %v187 = vunpack.c.l.b16 %v183
    %v188 = vunpack.c.h.b16 %v183
    %v189 = vunpack.c.l.b16 %v184
    %v190 = vunpack.c.h.b16 %v184
    %v191 = vpack.c.b16 %v187, %v187
    %v192 = vpack.c.b16 %v188, %v188
    %v193 = vpack.c.b16 %v189, %v189
    %v194 = vpack.c.b16 %v190, %v190
    %vm199 = vcmask 125952
    %200 = vst.msk [vmem:[%s4] sm:$0xf] %vm199, %v191
    %201 = vst.msk [vmem:[%s4 + $0x4] sm:$0xf] %vm199, %v192
    %202 = vst.msk [vmem:[%s4 + $0x8] sm:$0xf] %vm199, %v193
    %203 = vst.msk [vmem:[%s4 + $0xc] sm:$0xf] %vm199, %v194
  $region25: #{forward.14} parent=0 // pred_fallthru
    _
  // Predicated region
  $region26: #{forward.14} parent=0 // pred_check
    _
  $region27: #{forward.14} parent=0 // pred_check_branch
    %205 = sbr.rel (0) target = $region29
  $region28: #{forward.14} parent=0 // pred_region
    _
  $region29: #{forward.14} parent=0 // pred_fallthru
    _
  // Predicated region
  $region30: #{forward.14} parent=0 // pred_check
    _
  $region31: #{forward.14} parent=0 // pred_check_branch
    %207 = sbr.rel (0) target = $region33
  $region32: #{forward.14} parent=0 // pred_region
    _
  $region33: #{forward.14} parent=0 // pred_fallthru
    _

// kernel: forward.17
$region0: #{forward.17}
  #allocation0 [shape = 'u32[]', space=smem, size = 0x4, offset = 0x4, fixed_abs, tag = 'smem constant byte address 0x4 - core index']
  #allocation1 [shape = 'u32[144,128]{1,0:T(1,128)}', space=vmem, size = 0x12000, scoped, tag = 'internal scratch']
  #allocation2 [shape = 'f32[32,16]{1,0:T(8,128)}', space=vmem, size = 0x4000, scoped, tag = 'scratch operand']
  %s0 = inlined_call_operand.vmem [shape: bf16[32,144], index: 0, kind: input, shape index: {}]
  %s1 = inlined_call_operand.vmem [shape: bf16[144,16], index: 1, kind: input, shape index: {}]
  %s2 = inlined_call_operand.vmem [shape: f32[1,16], index: 2, kind: input, shape index: {}]
  %s3 = inlined_call_operand.vmem [shape: f32[1,16], index: 3, kind: input, shape index: {}]
  %s4 = inlined_call_operand.vmem [shape: bf16[32,16], index: 4, kind: output, shape index: {}]
  %s5 = sld [smem:[#allocation0]]
  $region34: #{forward.17} parent=0
    _
  %s7 = ssub.s32 1, %s5
  %s8 = scalar_select 0, %s7, %s5
  // Predicated region
  $region2: #{forward.17} parent=0 // pred_check
    _
  $region3: #{forward.17} parent=0 // pred_check_branch
    %10 = sbr.rel (0) target = $region5
  $region4: #{forward.17} parent=0 // pred_region
    _
  $region5: #{forward.17} parent=0 // pred_fallthru
    _
  // Predicated region
  $region6: #{forward.17} parent=0 // pred_check
    _
  $region7: #{forward.17} parent=0 // pred_check_branch
    %12 = sbr.rel (0) target = $region9
  $region8: #{forward.17} parent=0 // pred_region
    _
  $region9: #{forward.17} parent=0 // pred_fallthru
    _
  // Predicated region
  $region10: #{forward.17} parent=0 // pred_check
    _
  $region11: #{forward.17} parent=0 // pred_check_branch
    %14 = sbr.rel (0) target = $region13
  $region12: #{forward.17} parent=0 // pred_region
    _
  $region13: #{forward.17} parent=0 // pred_fallthru
    _
  // Predicated region
  $region14: #{forward.17} parent=0 // pred_check
    _
  $region15: #{forward.17} parent=0 // pred_check_branch
    %16 = sbr.rel (0) target = $region17
  $region16: #{forward.17} parent=0 // pred_region
    _
  $region17: #{forward.17} parent=0 // pred_fallthru
    _
  %p18 = scmp.eq.s32.totalorder 0, 0
  // Predicated region
  $region18: #{forward.17} parent=0 // pred_check
    %p19 = pneg %p18
  $region19: #{forward.17} parent=0 // pred_check_branch
    %21 = sbr.rel (%p19) target = $region21
  $region20: #{forward.17} parent=0 // pred_region
    %vm22 = vcmask 130048
    %23 = vst.msk [vmem:[#allocation2] sm:$0xff] %vm22, 0.0
    %24 = vst.msk [vmem:[#allocation2 + $0x8] sm:$0xff] %vm22, 0.0
    %25 = vst.msk [vmem:[#allocation2 + $0x10] sm:$0xff] %vm22, 0.0
    %26 = vst.msk [vmem:[#allocation2 + $0x18] sm:$0xff] %vm22, 0.0
  $region21: #{forward.17} parent=0 // pred_fallthru
    _
  %v27 = vld [vmem:[#allocation2] sm:$0xff]
  %v28 = vld [vmem:[#allocation2 + $0x8] sm:$0xff]
  %v29 = vld [vmem:[#allocation2 + $0x10] sm:$0xff]
  %v30 = vld [vmem:[#allocation2 + $0x18] sm:$0xff]
  %v31 = vld [vmem:[%s0] sm:$0xff]
  %v32 = vld [vmem:[%s0 + $0x8] sm:$0xff]
  %v33 = vld [vmem:[%s0 + $0x10] sm:$0xff]
  %v34 = vld [vmem:[%s0 + $0x18] sm:$0xff]
  %v35 = vld [vmem:[%s1] sm:$0xf]
  %v36 = vld [vmem:[%s1 + $0x4] sm:$0xf]
  %v37 = vld [vmem:[%s1 + $0x8] sm:$0xf]
  %v38 = vld [vmem:[%s1 + $0xc] sm:$0xf]
  %v39 = vld [vmem:[%s1 + $0x10] sm:$0xf]
  %v40 = vld [vmem:[%s1 + $0x14] sm:$0xf]
  %v41 = vld [vmem:[%s1 + $0x18] sm:$0xf]
  %v42 = vld [vmem:[%s1 + $0x1c] sm:$0xf]
  %v43 = vld [vmem:[%s1 + $0x20] sm:$0xf]
  %v44 = vld [vmem:[%s1 + $0x24] sm:$0xf]
  %v45 = vld [vmem:[%s1 + $0x28] sm:$0xf]
  %v46 = vld [vmem:[%s1 + $0x2c] sm:$0xf]
  %v47 = vld [vmem:[%s1 + $0x30] sm:$0xf]
  %v48 = vld [vmem:[%s1 + $0x34] sm:$0xf]
  %v49 = vld [vmem:[%s1 + $0x38] sm:$0xf]
  %v50 = vld [vmem:[%s1 + $0x3c] sm:$0xf]
  %v51 = vld [vmem:[%s1 + $0x40] sm:$0xf]
  %v52 = vld [vmem:[%s1 + $0x44] sm:$0xf]
  %v57 = vunpack.c.l.b16 %v31
  %v58 = vunpack.c.h.b16 %v31
  %v59 = vunpack.c.l.b16 %v32
  %v60 = vunpack.c.h.b16 %v32
  %v61 = vunpack.c.l.b16 %v33
  %v62 = vunpack.c.h.b16 %v33
  %v63 = vunpack.c.l.b16 %v34
  %v64 = vunpack.c.h.b16 %v34
  %v65 = vpack.c.b16 %v59, %v57
  %v66 = vpack.c.b16 %v60, %v58
  %v67 = vpack.c.b16 %v63, %v61
  %v68 = vpack.c.b16 %v64, %v62
  %v89 = vunpack.c.l.b16 %v35
  %v90 = vunpack.c.l.b16 %v36
  %v91 = vunpack.c.l.b16 %v37
  %v92 = vunpack.c.l.b16 %v38
  %v93 = vunpack.c.l.b16 %v39
  %v94 = vunpack.c.l.b16 %v40
  %v95 = vunpack.c.l.b16 %v41
  %v96 = vunpack.c.l.b16 %v42
  %v97 = vunpack.c.l.b16 %v43
  %v98 = vunpack.c.l.b16 %v44
  %v99 = vunpack.c.l.b16 %v45
  %v100 = vunpack.c.l.b16 %v46
  %v101 = vunpack.c.l.b16 %v47
  %v102 = vunpack.c.l.b16 %v48
  %v103 = vunpack.c.l.b16 %v49
  %v104 = vunpack.c.l.b16 %v50
  %v105 = vunpack.c.l.b16 %v51
  %v106 = vunpack.c.l.b16 %v52
  %v107 = vpack.c.b16 %v90, %v89
  %v108 = vpack.c.b16 %v92, %v91
  %v109 = vpack.c.b16 %v94, %v93
  %v110 = vpack.c.b16 %v96, %v95
  %v111 = vpack.c.b16 %v98, %v97
  %v112 = vpack.c.b16 %v100, %v99
  %v113 = vpack.c.b16 %v102, %v101
  %v114 = vpack.c.b16 %v104, %v103
  %v115 = vpack.c.b16 %v106, %v105
  %vm125 = vcmask 130048
  %v127 = vsel %vm125, %v66, 0
  %v130 = vsel %vm125, %v68, 0
  %132 = vmatprep.subr.bf16.mxu0 0
  %133 = vmatpush1.bf16.msra.mxu0 %v107
  %134 = vmatprep.subr.bf16.mxu0 0
  %135 = vmatpush1.bf16.msra.mxu0 %v108
  %136 = vmatprep.subr.bf16.mxu0 0
  %137 = vmatpush1.bf16.msra.mxu0 %v109
  %138 = vmatprep.subr.bf16.mxu0 0
  %139 = vmatpush1.bf16.msra.mxu0 %v110
  %140 = vmatprep.subr.bf16.mxu0 0
  %141 = vmatpush1.bf16.msra.mxu0 %v111
  %142 = vmatprep.subr.bf16.mxu0 0
  %143 = vmatpush1.bf16.msra.mxu0 %v112
  %144 = vmatprep.subr.bf16.mxu0 0
  %145 = vmatpush1.bf16.msra.mxu0 %v113
  %146 = vmatprep.subr.bf16.mxu0 0
  %147 = vmatpush1.bf16.msra.mxu0 %v114
  %148 = vmatprep.subr.bf16.mxu0 0
  %149 = vmatpush1.bf16.msra.mxu0 %v115
  %150 = vmatprep.subr.bf16.mxu0 0
  %151 = vmatpush1.bf16.msra.mxu0 0
  %152 = vmatprep.subr.bf16.mxu0 0
  %153 = vmatpush1.bf16.msra.mxu0 0
  %154 = vmatprep.subr.bf16.mxu0 0
  %155 = vmatpush1.bf16.msra.mxu0 0
  %156 = vmatprep.subr.bf16.mxu0 0
  %157 = vmatpush1.bf16.msra.mxu0 0
  %158 = vmatprep.subr.bf16.mxu0 0
  %159 = vmatpush1.bf16.msra.mxu0 0
  %160 = vmatprep.subr.bf16.mxu0 0
  %161 = vmatpush1.bf16.msra.mxu0 0
  %162 = vmatprep.subr.bf16.mxu0 0
  %163 = vmatpush1.bf16.msra.mxu0 0
  %164 = vmatprep.mubr.bf16.mxu0 %v127
  %165 = vmatmul.mubr.bf16.gmra.mrb[0].mxu0 %v65
  %v166 = vpop.f32.mrb[0].mxu0
  %v167 = vadd.f32 0.0, %v166
  %v168 = vpop.f32.mrb[0].mxu0
  %v169 = vpop.f32.mrb[0].mxu0
  %v170 = vadd.f32 0.0, %v169
  %v171 = vpop.f32.mrb[0].mxu0
  %172 = vmatprep.mubr.bf16.mxu0 %v130
  %173 = vmatmul.mubr.bf16.gmra.mrb[0].mxu0 %v67
  %v174 = vpop.f32.mrb[0].mxu0
  %v175 = vadd.f32 0.0, %v174
  %v176 = vpop.f32.mrb[0].mxu0
  %v177 = vpop.f32.mrb[0].mxu0
  %v178 = vadd.f32 0.0, %v177
  %v179 = vpop.f32.mrb[0].mxu0
  %180 = vdwg.mxu0
  %v181 = vadd.f32 %v27, %v167
  %v182 = vadd.f32 %v28, %v170
  %v183 = vadd.f32 %v29, %v175
  %v184 = vadd.f32 %v30, %v178
  %185 = vst.msk [vmem:[#allocation2] sm:$0xff] %vm125, %v181
  %186 = vst.msk [vmem:[#allocation2 + $0x8] sm:$0xff] %vm125, %v182
  %187 = vst.msk [vmem:[#allocation2 + $0x10] sm:$0xff] %vm125, %v183
  %188 = vst.msk [vmem:[#allocation2 + $0x18] sm:$0xff] %vm125, %v184
  // Predicated region
  $region22: #{forward.17} parent=0 // pred_check
    %p189 = pneg %p18
  $region23: #{forward.17} parent=0 // pred_check_branch
    %191 = sbr.rel (%p189) target = $region25
  $region24: #{forward.17} parent=0 // pred_region
    %v192 = vld [vmem:[#allocation2] sm:$0xff]
    %v193 = vld [vmem:[#allocation2 + $0x8] sm:$0xff]
    %v194 = vld [vmem:[#allocation2 + $0x10] sm:$0xff]
    %v195 = vld [vmem:[#allocation2 + $0x18] sm:$0xff]
    %v196 = vld [vmem:[%s2] sm:$0x1]
    %v198 = vlaneseq
    %v199 = vshrl.u32 %v198, 7
    %v200 = vsub.s32 0, %v199
    %v201 = vrot.slane %v196, %v200
    %v203 = vmul.f32 %v192, %v201
    %v204 = vmul.f32 %v193, %v201
    %v205 = vmul.f32 %v194, %v201
    %v206 = vmul.f32 %v195, %v201
    %v207 = vld [vmem:[%s3] sm:$0x1]
    %v209 = vlaneseq
    %v210 = vshrl.u32 %v209, 7
    %v211 = vsub.s32 0, %v210
    %v212 = vrot.slane %v207, %v211
    %v214 = vadd.f32 %v203, %v212
    %v215 = vadd.f32 %v204, %v212
    %v216 = vadd.f32 %v205, %v212
    %v217 = vadd.f32 %v206, %v212
    %v218 = vmax.f32 %v214, 0.0
    %v219 = vmax.f32 %v215, 0.0
    %v220 = vmax.f32 %v216, 0.0
    %v221 = vmax.f32 %v217, 0.0
    %v222 = vpack.c.bf16 %v219, %v218
    %v223 = vpack.c.bf16 %v221, %v220
    %v226 = vunpack.c.l.b16 %v222
    %v227 = vunpack.c.h.b16 %v222
    %v228 = vunpack.c.l.b16 %v223
    %v229 = vunpack.c.h.b16 %v223
    %v230 = vpack.c.b16 %v226, %v226
    %v231 = vpack.c.b16 %v227, %v227
    %v232 = vpack.c.b16 %v228, %v228
    %v233 = vpack.c.b16 %v229, %v229
    %vm238 = vcmask 125952
    %239 = vst.msk [vmem:[%s4] sm:$0xf] %vm238, %v230
    %240 = vst.msk [vmem:[%s4 + $0x4] sm:$0xf] %vm238, %v231
    %241 = vst.msk [vmem:[%s4 + $0x8] sm:$0xf] %vm238, %v232
    %242 = vst.msk [vmem:[%s4 + $0xc] sm:$0xf] %vm238, %v233
  $region25: #{forward.17} parent=0 // pred_fallthru
    _
  // Predicated region
  $region26: #{forward.17} parent=0 // pred_check
    _
  $region27: #{forward.17} parent=0 // pred_check_branch
    %244 = sbr.rel (0) target = $region29
  $region28: #{forward.17} parent=0 // pred_region
    _
  $region29: #{forward.17} parent=0 // pred_fallthru
    _
  // Predicated region
  $region30: #{forward.17} parent=0 // pred_check
    _
  $region31: #{forward.17} parent=0 // pred_check_branch
    %246 = sbr.rel (0) target = $region33
  $region32: #{forward.17} parent=0 // pred_region
    _
  $region33: #{forward.17} parent=0 // pred_fallthru
    _

// kernel: forward.18
$region0: #{forward.18}
  #allocation0 [shape = 'u32[]', space=smem, size = 0x4, offset = 0x4, fixed_abs, tag = 'smem constant byte address 0x4 - core index']
  #allocation1 [shape = 'u32[144,128]{1,0:T(1,128)}', space=vmem, size = 0x12000, scoped, tag = 'internal scratch']
  #allocation2 [shape = 'f32[128,256]{1,0:T(8,128)}', space=vmem, size = 0x20000, scoped, tag = 'scratch operand']
  %s0 = inlined_call_operand.vmem [shape: bf16[128,216], index: 0, kind: input, shape index: {}]
  %s1 = inlined_call_operand.vmem [shape: bf16[216,256], index: 1, kind: input, shape index: {}]
  %s2 = inlined_call_operand.vmem [shape: f32[1,256], index: 2, kind: input, shape index: {}]
  %s3 = inlined_call_operand.vmem [shape: f32[1,256], index: 3, kind: input, shape index: {}]
  %s4 = inlined_call_operand.vmem [shape: bf16[128,256], index: 4, kind: output, shape index: {}]
  %s5 = sld [smem:[#allocation0]]
  $region34: #{forward.18} parent=0
    _
  %s7 = ssub.s32 1, %s5
  %s8 = scalar_select 0, %s7, %s5
  // Predicated region
  $region2: #{forward.18} parent=0 // pred_check
    _
  $region3: #{forward.18} parent=0 // pred_check_branch
    %10 = sbr.rel (0) target = $region5
  $region4: #{forward.18} parent=0 // pred_region
    _
  $region5: #{forward.18} parent=0 // pred_fallthru
    _
  // Predicated region
  $region6: #{forward.18} parent=0 // pred_check
    _
  $region7: #{forward.18} parent=0 // pred_check_branch
    %12 = sbr.rel (0) target = $region9
  $region8: #{forward.18} parent=0 // pred_region
    _
  $region9: #{forward.18} parent=0 // pred_fallthru
    _
  // Predicated region
  $region10: #{forward.18} parent=0 // pred_check
    _
  $region11: #{forward.18} parent=0 // pred_check_branch
    %14 = sbr.rel (0) target = $region13
  $region12: #{forward.18} parent=0 // pred_region
    _
  $region13: #{forward.18} parent=0 // pred_fallthru
    _
  // Predicated region
  $region14: #{forward.18} parent=0 // pred_check
    _
  $region15: #{forward.18} parent=0 // pred_check_branch
    %16 = sbr.rel (0) target = $region17
  $region16: #{forward.18} parent=0 // pred_region
    _
  $region17: #{forward.18} parent=0 // pred_fallthru
    _
  %p18 = scmp.eq.s32.totalorder 0, 0
  // Predicated region
  $region18: #{forward.18} parent=0 // pred_check
    %p19 = pneg %p18
  $region19: #{forward.18} parent=0 // pred_check_branch
    %21 = sbr.rel (%p19) target = $region21
  $region20: #{forward.18} parent=0 // pred_region
    %22 = vst [vmem:[#allocation2] sm:$0xff] 0.0
    %23 = vst [vmem:[#allocation2 + $0x8] sm:$0xff] 0.0
    %24 = vst [vmem:[#allocation2 + $0x10] sm:$0xff] 0.0
    %25 = vst [vmem:[#allocation2 + $0x18] sm:$0xff] 0.0
    %26 = vst [vmem:[#allocation2 + $0x20] sm:$0xff] 0.0
    %27 = vst [vmem:[#allocation2 + $0x28] sm:$0xff] 0.0
    %28 = vst [vmem:[#allocation2 + $0x30] sm:$0xff] 0.0
    %29 = vst [vmem:[#allocation2 + $0x38] sm:$0xff] 0.0
    %30 = vst [vmem:[#allocation2 + $0x40] sm:$0xff] 0.0
    %31 = vst [vmem:[#allocation2 + $0x48] sm:$0xff] 0.0
    %32 = vst [vmem:[#allocation2 + $0x50] sm:$0xff] 0.0
    %33 = vst [vmem:[#allocation2 + $0x58] sm:$0xff] 0.0
    %34 = vst [vmem:[#allocation2 + $0x60] sm:$0xff] 0.0
    %35 = vst [vmem:[#allocation2 + $0x68] sm:$0xff] 0.0
    %36 = vst [vmem:[#allocation2 + $0x70] sm:$0xff] 0.0
    %37 = vst [vmem:[#allocation2 + $0x78] sm:$0xff] 0.0
    %38 = vst [vmem:[#allocation2 + $0x80] sm:$0xff] 0.0
    %39 = vst [vmem:[#allocation2 + $0x88] sm:$0xff] 0.0
    %40 = vst [vmem:[#allocation2 + $0x90] sm:$0xff] 0.0
    %41 = vst [vmem:[#allocation2 + $0x98] sm:$0xff] 0.0
    %42 = vst [vmem:[#allocation2 + $0xa0] sm:$0xff] 0.0
    %43 = vst [vmem:[#allocation2 + $0xa8] sm:$0xff] 0.0
    %44 = vst [vmem:[#allocation2 + $0xb0] sm:$0xff] 0.0
    %45 = vst [vmem:[#allocation2 + $0xb8] sm:$0xff] 0.0
    %46 = vst [vmem:[#allocation2 + $0xc0] sm:$0xff] 0.0
    %47 = vst [vmem:[#allocation2 + $0xc8] sm:$0xff] 0.0
    %48 = vst [vmem:[#allocation2 + $0xd0] sm:$0xff] 0.0
    %49 = vst [vmem:[#allocation2 + $0xd8] sm:$0xff] 0.0
    %50 = vst [vmem:[#allocation2 + $0xe0] sm:$0xff] 0.0
    %51 = vst [vmem:[#allocation2 + $0xe8] sm:$0xff] 0.0
    %52 = vst [vmem:[#allocation2 + $0xf0] sm:$0xff] 0.0
    %53 = vst [vmem:[#allocation2 + $0xf8] sm:$0xff] 0.0
  $region21: #{forward.18} parent=0 // pred_fallthru
    _
  %v54 = vld [vmem:[#allocation2] sm:$0xff]
  %v55 = vld [vmem:[#allocation2 + $0x8] sm:$0xff]
  %v56 = vld [vmem:[#allocation2 + $0x10] sm:$0xff]
  %v57 = vld [vmem:[#allocation2 + $0x18] sm:$0xff]
  %v58 = vld [vmem:[#allocation2 + $0x20] sm:$0xff]
  %v59 = vld [vmem:[#allocation2 + $0x28] sm:$0xff]
  %v60 = vld [vmem:[#allocation2 + $0x30] sm:$0xff]
  %v61 = vld [vmem:[#allocation2 + $0x38] sm:$0xff]
  %v62 = vld [vmem:[#allocation2 + $0x40] sm:$0xff]
  %v63 = vld [vmem:[#allocation2 + $0x48] sm:$0xff]
  %v64 = vld [vmem:[#allocation2 + $0x50] sm:$0xff]
  %v65 = vld [vmem:[#allocation2 + $0x58] sm:$0xff]
  %v66 = vld [vmem:[#allocation2 + $0x60] sm:$0xff]
  %v67 = vld [vmem:[#allocation2 + $0x68] sm:$0xff]
  %v68 = vld [vmem:[#allocation2 + $0x70] sm:$0xff]
  %v69 = vld [vmem:[#allocation2 + $0x78] sm:$0xff]
  %v70 = vld [vmem:[#allocation2 + $0x80] sm:$0xff]
  %v71 = vld [vmem:[#allocation2 + $0x88] sm:$0xff]
  %v72 = vld [vmem:[#allocation2 + $0x90] sm:$0xff]
  %v73 = vld [vmem:[#allocation2 + $0x98] sm:$0xff]
  %v74 = vld [vmem:[#allocation2 + $0xa0] sm:$0xff]
  %v75 = vld [vmem:[#allocation2 + $0xa8] sm:$0xff]
  %v76 = vld [vmem:[#allocation2 + $0xb0] sm:$0xff]
  %v77 = vld [vmem:[#allocation2 + $0xb8] sm:$0xff]
  %v78 = vld [vmem:[#allocation2 + $0xc0] sm:$0xff]
  %v79 = vld [vmem:[#allocation2 + $0xc8] sm:$0xff]
  %v80 = vld [vmem:[#allocation2 + $0xd0] sm:$0xff]
  %v81 = vld [vmem:[#allocation2 + $0xd8] sm:$0xff]
  %v82 = vld [vmem:[#allocation2 + $0xe0] sm:$0xff]
  %v83 = vld [vmem:[#allocation2 + $0xe8] sm:$0xff]
  %v84 = vld [vmem:[#allocation2 + $0xf0] sm:$0xff]
  %v85 = vld [vmem:[#allocation2 + $0xf8] sm:$0xff]
  %v86 = vld [vmem:[%s0] sm:$0xff]
  %v87 = vld [vmem:[%s0 + $0x8] sm:$0xff]
  %v88 = vld [vmem:[%s0 + $0x10] sm:$0xff]
  %v89 = vld [vmem:[%s0 + $0x18] sm:$0xff]
  %v90 = vld [vmem:[%s0 + $0x20] sm:$0xff]
  %v91 = vld [vmem:[%s0 + $0x28] sm:$0xff]
  %v92 = vld [vmem:[%s0 + $0x30] sm:$0xff]
  %v93 = vld [vmem:[%s0 + $0x38] sm:$0xff]
  %v94 = vld [vmem:[%s0 + $0x40] sm:$0xff]
  %v95 = vld [vmem:[%s0 + $0x48] sm:$0xff]
  %v96 = vld [vmem:[%s0 + $0x50] sm:$0xff]
  %v97 = vld [vmem:[%s0 + $0x58] sm:$0xff]
  %v98 = vld [vmem:[%s0 + $0x60] sm:$0xff]
  %v99 = vld [vmem:[%s0 + $0x68] sm:$0xff]
  %v100 = vld [vmem:[%s0 + $0x70] sm:$0xff]
  %v101 = vld [vmem:[%s0 + $0x78] sm:$0xff]
  %v102 = vld [vmem:[%s1] sm:$0xff]
  %v103 = vld [vmem:[%s1 + $0x8] sm:$0xff]
  %v104 = vld [vmem:[%s1 + $0x10] sm:$0xff]
  %v105 = vld [vmem:[%s1 + $0x18] sm:$0xff]
  %v106 = vld [vmem:[%s1 + $0x20] sm:$0xff]
  %v107 = vld [vmem:[%s1 + $0x28] sm:$0xff]
  %v108 = vld [vmem:[%s1 + $0x30] sm:$0xff]
  %v109 = vld [vmem:[%s1 + $0x38] sm:$0xff]
  %v110 = vld [vmem:[%s1 + $0x40] sm:$0xff]
  %v111 = vld [vmem:[%s1 + $0x48] sm:$0xff]
  %v112 = vld [vmem:[%s1 + $0x50] sm:$0xff]
  %v113 = vld [vmem:[%s1 + $0x58] sm:$0xff]
  %v114 = vld [vmem:[%s1 + $0x60] sm:$0xff]
  %v115 = vld [vmem:[%s1 + $0x68] sm:$0xff]
  %v116 = vld [vmem:[%s1 + $0x70] sm:$0xff]
  %v117 = vld [vmem:[%s1 + $0x78] sm:$0xff]
  %v118 = vld [vmem:[%s1 + $0x80] sm:$0xff]
  %v119 = vld [vmem:[%s1 + $0x88] sm:$0xff]
  %v120 = vld [vmem:[%s1 + $0x90] sm:$0xff]
  %v121 = vld [vmem:[%s1 + $0x98] sm:$0xff]
  %v122 = vld [vmem:[%s1 + $0xa0] sm:$0xff]
  %v123 = vld [vmem:[%s1 + $0xa8] sm:$0xff]
  %v124 = vld [vmem:[%s1 + $0xb0] sm:$0xff]
  %v125 = vld [vmem:[%s1 + $0xb8] sm:$0xff]
  %v126 = vld [vmem:[%s1 + $0xc0] sm:$0xff]
  %v127 = vld [vmem:[%s1 + $0xc8] sm:$0xff]
  %v128 = vld [vmem:[%s1 + $0xd0] sm:$0xff]
  %v145 = vunpack.c.l.b16 %v86
  %v146 = vunpack.c.h.b16 %v86
  %v147 = vunpack.c.l.b16 %v87
  %v148 = vunpack.c.h.b16 %v87
  %v149 = vunpack.c.l.b16 %v88
  %v150 = vunpack.c.h.b16 %v88
  %v151 = vunpack.c.l.b16 %v89
  %v152 = vunpack.c.h.b16 %v89
  %v153 = vunpack.c.l.b16 %v90
  %v154 = vunpack.c.h.b16 %v90
  %v155 = vunpack.c.l.b16 %v91
  %v156 = vunpack.c.h.b16 %v91
  %v157 = vunpack.c.l.b16 %v92
  %v158 = vunpack.c.h.b16 %v92
  %v159 = vunpack.c.l.b16 %v93
  %v160 = vunpack.c.h.b16 %v93
  %v161 = vunpack.c.l.b16 %v94
  %v162 = vunpack.c.h.b16 %v94
  %v163 = vunpack.c.l.b16 %v95
  %v164 = vunpack.c.h.b16 %v95
  %v165 = vunpack.c.l.b16 %v96
  %v166 = vunpack.c.h.b16 %v96
  %v167 = vunpack.c.l.b16 %v97
  %v168 = vunpack.c.h.b16 %v97
  %v169 = vunpack.c.l.b16 %v98
  %v170 = vunpack.c.h.b16 %v98
  %v171 = vunpack.c.l.b16 %v99
  %v172 = vunpack.c.h.b16 %v99
  %v173 = vunpack.c.l.b16 %v100
  %v174 = vunpack.c.h.b16 %v100
  %v175 = vunpack.c.l.b16 %v101
  %v176 = vunpack.c.h.b16 %v101
  %v177 = vpack.c.b16 %v147, %v145
  %v178 = vpack.c.b16 %v148, %v146
  %v179 = vpack.c.b16 %v151, %v149
  %v180 = vpack.c.b16 %v152, %v150
  %v181 = vpack.c.b16 %v155, %v153
  %v182 = vpack.c.b16 %v156, %v154
  %v183 = vpack.c.b16 %v159, %v157
  %v184 = vpack.c.b16 %v160, %v158
  %v185 = vpack.c.b16 %v163, %v161
  %v186 = vpack.c.b16 %v164, %v162
  %v187 = vpack.c.b16 %v167, %v165
  %v188 = vpack.c.b16 %v168, %v166
  %v189 = vpack.c.b16 %v171, %v169
  %v190 = vpack.c.b16 %v172, %v170
  %v191 = vpack.c.b16 %v175, %v173
  %v192 = vpack.c.b16 %v176, %v174
  %v228 = vunpack.c.l.b16 %v102
  %v229 = vunpack.c.h.b16 %v102
  %v230 = vunpack.c.l.b16 %v103
  %v231 = vunpack.c.h.b16 %v103
  %v232 = vunpack.c.l.b16 %v104
  %v233 = vunpack.c.h.b16 %v104
  %v234 = vunpack.c.l.b16 %v105
  %v235 = vunpack.c.h.b16 %v105
  %v236 = vunpack.c.l.b16 %v106
  %v237 = vunpack.c.h.b16 %v106
  %v238 = vunpack.c.l.b16 %v107
  %v239 = vunpack.c.h.b16 %v107
  %v240 = vunpack.c.l.b16 %v108
  %v241 = vunpack.c.h.b16 %v108
  %v242 = vunpack.c.l.b16 %v109
  %v243 = vunpack.c.h.b16 %v109
  %v244 = vunpack.c.l.b16 %v110
  %v245 = vunpack.c.h.b16 %v110
  %v246 = vunpack.c.l.b16 %v111
  %v247 = vunpack.c.h.b16 %v111
  %v248 = vunpack.c.l.b16 %v112
  %v249 = vunpack.c.h.b16 %v112
  %v250 = vunpack.c.l.b16 %v113
  %v251 = vunpack.c.h.b16 %v113
  %v252 = vunpack.c.l.b16 %v114
  %v253 = vunpack.c.h.b16 %v114
  %v254 = vunpack.c.l.b16 %v115
  %v255 = vunpack.c.h.b16 %v115
  %v256 = vunpack.c.l.b16 %v116
  %v257 = vunpack.c.h.b16 %v116
  %v258 = vunpack.c.l.b16 %v117
  %v259 = vunpack.c.h.b16 %v117
  %v260 = vunpack.c.l.b16 %v118
  %v261 = vunpack.c.h.b16 %v118
  %v262 = vunpack.c.l.b16 %v119
  %v263 = vunpack.c.h.b16 %v119
  %v264 = vunpack.c.l.b16 %v120
  %v265 = vunpack.c.h.b16 %v120
  %v266 = vunpack.c.l.b16 %v121
  %v267 = vunpack.c.h.b16 %v121
  %v268 = vunpack.c.l.b16 %v122
  %v269 = vunpack.c.h.b16 %v122
  %v270 = vunpack.c.l.b16 %v123
  %v271 = vunpack.c.h.b16 %v123
  %v272 = vunpack.c.l.b16 %v124
  %v273 = vunpack.c.h.b16 %v124
  %v274 = vunpack.c.l.b16 %v125
  %v275 = vunpack.c.h.b16 %v125
  %v276 = vunpack.c.l.b16 %v126
  %v277 = vunpack.c.h.b16 %v126
  %v278 = vunpack.c.l.b16 %v127
  %v279 = vunpack.c.h.b16 %v127
  %v280 = vunpack.c.l.b16 %v128
  %v281 = vunpack.c.h.b16 %v128
  %v282 = vpack.c.b16 %v230, %v228
  %v283 = vpack.c.b16 %v231, %v229
  %v284 = vpack.c.b16 %v234, %v232
  %v285 = vpack.c.b16 %v235, %v233
  %v286 = vpack.c.b16 %v238, %v236
  %v287 = vpack.c.b16 %v239, %v237
  %v288 = vpack.c.b16 %v242, %v240
  %v289 = vpack.c.b16 %v243, %v241
  %v290 = vpack.c.b16 %v246, %v244
  %v291 = vpack.c.b16 %v247, %v245
  %v292 = vpack.c.b16 %v250, %v248
  %v293 = vpack.c.b16 %v251, %v249
  %v294 = vpack.c.b16 %v254, %v252
  %v295 = vpack.c.b16 %v255, %v253
  %v296 = vpack.c.b16 %v258, %v256
  %v297 = vpack.c.b16 %v259, %v257
  %v298 = vpack.c.b16 %v262, %v260
  %v299 = vpack.c.b16 %v263, %v261
  %v300 = vpack.c.b16 %v266, %v264
  %v301 = vpack.c.b16 %v267, %v265
  %v302 = vpack.c.b16 %v270, %v268
  %v303 = vpack.c.b16 %v271, %v269
  %v304 = vpack.c.b16 %v274, %v272
  %v305 = vpack.c.b16 %v275, %v273
  %v306 = vpack.c.b16 %v278, %v276
  %v307 = vpack.c.b16 %v279, %v277
  %v308 = vpack.c.b16 %v280, %v280
  %v309 = vpack.c.b16 %v281, %v281
  %vm336 = vcmask 719872
  %v338 = vsel %vm336, %v178, 0
  %v341 = vsel %vm336, %v180, 0
  %v344 = vsel %vm336, %v182, 0
  %v347 = vsel %vm336, %v184, 0
  %v350 = vsel %vm336, %v186, 0
  %v353 = vsel %vm336, %v188, 0
  %v356 = vsel %vm336, %v190, 0
  %v359 = vsel %vm336, %v192, 0
  %vm361 = vcmask 1043456
  %v363 = vsel %vm361, %v308, 0
  %v366 = vsel %vm361, %v309, 0
  %368 = vmatprep.subr.bf16.mxu0 %v283
  %369 = vmatpush1.bf16.msra.mxu0 %v282
  %370 = vmatprep.subr.bf16.mxu0 %v285
  %371 = vmatpush1.bf16.msra.mxu0 %v284
  %372 = vmatprep.subr.bf16.mxu0 %v287
  %373 = vmatpush1.bf16.msra.mxu0 %v286
  %374 = vmatprep.subr.bf16.mxu0 %v289
  %375 = vmatpush1.bf16.msra.mxu0 %v288
  %376 = vmatprep.subr.bf16.mxu0 %v291
  %377 = vmatpush1.bf16.msra.mxu0 %v290
  %378 = vmatprep.subr.bf16.mxu0 %v293
  %379 = vmatpush1.bf16.msra.mxu0 %v292
  %380 = vmatprep.subr.bf16.mxu0 %v295
  %381 = vmatpush1.bf16.msra.mxu0 %v294
  %382 = vmatprep.subr.bf16.mxu0 %v297
  %383 = vmatpush1.bf16.msra.mxu0 %v296
  %384 = vmatprep.subr.bf16.mxu0 %v299
  %385 = vmatpush1.bf16.msra.mxu0 %v298
  %386 = vmatprep.subr.bf16.mxu0 %v301
  %387 = vmatpush1.bf16.msra.mxu0 %v300
  %388 = vmatprep.subr.bf16.mxu0 %v303
  %389 = vmatpush1.bf16.msra.mxu0 %v302
  %390 = vmatprep.subr.bf16.mxu0 %v305
  %391 = vmatpush1.bf16.msra.mxu0 %v304
  %392 = vmatprep.subr.bf16.mxu0 %v307
  %393 = vmatpush1.bf16.msra.mxu0 %v306
  %394 = vmatprep.subr.bf16.mxu0 %v366
  %395 = vmatpush1.bf16.msra.mxu0 %v363
  %396 = vmatprep.subr.bf16.mxu0 0
  %397 = vmatpush1.bf16.msra.mxu0 0
  %398 = vmatprep.subr.bf16.mxu0 0
  %399 = vmatpush1.bf16.msra.mxu0 0
  %400 = vmatprep.mubr.bf16.mxu0 %v338
  %401 = vmatmul.mubr.bf16.gmra.mrb[0].mxu0 %v177
  %v402 = vpop.f32.mrb[0].mxu0
  %v403 = vadd.f32 0.0, %v402
  %v404 = vpop.f32.mrb[0].mxu0
  %v405 = vadd.f32 0.0, %v404
  %v406 = vpop.f32.mrb[0].mxu0
  %v407 = vadd.f32 0.0, %v406
  %v408 = vpop.f32.mrb[0].mxu0
  %v409 = vadd.f32 0.0, %v408
  %410 = vmatprep.mubr.bf16.mxu0 %v341
  %411 = vmatmul.mubr.bf16.gmra.mrb[0].mxu0 %v179
  %v412 = vpop.f32.mrb[0].mxu0
  %v413 = vadd.f32 0.0, %v412
  %v414 = vpop.f32.mrb[0].mxu0
  %v415 = vadd.f32 0.0, %v414
  %v416 = vpop.f32.mrb[0].mxu0
  %v417 = vadd.f32 0.0, %v416
  %v418 = vpop.f32.mrb[0].mxu0
  %v419 = vadd.f32 0.0, %v418
  %420 = vmatprep.mubr.bf16.mxu0 %v344
  %421 = vmatmul.mubr.bf16.gmra.mrb[0].mxu0 %v181
  %v422 = vpop.f32.mrb[0].mxu0
  %v423 = vadd.f32 0.0, %v422
  %v424 = vpop.f32.mrb[0].mxu0
  %v425 = vadd.f32 0.0, %v424
  %v426 = vpop.f32.mrb[0].mxu0
  %v427 = vadd.f32 0.0, %v426
  %v428 = vpop.f32.mrb[0].mxu0
  %v429 = vadd.f32 0.0, %v428
  %430 = vmatprep.mubr.bf16.mxu0 %v347
  %431 = vmatmul.mubr.bf16.gmra.mrb[0].mxu0 %v183
  %v432 = vpop.f32.mrb[0].mxu0
  %v433 = vadd.f32 0.0, %v432
  %v434 = vpop.f32.mrb[0].mxu0
  %v435 = vadd.f32 0.0, %v434
  %v436 = vpop.f32.mrb[0].mxu0
  %v437 = vadd.f32 0.0, %v436
  %v438 = vpop.f32.mrb[0].mxu0
  %v439 = vadd.f32 0.0, %v438
  %440 = vmatprep.mubr.bf16.mxu0 %v350
  %441 = vmatmul.mubr.bf16.gmra.mrb[0].mxu0 %v185
  %v442 = vpop.f32.mrb[0].mxu0
  %v443 = vadd.f32 0.0, %v442
  %v444 = vpop.f32.mrb[0].mxu0
  %v445 = vadd.f32 0.0, %v444
  %v446 = vpop.f32.mrb[0].mxu0
  %v447 = vadd.f32 0.0, %v446
  %v448 = vpop.f32.mrb[0].mxu0
  %v449 = vadd.f32 0.0, %v448
  %450 = vmatprep.mubr.bf16.mxu0 %v353
  %451 = vmatmul.mubr.bf16.gmra.mrb[0].mxu0 %v187
  %v452 = vpop.f32.mrb[0].mxu0
  %v453 = vadd.f32 0.0, %v452
  %v454 = vpop.f32.mrb[0].mxu0
  %v455 = vadd.f32 0.0, %v454
  %v456 = vpop.f32.mrb[0].mxu0
  %v457 = vadd.f32 0.0, %v456
  %v458 = vpop.f32.mrb[0].mxu0
  %v459 = vadd.f32 0.0, %v458
  %460 = vmatprep.mubr.bf16.mxu0 %v356
  %461 = vmatmul.mubr.bf16.gmra.mrb[0].mxu0 %v189
  %v462 = vpop.f32.mrb[0].mxu0
  %v463 = vadd.f32 0.0, %v462
  %v464 = vpop.f32.mrb[0].mxu0
  %v465 = vadd.f32 0.0, %v464
  %v466 = vpop.f32.mrb[0].mxu0
  %v467 = vadd.f32 0.0, %v466
  %v468 = vpop.f32.mrb[0].mxu0
  %v469 = vadd.f32 0.0, %v468
  %470 = vmatprep.mubr.bf16.mxu0 %v359
  %471 = vmatmul.mubr.bf16.gmra.mrb[0].mxu0 %v191
  %v472 = vpop.f32.mrb[0].mxu0
  %v473 = vadd.f32 0.0, %v472
  %v474 = vpop.f32.mrb[0].mxu0
  %v475 = vadd.f32 0.0, %v474
  %v476 = vpop.f32.mrb[0].mxu0
  %v477 = vadd.f32 0.0, %v476
  %v478 = vpop.f32.mrb[0].mxu0
  %v479 = vadd.f32 0.0, %v478
  %480 = vdwg.mxu0
  %v481 = vadd.f32 %v54, %v403
  %v482 = vadd.f32 %v55, %v405
  %v483 = vadd.f32 %v56, %v407
  %v484 = vadd.f32 %v57, %v409
  %v485 = vadd.f32 %v58, %v413
  %v486 = vadd.f32 %v59, %v415
  %v487 = vadd.f32 %v60, %v417
  %v488 = vadd.f32 %v61, %v419
  %v489 = vadd.f32 %v62, %v423
  %v490 = vadd.f32 %v63, %v425
  %v491 = vadd.f32 %v64, %v427
  %v492 = vadd.f32 %v65, %v429
  %v493 = vadd.f32 %v66, %v433
  %v494 = vadd.f32 %v67, %v435
  %v495 = vadd.f32 %v68, %v437
  %v496 = vadd.f32 %v69, %v439
  %v497 = vadd.f32 %v70, %v443
  %v498 = vadd.f32 %v71, %v445
  %v499 = vadd.f32 %v72, %v447
  %v500 = vadd.f32 %v73, %v449
  %v501 = vadd.f32 %v74, %v453
  %v502 = vadd.f32 %v75, %v455
  %v503 = vadd.f32 %v76, %v457
  %v504 = vadd.f32 %v77, %v459
  %v505 = vadd.f32 %v78, %v463
  %v506 = vadd.f32 %v79, %v465
  %v507 = vadd.f32 %v80, %v467
  %v508 = vadd.f32 %v81, %v469
  %v509 = vadd.f32 %v82, %v473
  %v510 = vadd.f32 %v83, %v475
  %v511 = vadd.f32 %v84, %v477
  %v512 = vadd.f32 %v85, %v479
  %513 = vst [vmem:[#allocation2] sm:$0xff] %v481
  %514 = vst [vmem:[#allocation2 + $0x8] sm:$0xff] %v482
  %515 = vst [vmem:[#allocation2 + $0x10] sm:$0xff] %v483
  %516 = vst [vmem:[#allocation2 + $0x18] sm:$0xff] %v484
  %517 = vst [vmem:[#allocation2 + $0x20] sm:$0xff] %v485
  %518 = vst [vmem:[#allocation2 + $0x28] sm:$0xff] %v486
  %519 = vst [vmem:[#allocation2 + $0x30] sm:$0xff] %v487
  %520 = vst [vmem:[#allocation2 + $0x38] sm:$0xff] %v488
  %521 = vst [vmem:[#allocation2 + $0x40] sm:$0xff] %v489
  %522 = vst [vmem:[#allocation2 + $0x48] sm:$0xff] %v490
  %523 = vst [vmem:[#allocation2 + $0x50] sm:$0xff] %v491
  %524 = vst [vmem:[#allocation2 + $0x58] sm:$0xff] %v492
  %525 = vst [vmem:[#allocation2 + $0x60] sm:$0xff] %v493
  %526 = vst [vmem:[#allocation2 + $0x68] sm:$0xff] %v494
  %527 = vst [vmem:[#allocation2 + $0x70] sm:$0xff] %v495
  %528 = vst [vmem:[#allocation2 + $0x78] sm:$0xff] %v496
  %529 = vst [vmem:[#allocation2 + $0x80] sm:$0xff] %v497
  %530 = vst [vmem:[#allocation2 + $0x88] sm:$0xff] %v498
  %531 = vst [vmem:[#allocation2 + $0x90] sm:$0xff] %v499
  %532 = vst [vmem:[#allocation2 + $0x98] sm:$0xff] %v500
  %533 = vst [vmem:[#allocation2 + $0xa0] sm:$0xff] %v501
  %534 = vst [vmem:[#allocation2 + $0xa8] sm:$0xff] %v502
  %535 = vst [vmem:[#allocation2 + $0xb0] sm:$0xff] %v503
  %536 = vst [vmem:[#allocation2 + $0xb8] sm:$0xff] %v504
  %537 = vst [vmem:[#allocation2 + $0xc0] sm:$0xff] %v505
  %538 = vst [vmem:[#allocation2 + $0xc8] sm:$0xff] %v506
  %539 = vst [vmem:[#allocation2 + $0xd0] sm:$0xff] %v507
  %540 = vst [vmem:[#allocation2 + $0xd8] sm:$0xff] %v508
  %541 = vst [vmem:[#allocation2 + $0xe0] sm:$0xff] %v509
  %542 = vst [vmem:[#allocation2 + $0xe8] sm:$0xff] %v510
  %543 = vst [vmem:[#allocation2 + $0xf0] sm:$0xff] %v511
  %544 = vst [vmem:[#allocation2 + $0xf8] sm:$0xff] %v512
  // Predicated region
  $region22: #{forward.18} parent=0 // pred_check
    %p545 = pneg %p18
  $region23: #{forward.18} parent=0 // pred_check_branch
    %547 = sbr.rel (%p545) target = $region25
  $region24: #{forward.18} parent=0 // pred_region
    %v548 = vld [vmem:[#allocation2] sm:$0xff]
    %v549 = vld [vmem:[#allocation2 + $0x8] sm:$0xff]
    %v550 = vld [vmem:[#allocation2 + $0x10] sm:$0xff]
    %v551 = vld [vmem:[#allocation2 + $0x18] sm:$0xff]
    %v552 = vld [vmem:[#allocation2 + $0x20] sm:$0xff]
    %v553 = vld [vmem:[#allocation2 + $0x28] sm:$0xff]
    %v554 = vld [vmem:[#allocation2 + $0x30] sm:$0xff]
    %v555 = vld [vmem:[#allocation2 + $0x38] sm:$0xff]
    %v556 = vld [vmem:[#allocation2 + $0x40] sm:$0xff]
    %v557 = vld [vmem:[#allocation2 + $0x48] sm:$0xff]
    %v558 = vld [vmem:[#allocation2 + $0x50] sm:$0xff]
    %v559 = vld [vmem:[#allocation2 + $0x58] sm:$0xff]
    %v560 = vld [vmem:[#allocation2 + $0x60] sm:$0xff]
    %v561 = vld [vmem:[#allocation2 + $0x68] sm:$0xff]
    %v562 = vld [vmem:[#allocation2 + $0x70] sm:$0xff]
    %v563 = vld [vmem:[#allocation2 + $0x78] sm:$0xff]
    %v564 = vld [vmem:[#allocation2 + $0x80] sm:$0xff]
    %v565 = vld [vmem:[#allocation2 + $0x88] sm:$0xff]
    %v566 = vld [vmem:[#allocation2 + $0x90] sm:$0xff]
    %v567 = vld [vmem:[#allocation2 + $0x98] sm:$0xff]
    %v568 = vld [vmem:[#allocation2 + $0xa0] sm:$0xff]
    %v569 = vld [vmem:[#allocation2 + $0xa8] sm:$0xff]
    %v570 = vld [vmem:[#allocation2 + $0xb0] sm:$0xff]
    %v571 = vld [vmem:[#allocation2 + $0xb8] sm:$0xff]
    %v572 = vld [vmem:[#allocation2 + $0xc0] sm:$0xff]
    %v573 = vld [vmem:[#allocation2 + $0xc8] sm:$0xff]
    %v574 = vld [vmem:[#allocation2 + $0xd0] sm:$0xff]
    %v575 = vld [vmem:[#allocation2 + $0xd8] sm:$0xff]
    %v576 = vld [vmem:[#allocation2 + $0xe0] sm:$0xff]
    %v577 = vld [vmem:[#allocation2 + $0xe8] sm:$0xff]
    %v578 = vld [vmem:[#allocation2 + $0xf0] sm:$0xff]
    %v579 = vld [vmem:[#allocation2 + $0xf8] sm:$0xff]
    %v580 = vld [vmem:[%s2] sm:$0x3]
    %v582 = vlaneseq
    %v583 = vshrl.u32 %v582, 7
    %v584 = vsub.s32 0, %v583
    %v585 = vrot.slane %v580, %v584
    %v586 = vlaneseq
    %v587 = vshrl.u32 %v586, 7
    %v588 = vsub.s32 1, %v587
    %v589 = vrot.slane %v580, %v588
    %v592 = vmul.f32 %v548, %v585
    %v593 = vmul.f32 %v549, %v589
    %v594 = vmul.f32 %v550, %v585
    %v595 = vmul.f32 %v551, %v589
    %v596 = vmul.f32 %v552, %v585
    %v597 = vmul.f32 %v553, %v589
    %v598 = vmul.f32 %v554, %v585
    %v599 = vmul.f32 %v555, %v589
    %v600 = vmul.f32 %v556, %v585
    %v601 = vmul.f32 %v557, %v589
    %v602 = vmul.f32 %v558, %v585
    %v603 = vmul.f32 %v559, %v589
    %v604 = vmul.f32 %v560, %v585
    %v605 = vmul.f32 %v561, %v589
    %v606 = vmul.f32 %v562, %v585
    %v607 = vmul.f32 %v563, %v589
    %v608 = vmul.f32 %v564, %v585
    %v609 = vmul.f32 %v565, %v589
    %v610 = vmul.f32 %v566, %v585
    %v611 = vmul.f32 %v567, %v589
    %v612 = vmul.f32 %v568, %v585
    %v613 = vmul.f32 %v569, %v589
    %v614 = vmul.f32 %v570, %v585
    %v615 = vmul.f32 %v571, %v589
    %v616 = vmul.f32 %v572, %v585
    %v617 = vmul.f32 %v573, %v589
    %v618 = vmul.f32 %v574, %v585
    %v619 = vmul.f32 %v575, %v589
    %v620 = vmul.f32 %v576, %v585
    %v621 = vmul.f32 %v577, %v589
    %v622 = vmul.f32 %v578, %v585
    %v623 = vmul.f32 %v579, %v589
    %v624 = vld [vmem:[%s3] sm:$0x3]
    %v626 = vlaneseq
    %v627 = vshrl.u32 %v626, 7
    %v628 = vsub.s32 0, %v627
    %v629 = vrot.slane %v624, %v628
    %v630 = vlaneseq
    %v631 = vshrl.u32 %v630, 7
    %v632 = vsub.s32 1, %v631
    %v633 = vrot.slane %v624, %v632
    %v636 = vadd.f32 %v592, %v629
    %v637 = vadd.f32 %v593, %v633
    %v638 = vadd.f32 %v594, %v629
    %v639 = vadd.f32 %v595, %v633
    %v640 = vadd.f32 %v596, %v629
    %v641 = vadd.f32 %v597, %v633
    %v642 = vadd.f32 %v598, %v629
    %v643 = vadd.f32 %v599, %v633
    %v644 = vadd.f32 %v600, %v629
    %v645 = vadd.f32 %v601, %v633
    %v646 = vadd.f32 %v602, %v629
    %v647 = vadd.f32 %v603, %v633
    %v648 = vadd.f32 %v604, %v629
    %v649 = vadd.f32 %v605, %v633
    %v650 = vadd.f32 %v606, %v629
    %v651 = vadd.f32 %v607, %v633
    %v652 = vadd.f32 %v608, %v629
    %v653 = vadd.f32 %v609, %v633
    %v654 = vadd.f32 %v610, %v629
    %v655 = vadd.f32 %v611, %v633
    %v656 = vadd.f32 %v612, %v629
    %v657 = vadd.f32 %v613, %v633
    %v658 = vadd.f32 %v614, %v629
    %v659 = vadd.f32 %v615, %v633
    %v660 = vadd.f32 %v616, %v629
    %v661 = vadd.f32 %v617, %v633
    %v662 = vadd.f32 %v618, %v629
    %v663 = vadd.f32 %v619, %v633
    %v664 = vadd.f32 %v620, %v629
    %v665 = vadd.f32 %v621, %v633
    %v666 = vadd.f32 %v622, %v629
    %v667 = vadd.f32 %v623, %v633
    %v668 = vpack.c.bf16 %v638, %v636
    %v669 = vpack.c.bf16 %v639, %v637
    %v670 = vpack.c.bf16 %v642, %v640
    %v671 = vpack.c.bf16 %v643, %v641
    %v672 = vpack.c.bf16 %v646, %v644
    %v673 = vpack.c.bf16 %v647, %v645
    %v674 = vpack.c.bf16 %v650, %v648
    %v675 = vpack.c.bf16 %v651, %v649
    %v676 = vpack.c.bf16 %v654, %v652
    %v677 = vpack.c.bf16 %v655, %v653
    %v678 = vpack.c.bf16 %v658, %v656
    %v679 = vpack.c.bf16 %v659, %v657
    %v680 = vpack.c.bf16 %v662, %v660
    %v681 = vpack.c.bf16 %v663, %v661
    %v682 = vpack.c.bf16 %v666, %v664
    %v683 = vpack.c.bf16 %v667, %v665
    %v700 = vunpack.c.l.b16 %v668
    %v701 = vunpack.c.l.b16 %v669
    %v702 = vunpack.c.h.b16 %v668
    %v703 = vunpack.c.h.b16 %v669
    %v704 = vunpack.c.l.b16 %v670
    %v705 = vunpack.c.l.b16 %v671
    %v706 = vunpack.c.h.b16 %v670
    %v707 = vunpack.c.h.b16 %v671
    %v708 = vunpack.c.l.b16 %v672
    %v709 = vunpack.c.l.b16 %v673
    %v710 = vunpack.c.h.b16 %v672
    %v711 = vunpack.c.h.b16 %v673
    %v712 = vunpack.c.l.b16 %v674
    %v713 = vunpack.c.l.b16 %v675
    %v714 = vunpack.c.h.b16 %v674
    %v715 = vunpack.c.h.b16 %v675
    %v716 = vunpack.c.l.b16 %v676
    %v717 = vunpack.c.l.b16 %v677
    %v718 = vunpack.c.h.b16 %v676
    %v719 = vunpack.c.h.b16 %v677
    %v720 = vunpack.c.l.b16 %v678
    %v721 = vunpack.c.l.b16 %v679
    %v722 = vunpack.c.h.b16 %v678
    %v723 = vunpack.c.h.b16 %v679
    %v724 = vunpack.c.l.b16 %v680
    %v725 = vunpack.c.l.b16 %v681
    %v726 = vunpack.c.h.b16 %v680
    %v727 = vunpack.c.h.b16 %v681
    %v728 = vunpack.c.l.b16 %v682
    %v729 = vunpack.c.l.b16 %v683
    %v730 = vunpack.c.h.b16 %v682
    %v731 = vunpack.c.h.b16 %v683
    %v732 = vpack.c.b16 %v701, %v700
    %v733 = vpack.c.b16 %v703, %v702
    %v734 = vpack.c.b16 %v705, %v704
    %v735 = vpack.c.b16 %v707, %v706
    %v736 = vpack.c.b16 %v709, %v708
    %v737 = vpack.c.b16 %v711, %v710
    %v738 = vpack.c.b16 %v713, %v712
    %v739 = vpack.c.b16 %v715, %v714
    %v740 = vpack.c.b16 %v717, %v716
    %v741 = vpack.c.b16 %v719, %v718
    %v742 = vpack.c.b16 %v721, %v720
    %v743 = vpack.c.b16 %v723, %v722
    %v744 = vpack.c.b16 %v725, %v724
    %v745 = vpack.c.b16 %v727, %v726
    %v746 = vpack.c.b16 %v729, %v728
    %v747 = vpack.c.b16 %v731, %v730
    %764 = vst [vmem:[%s4] sm:$0xff] %v732
    %765 = vst [vmem:[%s4 + $0x8] sm:$0xff] %v733
    %766 = vst [vmem:[%s4 + $0x10] sm:$0xff] %v734
    %767 = vst [vmem:[%s4 + $0x18] sm:$0xff] %v735
    %768 = vst [vmem:[%s4 + $0x20] sm:$0xff] %v736
    %769 = vst [vmem:[%s4 + $0x28] sm:$0xff] %v737
    %770 = vst [vmem:[%s4 + $0x30] sm:$0xff] %v738
    %771 = vst [vmem:[%s4 + $0x38] sm:$0xff] %v739
    %772 = vst [vmem:[%s4 + $0x40] sm:$0xff] %v740
    %773 = vst [vmem:[%s4 + $0x48] sm:$0xff] %v741
    %774 = vst [vmem:[%s4 + $0x50] sm:$0xff] %v742
    %775 = vst [vmem:[%s4 + $0x58] sm:$0xff] %v743
    %776 = vst [vmem:[%s4 + $0x60] sm:$0xff] %v744
    %777 = vst [vmem:[%s4 + $0x68] sm:$0xff] %v745
    %778 = vst [vmem:[%s4 + $0x70] sm:$0xff] %v746
    %779 = vst [vmem:[%s4 + $0x78] sm:$0xff] %v747
  $region25: #{forward.18} parent=0 // pred_fallthru
    _
  // Predicated region
  $region26: #{forward.18} parent=0 // pred_check
    _
  $region27: #{forward.18} parent=0 // pred_check_branch
    %781 = sbr.rel (0) target = $region29
  $region28: #{forward.18} parent=0 // pred_region
    _
  $region29: #{forward.18} parent=0 // pred_fallthru
    _
  // Predicated region
  $region30: #{forward.18} parent=0 // pred_check
    _
  $region31: #{forward.18} parent=0 // pred_check_branch
    %783 = sbr.rel (0) target = $region33
  $region32: #{forward.18} parent=0 // pred_region
    _
  $region33: #{forward.18} parent=0 // pred_fallthru
    _

// kernel: forward.19
$region0: #{forward.19}
  #allocation0 [shape = 'u32[]', space=smem, size = 0x4, offset = 0x4, fixed_abs, tag = 'smem constant byte address 0x4 - core index']
  #allocation1 [shape = 'u32[144,128]{1,0:T(1,128)}', space=vmem, size = 0x12000, scoped, tag = 'internal scratch']
  #allocation2 [shape = 'f32[128,3]{1,0:T(8,128)}', space=vmem, size = 0x10000, scoped, tag = 'scratch operand']
  %s0 = inlined_call_operand.vmem [shape: bf16[128,2304], index: 0, kind: input, shape index: {}]
  %s1 = inlined_call_operand.vmem [shape: bf16[2304,3], index: 1, kind: input, shape index: {}]
  %s2 = inlined_call_operand.vmem [shape: f32[1,3], index: 2, kind: input, shape index: {}]
  %s3 = inlined_call_operand.vmem [shape: f32[1,3], index: 3, kind: input, shape index: {}]
  %s4 = inlined_call_operand.vmem [shape: f32[128,3], index: 4, kind: output, shape index: {}]
  %s5 = sld [smem:[#allocation0]]
  $region80: #{forward.19} parent=0
    _
  %s7 = ssub.s32 1, %s5
  %s8 = scalar_select 0, %s7, %s5
  $region1: #{forward.19} parent=0
    #allocation3 [shape = 'u8[393216]{0}', space=vmem, size = 0x60000, scoped, tag = 'input window, operand 0']
    loop: start=0, step=1, limit=5
    $region2: #{forward.19} parent=1 // loop_pre_header
      _
    $region3: #{forward.19} parent=1 // loop_header
      %s10 = sphi 0, %s14
      %p11 = scmp.ge.s32.totalorder %s10, 5
      %s17 = sphi 0, %s29
      %s18 = sphi 0, %s25
      %s19 = sphi 0, %s17
      %s20 = sphi 0, %s18
      %s21 = sphi 0, %s19
      %s22 = sphi 0, %s20
      %s34 = sphi 0, %s36
      %s37 = sphi 0, %s34
      %s38 = sphi 0, %s37
      %s54 = sphi 0, %s38
      %s60 = sphi 0, %s62
      %s63 = sphi 0, %s60
      %s64 = sphi 0, %s63
      %s80 = sphi 0, %s64
      %s84 = sphi 0, %s84
      %s86 = sphi 0, %s84
      %s87 = sphi 0, %s86
      %s101 = sphi 0, %s87
      %s105 = sphi 0, %s105
      %s107 = sphi 0, %s105
      %s108 = sphi 0, %s107
      %s122 = sphi 0, %s108
      %s128 = sphi 0, %s130
      %s131 = sphi 0, %s128
      %s132 = sphi 0, %s131
      %s148 = sphi 0, %s132
    $region4: #{forward.19} parent=1 // loop_header_branch
      %13 = sbr.rel (%p11) target = $region8
    $region5: #{forward.19} parent=1 // loop_body
      %s15 = ssub.s32 %s10, 1
      %s16 = ssub.s32 %s10, 2
      %s23 = sadd.s32 1, %s18
      %p24 = scmp.ge.s32.totalorder %s23, 3
      %s25 = scalar_select %p24, 0, %s23
      %s26 = sadd.s32 1, %s17
      %s27 = scalar_select %p24, %s26, %s17
      %p28 = scmp.ge.s32.totalorder %s27, 1
      %s29 = scalar_select %p28, 0, %s27
      %s30 = ssub.s32 %s17, %s29
      %s31 = ssub.s32 %s18, %s25
      %s32 = sor.u32 %s30, %s31
      %p33 = scmp.eq.s32.totalorder %s32, 0
      %s35 = sadd.s32 %s34, 1
      %s36 = scalar_select %p33, %s34, %s35
      %p39 = pneg %p33
      %p40 = scmp.eq.s32.totalorder %s10, 2
      %p41 = por %p39, %p40
      %p42 = scmp.ne.s32.totalorder %s34, %s37
      %p43 = scmp.eq.s32.totalorder %s10, 0
      %p44 = por %p42, %p43
      %p45 = scmp.ne.s32.totalorder %s34, %s37
      %p46 = scmp.eq.s32.totalorder %s15, 2
      %p47 = por %p45, %p46
      %p48 = scmp.ne.s32.totalorder %s37, %s38
      %p49 = scmp.eq.s32.totalorder %s15, 0
      %p50 = por %p48, %p49
      %p51 = scmp.ne.s32.totalorder %s37, %s38
      %p52 = scmp.eq.s32.totalorder %s16, 2
      %p53 = por %p51, %p52
      %p55 = scmp.ne.s32.totalorder %s38, %s54
      %p56 = scmp.eq.s32.totalorder %s16, 0
      %p57 = por %p55, %p56
      %s58 = ssub.s32 %s18, %s25
      %p59 = scmp.eq.s32.totalorder %s58, 0
      %s61 = sadd.s32 %s60, 1
      %s62 = scalar_select %p59, %s60, %s61
      %p65 = pneg %p59
      %p66 = scmp.eq.s32.totalorder %s10, 2
      %p67 = por %p65, %p66
      %p68 = scmp.ne.s32.totalorder %s60, %s63
      %p69 = scmp.eq.s32.totalorder %s10, 0
      %p70 = por %p68, %p69
      %p71 = scmp.ne.s32.totalorder %s60, %s63
      %p72 = scmp.eq.s32.totalorder %s15, 2
      %p73 = por %p71, %p72
      %p74 = scmp.ne.s32.totalorder %s63, %s64
      %p75 = scmp.eq.s32.totalorder %s15, 0
      %p76 = por %p74, %p75
      %p77 = scmp.ne.s32.totalorder %s63, %s64
      %p78 = scmp.eq.s32.totalorder %s16, 2
      %p79 = por %p77, %p78
      %p81 = scmp.ne.s32.totalorder %s64, %s80
      %p82 = scmp.eq.s32.totalorder %s16, 0
      %p83 = por %p81, %p82
      %s85 = sadd.s32 %s84, 1
      %p88 = scmp.eq.s32.totalorder %s10, 2
      %p89 = scmp.ne.s32.totalorder %s84, %s86
      %p90 = scmp.eq.s32.totalorder %s10, 0
      %p91 = por %p89, %p90
      %p92 = scmp.ne.s32.totalorder %s84, %s86
      %p93 = scmp.eq.s32.totalorder %s15, 2
      %p94 = por %p92, %p93
      %p95 = scmp.ne.s32.totalorder %s86, %s87
      %p96 = scmp.eq.s32.totalorder %s15, 0
      %p97 = por %p95, %p96
      %p98 = scmp.ne.s32.totalorder %s86, %s87
      %p99 = scmp.eq.s32.totalorder %s16, 2
      %p100 = por %p98, %p99
      %p102 = scmp.ne.s32.totalorder %s87, %s101
      %p103 = scmp.eq.s32.totalorder %s16, 0
      %p104 = por %p102, %p103
      %s106 = sadd.s32 %s105, 1
      %p109 = scmp.eq.s32.totalorder %s10, 2
      %p110 = scmp.ne.s32.totalorder %s105, %s107
      %p111 = scmp.eq.s32.totalorder %s10, 0
      %p112 = por %p110, %p111
      %p113 = scmp.ne.s32.totalorder %s105, %s107
      %p114 = scmp.eq.s32.totalorder %s15, 2
      %p115 = por %p113, %p114
      %p116 = scmp.ne.s32.totalorder %s107, %s108
      %p117 = scmp.eq.s32.totalorder %s15, 0
      %p118 = por %p116, %p117
      %p119 = scmp.ne.s32.totalorder %s107, %s108
      %p120 = scmp.eq.s32.totalorder %s16, 2
      %p121 = por %p119, %p120
      %p123 = scmp.ne.s32.totalorder %s108, %s122
      %p124 = scmp.eq.s32.totalorder %s16, 0
      %p125 = por %p123, %p124
      %s126 = ssub.s32 %s17, %s29
      %p127 = scmp.eq.s32.totalorder %s126, 0
      %s129 = sadd.s32 %s128, 1
      %s130 = scalar_select %p127, %s128, %s129
      %p133 = pneg %p127
      %p134 = scmp.eq.s32.totalorder %s10, 2
      %p135 = por %p133, %p134
      %p136 = scmp.ne.s32.totalorder %s128, %s131
      %p137 = scmp.eq.s32.totalorder %s10, 0
      %p138 = por %p136, %p137
      %p139 = scmp.ne.s32.totalorder %s128, %s131
      %p140 = scmp.eq.s32.totalorder %s15, 2
      %p141 = por %p139, %p140
      %p142 = scmp.ne.s32.totalorder %s131, %s132
      %p143 = scmp.eq.s32.totalorder %s15, 0
      %p144 = por %p142, %p143
      %p145 = scmp.ne.s32.totalorder %s131, %s132
      %p146 = scmp.eq.s32.totalorder %s16, 2
      %p147 = por %p145, %p146
      %p149 = scmp.ne.s32.totalorder %s132, %s148
      %p150 = scmp.eq.s32.totalorder %s16, 0
      %p151 = por %p149, %p150
      %p152 = scmp.le.s32.totalorder 1, %s10
      %p153 = scmp.lt.s32.totalorder %s10, 4
      %p154 = pnand %p152, %p153
      %p155 = pneg %p154
      // Predicated region
      $region9: #{forward.19} parent=5 // pred_check
        _
      $region10: #{forward.19} parent=5 // pred_check_branch
        %157 = sbr.rel (%p154) target = $region12
      $region11: #{forward.19} parent=5 // pred_region
        %s158 = ssub.s32 %s10, 1
        // Predicated region
        $region13: #{forward.19} parent=11 // pred_check
          %p159 = pneg %p97
        $region14: #{forward.19} parent=11 // pred_check_branch
          %161 = sbr.rel (%p159) target = $region16
        $region15: #{forward.19} parent=11 // pred_region
          _
        $region16: #{forward.19} parent=11 // pred_fallthru
          _
        // Predicated region
        $region17: #{forward.19} parent=11 // pred_check
          %p162 = pneg %p118
        $region18: #{forward.19} parent=11 // pred_check_branch
          %164 = sbr.rel (%p162) target = $region20
        $region19: #{forward.19} parent=11 // pred_region
          _
        $region20: #{forward.19} parent=11 // pred_fallthru
          _
      $region12: #{forward.19} parent=5 // pred_fallthru
        _
      %p165 = scmp.lt.s32.totalorder %s10, 3
      // Predicated region
      $region21: #{forward.19} parent=5 // pred_check
        %p166 = pneg %p165
      $region22: #{forward.19} parent=5 // pred_check_branch
        %168 = sbr.rel (%p166) target = $region24
      $region23: #{forward.19} parent=5 // pred_region
        // Predicated region
        $region25: #{forward.19} parent=23 // pred_check
          %p169 = pneg %p44
        $region26: #{forward.19} parent=23 // pred_check_branch
          %171 = sbr.rel (%p169) target = $region28
        $region27: #{forward.19} parent=23 // pred_region
          %s172 = sand.u32 %s34, 1
          %s173 = sand.u32 %s34, 1
          %s174 = smul.addr %s173, 384
          %s175 = scalar_lea.vmem [#allocation3], %s174
          %s176 = smul.u32 16, %s17
          %s177 = smul.u32 6, %s18
          %s178 = smul.addr %s176, 18
          %s179 = sadd.s32 %s177, %s178
          %s180 = smul.addr %s179, 4
          %s181 = scalar_lea.vmem %s0, %s180
          // Predicated region
          $region29: #{forward.19} parent=27 // pred_check
            _
          $region30: #{forward.19} parent=27 // pred_check_branch
            %183 = sbr.rel (0) target = $region32
          $region31: #{forward.19} parent=27 // pred_region
            // Predicated region
            $region33: #{forward.19} parent=31 // pred_check
              _
            $region34: #{forward.19} parent=31 // pred_check_branch
              %185 = sbr.rel (0) target = $region36
            $region35: #{forward.19} parent=31 // pred_region
              loop: start=0, step=1, limit=1
              $region37: #{forward.19} parent=35 // loop_pre_header
                _
              $region38: #{forward.19} parent=35 // loop_header
                %s187 = sphi 0, %s191
                %p188 = scmp.ge.s32.totalorder %s187, 1
                %s192 = sphi %s181, %s181
                %s193 = sphi %s175, %s175
              $region39: #{forward.19} parent=35 // loop_header_branch
                %190 = sbr.rel (%p188) target = $region43
              $region40: #{forward.19} parent=35 // loop_body
                %v194 = vld [vmem:[%s192] sm:$0xff]
                %195 = vst [vmem:[%s193] sm:$0xff] %v194
                %v196 = vld [vmem:[%s192 + $0x8] sm:$0xff]
                %197 = vst [vmem:[%s193 + $0x8] sm:$0xff] %v196
                %v198 = vld [vmem:[%s192 + $0x10] sm:$0xff]
                %199 = vst [vmem:[%s193 + $0x10] sm:$0xff] %v198
                %v200 = vld [vmem:[%s192 + $0x48] sm:$0xff]
                %201 = vst [vmem:[%s193 + $0x18] sm:$0xff] %v200
                %v202 = vld [vmem:[%s192 + $0x50] sm:$0xff]
                %203 = vst [vmem:[%s193 + $0x20] sm:$0xff] %v202
                %v204 = vld [vmem:[%s192 + $0x58] sm:$0xff]
                %205 = vst [vmem:[%s193 + $0x28] sm:$0xff] %v204
                %v206 = vld [vmem:[%s192 + $0x90] sm:$0xff]
                %207 = vst [vmem:[%s193 + $0x30] sm:$0xff] %v206
                %v208 = vld [vmem:[%s192 + $0x98] sm:$0xff]
                %209 = vst [vmem:[%s193 + $0x38] sm:$0xff] %v208
                %v210 = vld [vmem:[%s192 + $0xa0] sm:$0xff]
                %211 = vst [vmem:[%s193 + $0x40] sm:$0xff] %v210
                %v212 = vld [vmem:[%s192 + $0xd8] sm:$0xff]
                %213 = vst [vmem:[%s193 + $0x48] sm:$0xff] %v212
                %v214 = vld [vmem:[%s192 + $0xe0] sm:$0xff]
                %215 = vst [vmem:[%s193 + $0x50] sm:$0xff] %v214
                %v216 = vld [vmem:[%s192 + $0xe8] sm:$0xff]
                %217 = vst [vmem:[%s193 + $0x58] sm:$0xff] %v216
                %v218 = vld [vmem:[%s192 + $0x120] sm:$0xff]
                %219 = vst [vmem:[%s193 + $0x60] sm:$0xff] %v218
                %v220 = vld [vmem:[%s192 + $0x128] sm:$0xff]
                %221 = vst [vmem:[%s193 + $0x68] sm:$0xff] %v220
                %v222 = vld [vmem:[%s192 + $0x130] sm:$0xff]
                %223 = vst [vmem:[%s193 + $0x70] sm:$0xff] %v222
                %v224 = vld [vmem:[%s192 + $0x168] sm:$0xff]
                %225 = vst [vmem:[%s193 + $0x78] sm:$0xff] %v224
                %v226 = vld [vmem:[%s192 + $0x170] sm:$0xff]
                %227 = vst [vmem:[%s193 + $0x80] sm:$0xff] %v226
                %v228 = vld [vmem:[%s192 + $0x178] sm:$0xff]
                %229 = vst [vmem:[%s193 + $0x88] sm:$0xff] %v228
                %v230 = vld [vmem:[%s192 + $0x1b0] sm:$0xff]
                %231 = vst [vmem:[%s193 + $0x90] sm:$0xff] %v230
                %v232 = vld [vmem:[%s192 + $0x1b8] sm:$0xff]
                %233 = vst [vmem:[%s193 + $0x98] sm:$0xff] %v232
                %v234 = vld [vmem:[%s192 + $0x1c0] sm:$0xff]
                %235 = vst [vmem:[%s193 + $0xa0] sm:$0xff] %v234
                %v236 = vld [vmem:[%s192 + $0x1f8] sm:$0xff]
                %237 = vst [vmem:[%s193 + $0xa8] sm:$0xff] %v236
                %v238 = vld [vmem:[%s192 + $0x200] sm:$0xff]
                %239 = vst [vmem:[%s193 + $0xb0] sm:$0xff] %v238
                %v240 = vld [vmem:[%s192 + $0x208] sm:$0xff]
                %241 = vst [vmem:[%s193 + $0xb8] sm:$0xff] %v240
                %v242 = vld [vmem:[%s192 + $0x240] sm:$0xff]
                %243 = vst [vmem:[%s193 + $0xc0] sm:$0xff] %v242
                %v244 = vld [vmem:[%s192 + $0x248] sm:$0xff]
                %245 = vst [vmem:[%s193 + $0xc8] sm:$0xff] %v244
                %v246 = vld [vmem:[%s192 + $0x250] sm:$0xff]
                %247 = vst [vmem:[%s193 + $0xd0] sm:$0xff] %v246
                %v248 = vld [vmem:[%s192 + $0x288] sm:$0xff]
                %249 = vst [vmem:[%s193 + $0xd8] sm:$0xff] %v248
                %v250 = vld [vmem:[%s192 + $0x290] sm:$0xff]
                %251 = vst [vmem:[%s193 + $0xe0] sm:$0xff] %v250
                %v252 = vld [vmem:[%s192 + $0x298] sm:$0xff]
                %253 = vst [vmem:[%s193 + $0xe8] sm:$0xff] %v252
                %v254 = vld [vmem:[%s192 + $0x2d0] sm:$0xff]
                %255 = vst [vmem:[%s193 + $0xf0] sm:$0xff] %v254
                %v256 = vld [vmem:[%s192 + $0x2d8] sm:$0xff]
                %257 = vst [vmem:[%s193 + $0xf8] sm:$0xff] %v256
                %v258 = vld [vmem:[%s192 + $0x2e0] sm:$0xff]
                %259 = vst [vmem:[%s193 + $0x100] sm:$0xff] %v258
                %v260 = vld [vmem:[%s192 + $0x318] sm:$0xff]
                %261 = vst [vmem:[%s193 + $0x108] sm:$0xff] %v260
                %v262 = vld [vmem:[%s192 + $0x320] sm:$0xff]
                %263 = vst [vmem:[%s193 + $0x110] sm:$0xff] %v262
                %v264 = vld [vmem:[%s192 + $0x328] sm:$0xff]
                %265 = vst [vmem:[%s193 + $0x118] sm:$0xff] %v264
                %v266 = vld [vmem:[%s192 + $0x360] sm:$0xff]
                %267 = vst [vmem:[%s193 + $0x120] sm:$0xff] %v266
                %v268 = vld [vmem:[%s192 + $0x368] sm:$0xff]
                %269 = vst [vmem:[%s193 + $0x128] sm:$0xff] %v268
                %v270 = vld [vmem:[%s192 + $0x370] sm:$0xff]
                %271 = vst [vmem:[%s193 + $0x130] sm:$0xff] %v270
                %v272 = vld [vmem:[%s192 + $0x3a8] sm:$0xff]
                %273 = vst [vmem:[%s193 + $0x138] sm:$0xff] %v272
                %v274 = vld [vmem:[%s192 + $0x3b0] sm:$0xff]
                %275 = vst [vmem:[%s193 + $0x140] sm:$0xff] %v274
                %v276 = vld [vmem:[%s192 + $0x3b8] sm:$0xff]
                %277 = vst [vmem:[%s193 + $0x148] sm:$0xff] %v276
                %v278 = vld [vmem:[%s192 + $0x3f0] sm:$0xff]
                %279 = vst [vmem:[%s193 + $0x150] sm:$0xff] %v278
                %v280 = vld [vmem:[%s192 + $0x3f8] sm:$0xff]
                %281 = vst [vmem:[%s193 + $0x158] sm:$0xff] %v280
                %v282 = vld [vmem:[%s192 + $0x400] sm:$0xff]
                %283 = vst [vmem:[%s193 + $0x160] sm:$0xff] %v282
                %v284 = vld [vmem:[%s192 + $0x438] sm:$0xff]
                %285 = vst [vmem:[%s193 + $0x168] sm:$0xff] %v284
                %v286 = vld [vmem:[%s192 + $0x440] sm:$0xff]
                %287 = vst [vmem:[%s193 + $0x170] sm:$0xff] %v286
                %v288 = vld [vmem:[%s192 + $0x448] sm:$0xff]
                %289 = vst [vmem:[%s193 + $0x178] sm:$0xff] %v288
              $region41: #{forward.19} parent=35 // loop_footer
                %s191 = sadd.s32 1, %s187
              $region42: #{forward.19} parent=35 // loop_footer_branch
                %186 = sbr.rel target = $region38
              $region43: #{forward.19} parent=35 // loop_exit
                _
            $region36: #{forward.19} parent=31 // pred_fallthru
              _
            // Predicated region
            $region44: #{forward.19} parent=31 // pred_check
              _
            $region45: #{forward.19} parent=31 // pred_check_branch
              %291 = sbr.rel target = $region47
            $region46: #{forward.19} parent=31 // pred_region
              _
            $region47: #{forward.19} parent=31 // pred_fallthru
              _
          $region32: #{forward.19} parent=27 // pred_fallthru
            _
          %292 = vnop
        $region28: #{forward.19} parent=23 // pred_fallthru
          _
        // Predicated region
        $region48: #{forward.19} parent=23 // pred_check
          %p293 = pneg %p70
        $region49: #{forward.19} parent=23 // pred_check_branch
          %295 = sbr.rel (%p293) target = $region51
        $region50: #{forward.19} parent=23 // pred_region
          %s296 = smul.u32 96, %s18
          %p297 = scmp.lt.s32.totalorder %s296, 287
          %s298 = scalar_select %p297, %s296, 287
          %s299 = smul.addr %s298, 4
          %s300 = scalar_lea.vmem %s1, %s299
          %s301 = smul.u32 96, %s18
        $region51: #{forward.19} parent=23 // pred_fallthru
          _
      $region24: #{forward.19} parent=5 // pred_fallthru
        _
      %p302 = scmp.le.s32.totalorder 1, %s10
      %p303 = scmp.lt.s32.totalorder %s10, 4
      %p304 = pnand %p302, %p303
      %p305 = pneg %p304
      // Predicated region
      $region52: #{forward.19} parent=5 // pred_check
        _
      $region53: #{forward.19} parent=5 // pred_check_branch
        %307 = sbr.rel (%p304) target = $region55
      $region54: #{forward.19} parent=5 // pred_region
        %s308 = ssub.s32 %s10, 1
        %s309 = sand.u32 %s37, 1
        %s310 = sand.u32 %s37, 1
        %s311 = smul.addr %s310, 384
        %s312 = scalar_lea.vmem [#allocation3], %s311
        // Predicated region
        $region56: #{forward.19} parent=54 // pred_check
          %p313 = pneg %p50
        $region57: #{forward.19} parent=54 // pred_check_branch
          %315 = sbr.rel (%p313) target = $region59
        $region58: #{forward.19} parent=54 // pred_region
          _
        $region59: #{forward.19} parent=54 // pred_fallthru
          _
        %s316 = sand.u32 %s37, 1
        %s317 = sand.u32 %s37, 1
        %s318 = smul.addr %s317, 384
        %s319 = scalar_lea.vmem [#allocation3], %s318
        %p320 = pneg %p50
        %p321 = pneg %p47
        %s322 = smul.u32 96, %s20
        %p323 = scmp.lt.s32.totalorder %s322, 287
        %s324 = scalar_select %p323, %s322, 287
        %s325 = smul.addr %s324, 4
        %s326 = scalar_lea.vmem %s1, %s325
        %p327 = pneg %p76
        %p328 = pneg %p73
        %p329 = pneg %p97
        %p330 = pneg %p94
        %p331 = pneg %p118
        %p332 = pneg %p115
        %p333 = pneg %p144
        %p334 = pneg %p141
        %s335 = smul.u32 16, %s19
        %p336 = scmp.lt.s32.totalorder %s335, 15
        %s337 = scalar_select %p336, %s335, 15
        %s338 = smul.addr %s337, 8
        %s339 = scalar_lea.vmem %s4, %s338
        %s340 = smul.u32 16, %s19
        %s341 = smul.u32 6, %s20
        %s342 = smul.u32 96, %s20
        %p343 = scmp.lt.s32.totalorder %s342, 287
        %s344 = scalar_select %p343, %s342, 287
        %s345 = smul.addr %s344, 4
        %s346 = scalar_lea.vmem %s1, %s345
        %s347 = smul.u32 96, %s20
        %s348 = smul.u32 16, %s19
        %p349 = scmp.lt.s32.totalorder %s348, 15
        %s350 = scalar_select %p349, %s348, 15
        %s351 = smul.addr %s350, 8
        %s352 = scalar_lea.vmem %s4, %s351
        %s353 = smul.u32 16, %s19
        %p355 = scmp.eq.s32.totalorder %s20, 0
        // Predicated region
        $region60: #{forward.19} parent=54 // pred_check
          %p356 = pneg %p355
        $region61: #{forward.19} parent=54 // pred_check_branch
          %358 = sbr.rel (%p356) target = $region63
        $region62: #{forward.19} parent=54 // pred_region
          %vm359 = vcmask 23552
          %360 = vst.msk [vmem:[#allocation2] sm:$0xff] %vm359, 0.0
          %361 = vst.msk [vmem:[#allocation2 + $0x8] sm:$0xff] %vm359, 0.0
          %362 = vst.msk [vmem:[#allocation2 + $0x10] sm:$0xff] %vm359, 0.0
          %363 = vst.msk [vmem:[#allocation2 + $0x18] sm:$0xff] %vm359, 0.0
          %364 = vst.msk [vmem:[#allocation2 + $0x20] sm:$0xff] %vm359, 0.0
          %365 = vst.msk [vmem:[#allocation2 + $0x28] sm:$0xff] %vm359, 0.0
          %366 = vst.msk [vmem:[#allocation2 + $0x30] sm:$0xff] %vm359, 0.0
          %367 = vst.msk [vmem:[#allocation2 + $0x38] sm:$0xff] %vm359, 0.0
          %368 = vst.msk [vmem:[#allocation2 + $0x40] sm:$0xff] %vm359, 0.0
          %369 = vst.msk [vmem:[#allocation2 + $0x48] sm:$0xff] %vm359, 0.0
          %370 = vst.msk [vmem:[#allocation2 + $0x50] sm:$0xff] %vm359, 0.0
          %371 = vst.msk [vmem:[#allocation2 + $0x58] sm:$0xff] %vm359, 0.0
          %372 = vst.msk [vmem:[#allocation2 + $0x60] sm:$0xff] %vm359, 0.0
          %373 = vst.msk [vmem:[#allocation2 + $0x68] sm:$0xff] %vm359, 0.0
          %374 = vst.msk [vmem:[#allocation2 + $0x70] sm:$0xff] %vm359, 0.0
          %375 = vst.msk [vmem:[#allocation2 + $0x78] sm:$0xff] %vm359, 0.0
        $region63: #{forward.19} parent=54 // pred_fallthru
          _
        %v376 = vld [vmem:[#allocation2] sm:$0xff]
        %v377 = vld [vmem:[#allocation2 + $0x8] sm:$0xff]
        %v378 = vld [vmem:[#allocation2 + $0x10] sm:$0xff]
        %v379 = vld [vmem:[#allocation2 + $0x18] sm:$0xff]
        %v380 = vld [vmem:[#allocation2 + $0x20] sm:$0xff]
        %v381 = vld [vmem:[#allocation2 + $0x28] sm:$0xff]
        %v382 = vld [vmem:[#allocation2 + $0x30] sm:$0xff]
        %v383 = vld [vmem:[#allocation2 + $0x38] sm:$0xff]
        %v384 = vld [vmem:[#allocation2 + $0x40] sm:$0xff]
        %v385 = vld [vmem:[#allocation2 + $0x48] sm:$0xff]
        %v386 = vld [vmem:[#allocation2 + $0x50] sm:$0xff]
        %v387 = vld [vmem:[#allocation2 + $0x58] sm:$0xff]
        %v388 = vld [vmem:[#allocation2 + $0x60] sm:$0xff]
        %v389 = vld [vmem:[#allocation2 + $0x68] sm:$0xff]
        %v390 = vld [vmem:[#allocation2 + $0x70] sm:$0xff]
        %v391 = vld [vmem:[#allocation2 + $0x78] sm:$0xff]
        %v392 = vld [vmem:[%s312] sm:$0xff]
        %v393 = vld [vmem:[%s312 + $0x8] sm:$0xff]
        %v394 = vld [vmem:[%s312 + $0x10] sm:$0xff]
        %v395 = vld [vmem:[%s312 + $0x18] sm:$0xff]
        %v396 = vld [vmem:[%s312 + $0x20] sm:$0xff]
        %v397 = vld [vmem:[%s312 + $0x28] sm:$0xff]
        %v398 = vld [vmem:[%s312 + $0x30] sm:$0xff]
        %v399 = vld [vmem:[%s312 + $0x38] sm:$0xff]
        %v400 = vld [vmem:[%s312 + $0x40] sm:$0xff]
        %v401 = vld [vmem:[%s312 + $0x48] sm:$0xff]
        %v402 = vld [vmem:[%s312 + $0x50] sm:$0xff]
        %v403 = vld [vmem:[%s312 + $0x58] sm:$0xff]
        %v404 = vld [vmem:[%s312 + $0x60] sm:$0xff]
        %v405 = vld [vmem:[%s312 + $0x68] sm:$0xff]
        %v406 = vld [vmem:[%s312 + $0x70] sm:$0xff]
        %v407 = vld [vmem:[%s312 + $0x78] sm:$0xff]
        %v408 = vld [vmem:[%s312 + $0x80] sm:$0xff]
        %v409 = vld [vmem:[%s312 + $0x88] sm:$0xff]
        %v410 = vld [vmem:[%s312 + $0x90] sm:$0xff]
        %v411 = vld [vmem:[%s312 + $0x98] sm:$0xff]
        %v412 = vld [vmem:[%s312 + $0xa0] sm:$0xff]
        %v413 = vld [vmem:[%s312 + $0xa8] sm:$0xff]
        %v414 = vld [vmem:[%s312 + $0xb0] sm:$0xff]
        %v415 = vld [vmem:[%s312 + $0xb8] sm:$0xff]
        %v416 = vld [vmem:[%s312 + $0xc0] sm:$0xff]
        %v417 = vld [vmem:[%s312 + $0xc8] sm:$0xff]
        %v418 = vld [vmem:[%s312 + $0xd0] sm:$0xff]
        %v419 = vld [vmem:[%s312 + $0xd8] sm:$0xff]
        %v420 = vld [vmem:[%s312 + $0xe0] sm:$0xff]
        %v421 = vld [vmem:[%s312 + $0xe8] sm:$0xff]
        %v422 = vld [vmem:[%s312 + $0xf0] sm:$0xff]
        %v423 = vld [vmem:[%s312 + $0xf8] sm:$0xff]
        %v424 = vld [vmem:[%s312 + $0x100] sm:$0xff]
        %v425 = vld [vmem:[%s312 + $0x108] sm:$0xff]
        %v426 = vld [vmem:[%s312 + $0x110] sm:$0xff]
        %v427 = vld [vmem:[%s312 + $0x118] sm:$0xff]
        %v428 = vld [vmem:[%s312 + $0x120] sm:$0xff]
        %v429 = vld [vmem:[%s312 + $0x128] sm:$0xff]
        %v430 = vld [vmem:[%s312 + $0x130] sm:$0xff]
        %v431 = vld [vmem:[%s312 + $0x138] sm:$0xff]
        %v432 = vld [vmem:[%s312 + $0x140] sm:$0xff]
        %v433 = vld [vmem:[%s312 + $0x148] sm:$0xff]
        %v434 = vld [vmem:[%s312 + $0x150] sm:$0xff]
        %v435 = vld [vmem:[%s312 + $0x158] sm:$0xff]
        %v436 = vld [vmem:[%s312 + $0x160] sm:$0xff]
        %v437 = vld [vmem:[%s312 + $0x168] sm:$0xff]
        %v438 = vld [vmem:[%s312 + $0x170] sm:$0xff]
        %v439 = vld [vmem:[%s312 + $0x178] sm:$0xff]
        %v440 = vld [vmem:[%s346] sm:$0xf]
        %v441 = vld [vmem:[%s346 + $0x4] sm:$0xf]
        %v442 = vld [vmem:[%s346 + $0x8] sm:$0xf]
        %v443 = vld [vmem:[%s346 + $0xc] sm:$0xf]
        %v444 = vld [vmem:[%s346 + $0x10] sm:$0xf]
        %v445 = vld [vmem:[%s346 + $0x14] sm:$0xf]
        %v446 = vld [vmem:[%s346 + $0x18] sm:$0xf]
        %v447 = vld [vmem:[%s346 + $0x1c] sm:$0xf]
        %v448 = vld [vmem:[%s346 + $0x20] sm:$0xf]
        %v449 = vld [vmem:[%s346 + $0x24] sm:$0xf]
        %v450 = vld [vmem:[%s346 + $0x28] sm:$0xf]
        %v451 = vld [vmem:[%s346 + $0x2c] sm:$0xf]
        %v452 = vld [vmem:[%s346 + $0x30] sm:$0xf]
        %v453 = vld [vmem:[%s346 + $0x34] sm:$0xf]
        %v454 = vld [vmem:[%s346 + $0x38] sm:$0xf]
        %v455 = vld [vmem:[%s346 + $0x3c] sm:$0xf]
        %v456 = vld [vmem:[%s346 + $0x40] sm:$0xf]
        %v457 = vld [vmem:[%s346 + $0x44] sm:$0xf]
        %v458 = vld [vmem:[%s346 + $0x48] sm:$0xf]
        %v459 = vld [vmem:[%s346 + $0x4c] sm:$0xf]
        %v460 = vld [vmem:[%s346 + $0x50] sm:$0xf]
        %v461 = vld [vmem:[%s346 + $0x54] sm:$0xf]
        %v462 = vld [vmem:[%s346 + $0x58] sm:$0xf]
        %v463 = vld [vmem:[%s346 + $0x5c] sm:$0xf]
        %v464 = vld [vmem:[%s346 + $0x60] sm:$0xf]
        %v465 = vld [vmem:[%s346 + $0x64] sm:$0xf]
        %v466 = vld [vmem:[%s346 + $0x68] sm:$0xf]
        %v467 = vld [vmem:[%s346 + $0x6c] sm:$0xf]
        %v468 = vld [vmem:[%s346 + $0x70] sm:$0xf]
        %v469 = vld [vmem:[%s346 + $0x74] sm:$0xf]
        %v470 = vld [vmem:[%s346 + $0x78] sm:$0xf]
        %v471 = vld [vmem:[%s346 + $0x7c] sm:$0xf]
        %v472 = vld [vmem:[%s346 + $0x80] sm:$0xf]
        %v473 = vld [vmem:[%s346 + $0x84] sm:$0xf]
        %v474 = vld [vmem:[%s346 + $0x88] sm:$0xf]
        %v475 = vld [vmem:[%s346 + $0x8c] sm:$0xf]
        %v476 = vld [vmem:[%s346 + $0x90] sm:$0xf]
        %v477 = vld [vmem:[%s346 + $0x94] sm:$0xf]
        %v478 = vld [vmem:[%s346 + $0x98] sm:$0xf]
        %v479 = vld [vmem:[%s346 + $0x9c] sm:$0xf]
        %v480 = vld [vmem:[%s346 + $0xa0] sm:$0xf]
        %v481 = vld [vmem:[%s346 + $0xa4] sm:$0xf]
        %v482 = vld [vmem:[%s346 + $0xa8] sm:$0xf]
        %v483 = vld [vmem:[%s346 + $0xac] sm:$0xf]
        %v484 = vld [vmem:[%s346 + $0xb0] sm:$0xf]
        %v485 = vld [vmem:[%s346 + $0xb4] sm:$0xf]
        %v486 = vld [vmem:[%s346 + $0xb8] sm:$0xf]
        %v487 = vld [vmem:[%s346 + $0xbc] sm:$0xf]
        %v488 = vld [vmem:[%s346 + $0xc0] sm:$0xf]
        %v489 = vld [vmem:[%s346 + $0xc4] sm:$0xf]
        %v490 = vld [vmem:[%s346 + $0xc8] sm:$0xf]
        %v491 = vld [vmem:[%s346 + $0xcc] sm:$0xf]
        %v492 = vld [vmem:[%s346 + $0xd0] sm:$0xf]
        %v493 = vld [vmem:[%s346 + $0xd4] sm:$0xf]
        %v494 = vld [vmem:[%s346 + $0xd8] sm:$0xf]
        %v495 = vld [vmem:[%s346 + $0xdc] sm:$0xf]
        %v496 = vld [vmem:[%s346 + $0xe0] sm:$0xf]
        %v497 = vld [vmem:[%s346 + $0xe4] sm:$0xf]
        %v498 = vld [vmem:[%s346 + $0xe8] sm:$0xf]
        %v499 = vld [vmem:[%s346 + $0xec] sm:$0xf]
        %v500 = vld [vmem:[%s346 + $0xf0] sm:$0xf]
        %v501 = vld [vmem:[%s346 + $0xf4] sm:$0xf]
        %v502 = vld [vmem:[%s346 + $0xf8] sm:$0xf]
        %v503 = vld [vmem:[%s346 + $0xfc] sm:$0xf]
        %v504 = vld [vmem:[%s346 + $0x100] sm:$0xf]
        %v505 = vld [vmem:[%s346 + $0x104] sm:$0xf]
        %v506 = vld [vmem:[%s346 + $0x108] sm:$0xf]
        %v507 = vld [vmem:[%s346 + $0x10c] sm:$0xf]
        %v508 = vld [vmem:[%s346 + $0x110] sm:$0xf]
        %v509 = vld [vmem:[%s346 + $0x114] sm:$0xf]
        %v510 = vld [vmem:[%s346 + $0x118] sm:$0xf]
        %v511 = vld [vmem:[%s346 + $0x11c] sm:$0xf]
        %v512 = vld [vmem:[%s346 + $0x120] sm:$0xf]
        %v513 = vld [vmem:[%s346 + $0x124] sm:$0xf]
        %v514 = vld [vmem:[%s346 + $0x128] sm:$0xf]
        %v515 = vld [vmem:[%s346 + $0x12c] sm:$0xf]
        %v516 = vld [vmem:[%s346 + $0x130] sm:$0xf]
        %v517 = vld [vmem:[%s346 + $0x134] sm:$0xf]
        %v518 = vld [vmem:[%s346 + $0x138] sm:$0xf]
        %v519 = vld [vmem:[%s346 + $0x13c] sm:$0xf]
        %v520 = vld [vmem:[%s346 + $0x140] sm:$0xf]
        %v521 = vld [vmem:[%s346 + $0x144] sm:$0xf]
        %v522 = vld [vmem:[%s346 + $0x148] sm:$0xf]
        %v523 = vld [vmem:[%s346 + $0x14c] sm:$0xf]
        %v524 = vld [vmem:[%s346 + $0x150] sm:$0xf]
        %v525 = vld [vmem:[%s346 + $0x154] sm:$0xf]
        %v526 = vld [vmem:[%s346 + $0x158] sm:$0xf]
        %v527 = vld [vmem:[%s346 + $0x15c] sm:$0xf]
        %v528 = vld [vmem:[%s346 + $0x160] sm:$0xf]
        %v529 = vld [vmem:[%s346 + $0x164] sm:$0xf]
        %v530 = vld [vmem:[%s346 + $0x168] sm:$0xf]
        %v531 = vld [vmem:[%s346 + $0x16c] sm:$0xf]
        %v532 = vld [vmem:[%s346 + $0x170] sm:$0xf]
        %v533 = vld [vmem:[%s346 + $0x174] sm:$0xf]
        %v534 = vld [vmem:[%s346 + $0x178] sm:$0xf]
        %v535 = vld [vmem:[%s346 + $0x17c] sm:$0xf]
        %v584 = vunpack.c.l.b16 %v392
        %v585 = vunpack.c.h.b16 %v392
        %v586 = vunpack.c.l.b16 %v393
        %v587 = vunpack.c.h.b16 %v393
        %v588 = vunpack.c.l.b16 %v394
        %v589 = vunpack.c.h.b16 %v394
        %v590 = vunpack.c.l.b16 %v395
        %v591 = vunpack.c.h.b16 %v395
        %v592 = vunpack.c.l.b16 %v396
        %v593 = vunpack.c.h.b16 %v396
        %v594 = vunpack.c.l.b16 %v397
        %v595 = vunpack.c.h.b16 %v397
        %v596 = vunpack.c.l.b16 %v398
        %v597 = vunpack.c.h.b16 %v398
        %v598 = vunpack.c.l.b16 %v399
        %v599 = vunpack.c.h.b16 %v399
        %v600 = vunpack.c.l.b16 %v400
        %v601 = vunpack.c.h.b16 %v400
        %v602 = vunpack.c.l.b16 %v401
        %v603 = vunpack.c.h.b16 %v401
        %v604 = vunpack.c.l.b16 %v402
        %v605 = vunpack.c.h.b16 %v402
        %v606 = vunpack.c.l.b16 %v403
        %v607 = vunpack.c.h.b16 %v403
        %v608 = vunpack.c.l.b16 %v404
        %v609 = vunpack.c.h.b16 %v404
        %v610 = vunpack.c.l.b16 %v405
        %v611 = vunpack.c.h.b16 %v405
        %v612 = vunpack.c.l.b16 %v406
        %v613 = vunpack.c.h.b16 %v406
        %v614 = vunpack.c.l.b16 %v407
        %v615 = vunpack.c.h.b16 %v407
        %v616 = vunpack.c.l.b16 %v408
        %v617 = vunpack.c.h.b16 %v408
        %v618 = vunpack.c.l.b16 %v409
        %v619 = vunpack.c.h.b16 %v409
        %v620 = vunpack.c.l.b16 %v410
        %v621 = vunpack.c.h.b16 %v410
        %v622 = vunpack.c.l.b16 %v411
        %v623 = vunpack.c.h.b16 %v411
        %v624 = vunpack.c.l.b16 %v412
        %v625 = vunpack.c.h.b16 %v412
        %v626 = vunpack.c.l.b16 %v413
        %v627 = vunpack.c.h.b16 %v413
        %v628 = vunpack.c.l.b16 %v414
        %v629 = vunpack.c.h.b16 %v414
        %v630 = vunpack.c.l.b16 %v415
        %v631 = vunpack.c.h.b16 %v415
        %v632 = vunpack.c.l.b16 %v416
        %v633 = vunpack.c.h.b16 %v416
        %v634 = vunpack.c.l.b16 %v417
        %v635 = vunpack.c.h.b16 %v417
        %v636 = vunpack.c.l.b16 %v418
        %v637 = vunpack.c.h.b16 %v418
        %v638 = vunpack.c.l.b16 %v419
        %v639 = vunpack.c.h.b16 %v419
        %v640 = vunpack.c.l.b16 %v420
        %v641 = vunpack.c.h.b16 %v420
        %v642 = vunpack.c.l.b16 %v421
        %v643 = vunpack.c.h.b16 %v421
        %v644 = vunpack.c.l.b16 %v422
        %v645 = vunpack.c.h.b16 %v422
        %v646 = vunpack.c.l.b16 %v423
        %v647 = vunpack.c.h.b16 %v423
        %v648 = vunpack.c.l.b16 %v424
        %v649 = vunpack.c.h.b16 %v424
        %v650 = vunpack.c.l.b16 %v425
        %v651 = vunpack.c.h.b16 %v425
        %v652 = vunpack.c.l.b16 %v426
        %v653 = vunpack.c.h.b16 %v426
        %v654 = vunpack.c.l.b16 %v427
        %v655 = vunpack.c.h.b16 %v427
        %v656 = vunpack.c.l.b16 %v428
        %v657 = vunpack.c.h.b16 %v428
        %v658 = vunpack.c.l.b16 %v429
        %v659 = vunpack.c.h.b16 %v429
        %v660 = vunpack.c.l.b16 %v430
        %v661 = vunpack.c.h.b16 %v430
        %v662 = vunpack.c.l.b16 %v431
        %v663 = vunpack.c.h.b16 %v431
        %v664 = vunpack.c.l.b16 %v432
        %v665 = vunpack.c.h.b16 %v432
        %v666 = vunpack.c.l.b16 %v433
        %v667 = vunpack.c.h.b16 %v433
        %v668 = vunpack.c.l.b16 %v434
        %v669 = vunpack.c.h.b16 %v434
        %v670 = vunpack.c.l.b16 %v435
        %v671 = vunpack.c.h.b16 %v435
        %v672 = vunpack.c.l.b16 %v436
        %v673 = vunpack.c.h.b16 %v436
        %v674 = vunpack.c.l.b16 %v437
        %v675 = vunpack.c.h.b16 %v437
        %v676 = vunpack.c.l.b16 %v438
        %v677 = vunpack.c.h.b16 %v438
        %v678 = vunpack.c.l.b16 %v439
        %v679 = vunpack.c.h.b16 %v439
        %v680 = vpack.c.b16 %v590, %v584
        %v681 = vpack.c.b16 %v591, %v585
        %v682 = vpack.c.b16 %v592, %v586
        %v683 = vpack.c.b16 %v593, %v587
        %v684 = vpack.c.b16 %v594, %v588
        %v685 = vpack.c.b16 %v595, %v589
        %v686 = vpack.c.b16 %v602, %v596
        %v687 = vpack.c.b16 %v603, %v597
        %v688 = vpack.c.b16 %v604, %v598
        %v689 = vpack.c.b16 %v605, %v599
        %v690 = vpack.c.b16 %v606, %v600
        %v691 = vpack.c.b16 %v607, %v601
        %v692 = vpack.c.b16 %v614, %v608
        %v693 = vpack.c.b16 %v615, %v609
        %v694 = vpack.c.b16 %v616, %v610
        %v695 = vpack.c.b16 %v617, %v611
        %v696 = vpack.c.b16 %v618, %v612
        %v697 = vpack.c.b16 %v619, %v613
        %v698 = vpack.c.b16 %v626, %v620
        %v699 = vpack.c.b16 %v627, %v621
        %v700 = vpack.c.b16 %v628, %v622
        %v701 = vpack.c.b16 %v629, %v623
        %v702 = vpack.c.b16 %v630, %v624
        %v703 = vpack.c.b16 %v631, %v625
        %v704 = vpack.c.b16 %v638, %v632
        %v705 = vpack.c.b16 %v639, %v633
        %v706 = vpack.c.b16 %v640, %v634
        %v707 = vpack.c.b16 %v641, %v635
        %v708 = vpack.c.b16 %v642, %v636
        %v709 = vpack.c.b16 %v643, %v637
        %v710 = vpack.c.b16 %v650, %v644
        %v711 = vpack.c.b16 %v651, %v645
        %v712 = vpack.c.b16 %v652, %v646
        %v713 = vpack.c.b16 %v653, %v647
        %v714 = vpack.c.b16 %v654, %v648
        %v715 = vpack.c.b16 %v655, %v649
        %v716 = vpack.c.b16 %v662, %v656
        %v717 = vpack.c.b16 %v663, %v657
        %v718 = vpack.c.b16 %v664, %v658
        %v719 = vpack.c.b16 %v665, %v659
        %v720 = vpack.c.b16 %v666, %v660
        %v721 = vpack.c.b16 %v667, %v661
        %v722 = vpack.c.b16 %v674, %v668
        %v723 = vpack.c.b16 %v675, %v669
        %v724 = vpack.c.b16 %v676, %v670
        %v725 = vpack.c.b16 %v677, %v671
        %v726 = vpack.c.b16 %v678, %v672
        %v727 = vpack.c.b16 %v679, %v673
        %v872 = vunpack.c.l.b16 %v440
        %v873 = vunpack.c.l.b16 %v441
        %v874 = vunpack.c.l.b16 %v442
        %v875 = vunpack.c.l.b16 %v443
        %v876 = vunpack.c.l.b16 %v444
        %v877 = vunpack.c.l.b16 %v445
        %v878 = vunpack.c.l.b16 %v446
        %v879 = vunpack.c.l.b16 %v447
        %v880 = vunpack.c.l.b16 %v448
        %v881 = vunpack.c.l.b16 %v449
        %v882 = vunpack.c.l.b16 %v450
        %v883 = vunpack.c.l.b16 %v451
        %v884 = vunpack.c.l.b16 %v452
        %v885 = vunpack.c.l.b16 %v453
        %v886 = vunpack.c.l.b16 %v454
        %v887 = vunpack.c.l.b16 %v455
        %v888 = vunpack.c.l.b16 %v456
        %v889 = vunpack.c.l.b16 %v457
        %v890 = vunpack.c.l.b16 %v458
        %v891 = vunpack.c.l.b16 %v459
        %v892 = vunpack.c.l.b16 %v460
        %v893 = vunpack.c.l.b16 %v461
        %v894 = vunpack.c.l.b16 %v462
        %v895 = vunpack.c.l.b16 %v463
        %v896 = vunpack.c.l.b16 %v464
        %v897 = vunpack.c.l.b16 %v465
        %v898 = vunpack.c.l.b16 %v466
        %v899 = vunpack.c.l.b16 %v467
        %v900 = vunpack.c.l.b16 %v468
        %v901 = vunpack.c.l.b16 %v469
        %v902 = vunpack.c.l.b16 %v470
        %v903 = vunpack.c.l.b16 %v471
        %v904 = vunpack.c.l.b16 %v472
        %v905 = vunpack.c.l.b16 %v473
        %v906 = vunpack.c.l.b16 %v474
        %v907 = vunpack.c.l.b16 %v475
        %v908 = vunpack.c.l.b16 %v476
        %v909 = vunpack.c.l.b16 %v477
        %v910 = vunpack.c.l.b16 %v478
        %v911 = vunpack.c.l.b16 %v479
        %v912 = vunpack.c.l.b16 %v480
        %v913 = vunpack.c.l.b16 %v481
        %v914 = vunpack.c.l.b16 %v482
        %v915 = vunpack.c.l.b16 %v483
        %v916 = vunpack.c.l.b16 %v484
        %v917 = vunpack.c.l.b16 %v485
        %v918 = vunpack.c.l.b16 %v486
        %v919 = vunpack.c.l.b16 %v487
        %v920 = vunpack.c.l.b16 %v488
        %v921 = vunpack.c.l.b16 %v489
        %v922 = vunpack.c.l.b16 %v490
        %v923 = vunpack.c.l.b16 %v491
        %v924 = vunpack.c.l.b16 %v492
        %v925 = vunpack.c.l.b16 %v493
        %v926 = vunpack.c.l.b16 %v494
        %v927 = vunpack.c.l.b16 %v495
        %v928 = vunpack.c.l.b16 %v496
        %v929 = vunpack.c.l.b16 %v497
        %v930 = vunpack.c.l.b16 %v498
        %v931 = vunpack.c.l.b16 %v499
        %v932 = vunpack.c.l.b16 %v500
        %v933 = vunpack.c.l.b16 %v501
        %v934 = vunpack.c.l.b16 %v502
        %v935 = vunpack.c.l.b16 %v503
        %v936 = vunpack.c.l.b16 %v504
        %v937 = vunpack.c.l.b16 %v505
        %v938 = vunpack.c.l.b16 %v506
        %v939 = vunpack.c.l.b16 %v507
        %v940 = vunpack.c.l.b16 %v508
        %v941 = vunpack.c.l.b16 %v509
        %v942 = vunpack.c.l.b16 %v510
        %v943 = vunpack.c.l.b16 %v511
        %v944 = vunpack.c.l.b16 %v512
        %v945 = vunpack.c.l.b16 %v513
        %v946 = vunpack.c.l.b16 %v514
        %v947 = vunpack.c.l.b16 %v515
        %v948 = vunpack.c.l.b16 %v516
        %v949 = vunpack.c.l.b16 %v517
        %v950 = vunpack.c.l.b16 %v518
        %v951 = vunpack.c.l.b16 %v519
        %v952 = vunpack.c.l.b16 %v520
        %v953 = vunpack.c.l.b16 %v521
        %v954 = vunpack.c.l.b16 %v522
        %v955 = vunpack.c.l.b16 %v523
        %v956 = vunpack.c.l.b16 %v524
        %v957 = vunpack.c.l.b16 %v525
        %v958 = vunpack.c.l.b16 %v526
        %v959 = vunpack.c.l.b16 %v527
        %v960 = vunpack.c.l.b16 %v528
        %v961 = vunpack.c.l.b16 %v529
        %v962 = vunpack.c.l.b16 %v530
        %v963 = vunpack.c.l.b16 %v531
        %v964 = vunpack.c.l.b16 %v532
        %v965 = vunpack.c.l.b16 %v533
        %v966 = vunpack.c.l.b16 %v534
        %v967 = vunpack.c.l.b16 %v535
        %v968 = vpack.c.b16 %v873, %v872
        %v969 = vpack.c.b16 %v875, %v874
        %v970 = vpack.c.b16 %v877, %v876
        %v971 = vpack.c.b16 %v879, %v878
        %v972 = vpack.c.b16 %v881, %v880
        %v973 = vpack.c.b16 %v883, %v882
        %v974 = vpack.c.b16 %v885, %v884
        %v975 = vpack.c.b16 %v887, %v886
        %v976 = vpack.c.b16 %v889, %v888
        %v977 = vpack.c.b16 %v891, %v890
        %v978 = vpack.c.b16 %v893, %v892
        %v979 = vpack.c.b16 %v895, %v894
        %v980 = vpack.c.b16 %v897, %v896
        %v981 = vpack.c.b16 %v899, %v898
        %v982 = vpack.c.b16 %v901, %v900
        %v983 = vpack.c.b16 %v903, %v902
        %v984 = vpack.c.b16 %v905, %v904
        %v985 = vpack.c.b16 %v907, %v906
        %v986 = vpack.c.b16 %v909, %v908
        %v987 = vpack.c.b16 %v911, %v910
        %v988 = vpack.c.b16 %v913, %v912
        %v989 = vpack.c.b16 %v915, %v914
        %v990 = vpack.c.b16 %v917, %v916
        %v991 = vpack.c.b16 %v919, %v918
        %v992 = vpack.c.b16 %v921, %v920
        %v993 = vpack.c.b16 %v923, %v922
        %v994 = vpack.c.b16 %v925, %v924
        %v995 = vpack.c.b16 %v927, %v926
        %v996 = vpack.c.b16 %v929, %v928
        %v997 = vpack.c.b16 %v931, %v930
        %v998 = vpack.c.b16 %v933, %v932
        %v999 = vpack.c.b16 %v935, %v934
        %v1000 = vpack.c.b16 %v937, %v936
        %v1001 = vpack.c.b16 %v939, %v938
        %v1002 = vpack.c.b16 %v941, %v940
        %v1003 = vpack.c.b16 %v943, %v942
        %v1004 = vpack.c.b16 %v945, %v944
        %v1005 = vpack.c.b16 %v947, %v946
        %v1006 = vpack.c.b16 %v949, %v948
        %v1007 = vpack.c.b16 %v951, %v950
        %v1008 = vpack.c.b16 %v953, %v952
        %v1009 = vpack.c.b16 %v955, %v954
        %v1010 = vpack.c.b16 %v957, %v956
        %v1011 = vpack.c.b16 %v959, %v958
        %v1012 = vpack.c.b16 %v961, %v960
        %v1013 = vpack.c.b16 %v963, %v962
        %v1014 = vpack.c.b16 %v965, %v964
        %v1015 = vpack.c.b16 %v967, %v966
        %1064 = vmatprep.subr.bf16.mxu0 0
        %1065 = vmatpush1.bf16.msra.mxu0 %v968
        %1066 = vmatprep.subr.bf16.mxu0 0
        %1067 = vmatpush1.bf16.msra.mxu0 %v969
        %1068 = vmatprep.subr.bf16.mxu0 0
        %1069 = vmatpush1.bf16.msra.mxu0 %v970
        %1070 = vmatprep.subr.bf16.mxu0 0
        %1071 = vmatpush1.bf16.msra.mxu0 %v971
        %1072 = vmatprep.subr.bf16.mxu0 0
        %1073 = vmatpush1.bf16.msra.mxu0 %v972
        %1074 = vmatprep.subr.bf16.mxu0 0
        %1075 = vmatpush1.bf16.msra.mxu0 %v973
        %1076 = vmatprep.subr.bf16.mxu0 0
        %1077 = vmatpush1.bf16.msra.mxu0 %v974
        %1078 = vmatprep.subr.bf16.mxu0 0
        %1079 = vmatpush1.bf16.msra.mxu0 %v975
        %1080 = vmatprep.subr.bf16.mxu0 0
        %1081 = vmatpush1.bf16.msra.mxu0 %v976
        %1082 = vmatprep.subr.bf16.mxu0 0
        %1083 = vmatpush1.bf16.msra.mxu0 %v977
        %1084 = vmatprep.subr.bf16.mxu0 0
        %1085 = vmatpush1.bf16.msra.mxu0 %v978
        %1086 = vmatprep.subr.bf16.mxu0 0
        %1087 = vmatpush1.bf16.msra.mxu0 %v979
        %1088 = vmatprep.subr.bf16.mxu0 0
        %1089 = vmatpush1.bf16.msra.mxu0 %v980
        %1090 = vmatprep.subr.bf16.mxu0 0
        %1091 = vmatpush1.bf16.msra.mxu0 %v981
        %1092 = vmatprep.subr.bf16.mxu0 0
        %1093 = vmatpush1.bf16.msra.mxu0 %v982
        %1094 = vmatprep.subr.bf16.mxu0 0
        %1095 = vmatpush1.bf16.msra.mxu0 %v983
        %1096 = vmatprep.mubr.bf16.mxu0 %v681
        %1097 = vmatmul.mubr.bf16.gmra.mrb[0].mxu0 %v680
        %v1098 = vpop.f32.mrb[0].mxu0
        %v1099 = vadd.f32 0.0, %v1098
        %v1100 = vpop.f32.mrb[0].mxu0
        %v1101 = vpop.f32.mrb[0].mxu0
        %v1102 = vadd.f32 0.0, %v1101
        %v1103 = vpop.f32.mrb[0].mxu0
        %1104 = vmatprep.mubr.bf16.mxu0 %v687
        %1105 = vmatmul.mubr.bf16.gmra.mrb[0].mxu0 %v686
        %v1106 = vpop.f32.mrb[0].mxu0
        %v1107 = vadd.f32 0.0, %v1106
        %v1108 = vpop.f32.mrb[0].mxu0
        %v1109 = vpop.f32.mrb[0].mxu0
        %v1110 = vadd.f32 0.0, %v1109
        %v1111 = vpop.f32.mrb[0].mxu0
        %1112 = vmatprep.mubr.bf16.mxu0 %v693
        %1113 = vmatmul.mubr.bf16.gmra.mrb[0].mxu0 %v692
        %v1114 = vpop.f32.mrb[0].mxu0
        %v1115 = vadd.f32 0.0, %v1114
        %v1116 = vpop.f32.mrb[0].mxu0
        %v1117 = vpop.f32.mrb[0].mxu0
        %v1118 = vadd.f32 0.0, %v1117
        %v1119 = vpop.f32.mrb[0].mxu0
        %1120 = vmatprep.mubr.bf16.mxu0 %v699
        %1121 = vmatmul.mubr.bf16.gmra.mrb[0].mxu0 %v698
        %v1122 = vpop.f32.mrb[0].mxu0
        %v1123 = vadd.f32 0.0, %v1122
        %v1124 = vpop.f32.mrb[0].mxu0
        %v1125 = vpop.f32.mrb[0].mxu0
        %v1126 = vadd.f32 0.0, %v1125
        %v1127 = vpop.f32.mrb[0].mxu0
        %1128 = vmatprep.mubr.bf16.mxu0 %v705
        %1129 = vmatmul.mubr.bf16.gmra.mrb[0].mxu0 %v704
        %v1130 = vpop.f32.mrb[0].mxu0
        %v1131 = vadd.f32 0.0, %v1130
        %v1132 = vpop.f32.mrb[0].mxu0
        %v1133 = vpop.f32.mrb[0].mxu0
        %v1134 = vadd.f32 0.0, %v1133
        %v1135 = vpop.f32.mrb[0].mxu0
        %1136 = vmatprep.mubr.bf16.mxu0 %v711
        %1137 = vmatmul.mubr.bf16.gmra.mrb[0].mxu0 %v710
        %v1138 = vpop.f32.mrb[0].mxu0
        %v1139 = vadd.f32 0.0, %v1138
        %v1140 = vpop.f32.mrb[0].mxu0
        %v1141 = vpop.f32.mrb[0].mxu0
        %v1142 = vadd.f32 0.0, %v1141
        %v1143 = vpop.f32.mrb[0].mxu0
        %1144 = vmatprep.mubr.bf16.mxu0 %v717
        %1145 = vmatmul.mubr.bf16.gmra.mrb[0].mxu0 %v716
        %v1146 = vpop.f32.mrb[0].mxu0
        %v1147 = vadd.f32 0.0, %v1146
        %v1148 = vpop.f32.mrb[0].mxu0
        %v1149 = vpop.f32.mrb[0].mxu0
        %v1150 = vadd.f32 0.0, %v1149
        %v1151 = vpop.f32.mrb[0].mxu0
        %1152 = vmatprep.mubr.bf16.mxu0 %v723
        %1153 = vmatmul.mubr.bf16.gmra.mrb[0].mxu0 %v722
        %v1154 = vpop.f32.mrb[0].mxu0
        %v1155 = vadd.f32 0.0, %v1154
        %v1156 = vpop.f32.mrb[0].mxu0
        %v1157 = vpop.f32.mrb[0].mxu0
        %v1158 = vadd.f32 0.0, %v1157
        %v1159 = vpop.f32.mrb[0].mxu0
        %1160 = vdwg.mxu0
        %1161 = vmatprep.subr.bf16.mxu0 0
        %1162 = vmatpush1.bf16.msra.mxu0 %v984
        %1163 = vmatprep.subr.bf16.mxu0 0
        %1164 = vmatpush1.bf16.msra.mxu0 %v985
        %1165 = vmatprep.subr.bf16.mxu0 0
        %1166 = vmatpush1.bf16.msra.mxu0 %v986
        %1167 = vmatprep.subr.bf16.mxu0 0
        %1168 = vmatpush1.bf16.msra.mxu0 %v987
        %1169 = vmatprep.subr.bf16.mxu0 0
        %1170 = vmatpush1.bf16.msra.mxu0 %v988
        %1171 = vmatprep.subr.bf16.mxu0 0
        %1172 = vmatpush1.bf16.msra.mxu0 %v989
        %1173 = vmatprep.subr.bf16.mxu0 0
        %1174 = vmatpush1.bf16.msra.mxu0 %v990
        %1175 = vmatprep.subr.bf16.mxu0 0
        %1176 = vmatpush1.bf16.msra.mxu0 %v991
        %1177 = vmatprep.subr.bf16.mxu0 0
        %1178 = vmatpush1.bf16.msra.mxu0 %v992
        %1179 = vmatprep.subr.bf16.mxu0 0
        %1180 = vmatpush1.bf16.msra.mxu0 %v993
        %1181 = vmatprep.subr.bf16.mxu0 0
        %1182 = vmatpush1.bf16.msra.mxu0 %v994
        %1183 = vmatprep.subr.bf16.mxu0 0
        %1184 = vmatpush1.bf16.msra.mxu0 %v995
        %1185 = vmatprep.subr.bf16.mxu0 0
        %1186 = vmatpush1.bf16.msra.mxu0 %v996
        %1187 = vmatprep.subr.bf16.mxu0 0
        %1188 = vmatpush1.bf16.msra.mxu0 %v997
        %1189 = vmatprep.subr.bf16.mxu0 0
        %1190 = vmatpush1.bf16.msra.mxu0 %v998
        %1191 = vmatprep.subr.bf16.mxu0 0
        %1192 = vmatpush1.bf16.msra.mxu0 %v999
        %1193 = vmatprep.mubr.bf16.mxu0 %v683
        %1194 = vmatmul.mubr.bf16.gmra.mrb[0].mxu0 %v682
        %v1195 = vpop.f32.mrb[0].mxu0
        %v1196 = vadd.f32 %v1099, %v1195
        %v1197 = vpop.f32.mrb[0].mxu0
        %v1198 = vpop.f32.mrb[0].mxu0
        %v1199 = vadd.f32 %v1102, %v1198
        %v1200 = vpop.f32.mrb[0].mxu0
        %1201 = vmatprep.mubr.bf16.mxu0 %v689
        %1202 = vmatmul.mubr.bf16.gmra.mrb[0].mxu0 %v688
        %v1203 = vpop.f32.mrb[0].mxu0
        %v1204 = vadd.f32 %v1107, %v1203
        %v1205 = vpop.f32.mrb[0].mxu0
        %v1206 = vpop.f32.mrb[0].mxu0
        %v1207 = vadd.f32 %v1110, %v1206
        %v1208 = vpop.f32.mrb[0].mxu0
        %1209 = vmatprep.mubr.bf16.mxu0 %v695
        %1210 = vmatmul.mubr.bf16.gmra.mrb[0].mxu0 %v694
        %v1211 = vpop.f32.mrb[0].mxu0
        %v1212 = vadd.f32 %v1115, %v1211
        %v1213 = vpop.f32.mrb[0].mxu0
        %v1214 = vpop.f32.mrb[0].mxu0
        %v1215 = vadd.f32 %v1118, %v1214
        %v1216 = vpop.f32.mrb[0].mxu0
        %1217 = vmatprep.mubr.bf16.mxu0 %v701
        %1218 = vmatmul.mubr.bf16.gmra.mrb[0].mxu0 %v700
        %v1219 = vpop.f32.mrb[0].mxu0
        %v1220 = vadd.f32 %v1123, %v1219
        %v1221 = vpop.f32.mrb[0].mxu0
        %v1222 = vpop.f32.mrb[0].mxu0
        %v1223 = vadd.f32 %v1126, %v1222
        %v1224 = vpop.f32.mrb[0].mxu0
        %1225 = vmatprep.mubr.bf16.mxu0 %v707
        %1226 = vmatmul.mubr.bf16.gmra.mrb[0].mxu0 %v706
        %v1227 = vpop.f32.mrb[0].mxu0
        %v1228 = vadd.f32 %v1131, %v1227
        %v1229 = vpop.f32.mrb[0].mxu0
        %v1230 = vpop.f32.mrb[0].mxu0
        %v1231 = vadd.f32 %v1134, %v1230
        %v1232 = vpop.f32.mrb[0].mxu0
        %1233 = vmatprep.mubr.bf16.mxu0 %v713
        %1234 = vmatmul.mubr.bf16.gmra.mrb[0].mxu0 %v712
        %v1235 = vpop.f32.mrb[0].mxu0
        %v1236 = vadd.f32 %v1139, %v1235
        %v1237 = vpop.f32.mrb[0].mxu0
        %v1238 = vpop.f32.mrb[0].mxu0
        %v1239 = vadd.f32 %v1142, %v1238
        %v1240 = vpop.f32.mrb[0].mxu0
        %1241 = vmatprep.mubr.bf16.mxu0 %v719
        %1242 = vmatmul.mubr.bf16.gmra.mrb[0].mxu0 %v718
        %v1243 = vpop.f32.mrb[0].mxu0
        %v1244 = vadd.f32 %v1147, %v1243
        %v1245 = vpop.f32.mrb[0].mxu0
        %v1246 = vpop.f32.mrb[0].mxu0
        %v1247 = vadd.f32 %v1150, %v1246
        %v1248 = vpop.f32.mrb[0].mxu0
        %1249 = vmatprep.mubr.bf16.mxu0 %v725
        %1250 = vmatmul.mubr.bf16.gmra.mrb[0].mxu0 %v724
        %v1251 = vpop.f32.mrb[0].mxu0
        %v1252 = vadd.f32 %v1155, %v1251
        %v1253 = vpop.f32.mrb[0].mxu0
        %v1254 = vpop.f32.mrb[0].mxu0
        %v1255 = vadd.f32 %v1158, %v1254
        %v1256 = vpop.f32.mrb[0].mxu0
        %1257 = vdwg.mxu0
        %1258 = vmatprep.subr.bf16.mxu0 0
        %1259 = vmatpush1.bf16.msra.mxu0 %v1000
        %1260 = vmatprep.subr.bf16.mxu0 0
        %1261 = vmatpush1.bf16.msra.mxu0 %v1001
        %1262 = vmatprep.subr.bf16.mxu0 0
        %1263 = vmatpush1.bf16.msra.mxu0 %v1002
        %1264 = vmatprep.subr.bf16.mxu0 0
        %1265 = vmatpush1.bf16.msra.mxu0 %v1003
        %1266 = vmatprep.subr.bf16.mxu0 0
        %1267 = vmatpush1.bf16.msra.mxu0 %v1004
        %1268 = vmatprep.subr.bf16.mxu0 0
        %1269 = vmatpush1.bf16.msra.mxu0 %v1005
        %1270 = vmatprep.subr.bf16.mxu0 0
        %1271 = vmatpush1.bf16.msra.mxu0 %v1006
        %1272 = vmatprep.subr.bf16.mxu0 0
        %1273 = vmatpush1.bf16.msra.mxu0 %v1007
        %1274 = vmatprep.subr.bf16.mxu0 0
        %1275 = vmatpush1.bf16.msra.mxu0 %v1008
        %1276 = vmatprep.subr.bf16.mxu0 0
        %1277 = vmatpush1.bf16.msra.mxu0 %v1009
        %1278 = vmatprep.subr.bf16.mxu0 0
        %1279 = vmatpush1.bf16.msra.mxu0 %v1010
        %1280 = vmatprep.subr.bf16.mxu0 0
        %1281 = vmatpush1.bf16.msra.mxu0 %v1011
        %1282 = vmatprep.subr.bf16.mxu0 0
        %1283 = vmatpush1.bf16.msra.mxu0 %v1012
        %1284 = vmatprep.subr.bf16.mxu0 0
        %1285 = vmatpush1.bf16.msra.mxu0 %v1013
        %1286 = vmatprep.subr.bf16.mxu0 0
        %1287 = vmatpush1.bf16.msra.mxu0 %v1014
        %1288 = vmatprep.subr.bf16.mxu0 0
        %1289 = vmatpush1.bf16.msra.mxu0 %v1015
        %1290 = vmatprep.mubr.bf16.mxu0 %v685
        %1291 = vmatmul.mubr.bf16.gmra.mrb[0].mxu0 %v684
        %v1292 = vpop.f32.mrb[0].mxu0
        %v1293 = vadd.f32 %v1196, %v1292
        %v1294 = vpop.f32.mrb[0].mxu0
        %v1295 = vpop.f32.mrb[0].mxu0
        %v1296 = vadd.f32 %v1199, %v1295
        %v1297 = vpop.f32.mrb[0].mxu0
        %1298 = vmatprep.mubr.bf16.mxu0 %v691
        %1299 = vmatmul.mubr.bf16.gmra.mrb[0].mxu0 %v690
        %v1300 = vpop.f32.mrb[0].mxu0
        %v1301 = vadd.f32 %v1204, %v1300
        %v1302 = vpop.f32.mrb[0].mxu0
        %v1303 = vpop.f32.mrb[0].mxu0
        %v1304 = vadd.f32 %v1207, %v1303
        %v1305 = vpop.f32.mrb[0].mxu0
        %1306 = vmatprep.mubr.bf16.mxu0 %v697
        %1307 = vmatmul.mubr.bf16.gmra.mrb[0].mxu0 %v696
        %v1308 = vpop.f32.mrb[0].mxu0
        %v1309 = vadd.f32 %v1212, %v1308
        %v1310 = vpop.f32.mrb[0].mxu0
        %v1311 = vpop.f32.mrb[0].mxu0
        %v1312 = vadd.f32 %v1215, %v1311
        %v1313 = vpop.f32.mrb[0].mxu0
        %1314 = vmatprep.mubr.bf16.mxu0 %v703
        %1315 = vmatmul.mubr.bf16.gmra.mrb[0].mxu0 %v702
        %v1316 = vpop.f32.mrb[0].mxu0
        %v1317 = vadd.f32 %v1220, %v1316
        %v1318 = vpop.f32.mrb[0].mxu0
        %v1319 = vpop.f32.mrb[0].mxu0
        %v1320 = vadd.f32 %v1223, %v1319
        %v1321 = vpop.f32.mrb[0].mxu0
        %1322 = vmatprep.mubr.bf16.mxu0 %v709
        %1323 = vmatmul.mubr.bf16.gmra.mrb[0].mxu0 %v708
        %v1324 = vpop.f32.mrb[0].mxu0
        %v1325 = vadd.f32 %v1228, %v1324
        %v1326 = vpop.f32.mrb[0].mxu0
        %v1327 = vpop.f32.mrb[0].mxu0
        %v1328 = vadd.f32 %v1231, %v1327
        %v1329 = vpop.f32.mrb[0].mxu0
        %1330 = vmatprep.mubr.bf16.mxu0 %v715
        %1331 = vmatmul.mubr.bf16.gmra.mrb[0].mxu0 %v714
        %v1332 = vpop.f32.mrb[0].mxu0
        %v1333 = vadd.f32 %v1236, %v1332
        %v1334 = vpop.f32.mrb[0].mxu0
        %v1335 = vpop.f32.mrb[0].mxu0
        %v1336 = vadd.f32 %v1239, %v1335
        %v1337 = vpop.f32.mrb[0].mxu0
        %1338 = vmatprep.mubr.bf16.mxu0 %v721
        %1339 = vmatmul.mubr.bf16.gmra.mrb[0].mxu0 %v720
        %v1340 = vpop.f32.mrb[0].mxu0
        %v1341 = vadd.f32 %v1244, %v1340
        %v1342 = vpop.f32.mrb[0].mxu0
        %v1343 = vpop.f32.mrb[0].mxu0
        %v1344 = vadd.f32 %v1247, %v1343
        %v1345 = vpop.f32.mrb[0].mxu0
        %1346 = vmatprep.mubr.bf16.mxu0 %v727
        %1347 = vmatmul.mubr.bf16.gmra.mrb[0].mxu0 %v726
        %v1348 = vpop.f32.mrb[0].mxu0
        %v1349 = vadd.f32 %v1252, %v1348
        %v1350 = vpop.f32.mrb[0].mxu0
        %v1351 = vpop.f32.mrb[0].mxu0
        %v1352 = vadd.f32 %v1255, %v1351
        %v1353 = vpop.f32.mrb[0].mxu0
        %1354 = vdwg.mxu0
        %v1355 = vadd.f32 %v376, %v1293
        %v1356 = vadd.f32 %v377, %v1296
        %v1357 = vadd.f32 %v378, %v1301
        %v1358 = vadd.f32 %v379, %v1304
        %v1359 = vadd.f32 %v380, %v1309
        %v1360 = vadd.f32 %v381, %v1312
        %v1361 = vadd.f32 %v382, %v1317
        %v1362 = vadd.f32 %v383, %v1320
        %v1363 = vadd.f32 %v384, %v1325
        %v1364 = vadd.f32 %v385, %v1328
        %v1365 = vadd.f32 %v386, %v1333
        %v1366 = vadd.f32 %v387, %v1336
        %v1367 = vadd.f32 %v388, %v1341
        %v1368 = vadd.f32 %v389, %v1344
        %v1369 = vadd.f32 %v390, %v1349
        %v1370 = vadd.f32 %v391, %v1352
        %vm1371 = vcmask 23552
        %1372 = vst.msk [vmem:[#allocation2] sm:$0xff] %vm1371, %v1355
        %1373 = vst.msk [vmem:[#allocation2 + $0x8] sm:$0xff] %vm1371, %v1356
        %1374 = vst.msk [vmem:[#allocation2 + $0x10] sm:$0xff] %vm1371, %v1357
        %1375 = vst.msk [vmem:[#allocation2 + $0x18] sm:$0xff] %vm1371, %v1358
        %1376 = vst.msk [vmem:[#allocation2 + $0x20] sm:$0xff] %vm1371, %v1359
        %1377 = vst.msk [vmem:[#allocation2 + $0x28] sm:$0xff] %vm1371, %v1360
        %1378 = vst.msk [vmem:[#allocation2 + $0x30] sm:$0xff] %vm1371, %v1361
        %1379 = vst.msk [vmem:[#allocation2 + $0x38] sm:$0xff] %vm1371, %v1362
        %1380 = vst.msk [vmem:[#allocation2 + $0x40] sm:$0xff] %vm1371, %v1363
        %1381 = vst.msk [vmem:[#allocation2 + $0x48] sm:$0xff] %vm1371, %v1364
        %1382 = vst.msk [vmem:[#allocation2 + $0x50] sm:$0xff] %vm1371, %v1365
        %1383 = vst.msk [vmem:[#allocation2 + $0x58] sm:$0xff] %vm1371, %v1366
        %1384 = vst.msk [vmem:[#allocation2 + $0x60] sm:$0xff] %vm1371, %v1367
        %1385 = vst.msk [vmem:[#allocation2 + $0x68] sm:$0xff] %vm1371, %v1368
        %1386 = vst.msk [vmem:[#allocation2 + $0x70] sm:$0xff] %vm1371, %v1369
        %1387 = vst.msk [vmem:[#allocation2 + $0x78] sm:$0xff] %vm1371, %v1370
        %p1388 = scmp.eq.s32.totalorder %s20, 2
        // Predicated region
        $region64: #{forward.19} parent=54 // pred_check
          %p1389 = pneg %p1388
        $region65: #{forward.19} parent=54 // pred_check_branch
          %1391 = sbr.rel (%p1389) target = $region67
        $region66: #{forward.19} parent=54 // pred_region
          %v1392 = vld [vmem:[#allocation2] sm:$0xff]
          %v1393 = vld [vmem:[#allocation2 + $0x8] sm:$0xff]
          %v1394 = vld [vmem:[#allocation2 + $0x10] sm:$0xff]
          %v1395 = vld [vmem:[#allocation2 + $0x18] sm:$0xff]
          %v1396 = vld [vmem:[#allocation2 + $0x20] sm:$0xff]
          %v1397 = vld [vmem:[#allocation2 + $0x28] sm:$0xff]
          %v1398 = vld [vmem:[#allocation2 + $0x30] sm:$0xff]
          %v1399 = vld [vmem:[#allocation2 + $0x38] sm:$0xff]
          %v1400 = vld [vmem:[#allocation2 + $0x40] sm:$0xff]
          %v1401 = vld [vmem:[#allocation2 + $0x48] sm:$0xff]
          %v1402 = vld [vmem:[#allocation2 + $0x50] sm:$0xff]
          %v1403 = vld [vmem:[#allocation2 + $0x58] sm:$0xff]
          %v1404 = vld [vmem:[#allocation2 + $0x60] sm:$0xff]
          %v1405 = vld [vmem:[#allocation2 + $0x68] sm:$0xff]
          %v1406 = vld [vmem:[#allocation2 + $0x70] sm:$0xff]
          %v1407 = vld [vmem:[#allocation2 + $0x78] sm:$0xff]
          %v1408 = vld [vmem:[%s2] sm:$0x1]
          %v1410 = vlaneseq
          %v1411 = vshrl.u32 %v1410, 7
          %v1412 = vsub.s32 0, %v1411
          %v1413 = vrot.slane %v1408, %v1412
          %v1415 = vmul.f32 %v1392, %v1413
          %v1416 = vmul.f32 %v1393, %v1413
          %v1417 = vmul.f32 %v1394, %v1413
          %v1418 = vmul.f32 %v1395, %v1413
          %v1419 = vmul.f32 %v1396, %v1413
          %v1420 = vmul.f32 %v1397, %v1413
          %v1421 = vmul.f32 %v1398, %v1413
          %v1422 = vmul.f32 %v1399, %v1413
          %v1423 = vmul.f32 %v1400, %v1413
          %v1424 = vmul.f32 %v1401, %v1413
          %v1425 = vmul.f32 %v1402, %v1413
          %v1426 = vmul.f32 %v1403, %v1413
          %v1427 = vmul.f32 %v1404, %v1413
          %v1428 = vmul.f32 %v1405, %v1413
          %v1429 = vmul.f32 %v1406, %v1413
          %v1430 = vmul.f32 %v1407, %v1413
          %v1431 = vld [vmem:[%s3] sm:$0x1]
          %v1433 = vlaneseq
          %v1434 = vshrl.u32 %v1433, 7
          %v1435 = vsub.s32 0, %v1434
          %v1436 = vrot.slane %v1431, %v1435
          %v1438 = vadd.f32 %v1415, %v1436
          %v1439 = vadd.f32 %v1416, %v1436
          %v1440 = vadd.f32 %v1417, %v1436
          %v1441 = vadd.f32 %v1418, %v1436
          %v1442 = vadd.f32 %v1419, %v1436
          %v1443 = vadd.f32 %v1420, %v1436
          %v1444 = vadd.f32 %v1421, %v1436
          %v1445 = vadd.f32 %v1422, %v1436
          %v1446 = vadd.f32 %v1423, %v1436
          %v1447 = vadd.f32 %v1424, %v1436
          %v1448 = vadd.f32 %v1425, %v1436
          %v1449 = vadd.f32 %v1426, %v1436
          %v1450 = vadd.f32 %v1427, %v1436
          %v1451 = vadd.f32 %v1428, %v1436
          %v1452 = vadd.f32 %v1429, %v1436
          %v1453 = vadd.f32 %v1430, %v1436
          %1454 = vst.msk [vmem:[%s352] sm:$0xff] %vm1371, %v1438
          %1455 = vst.msk [vmem:[%s352 + $0x8] sm:$0xff] %vm1371, %v1439
          %1456 = vst.msk [vmem:[%s352 + $0x10] sm:$0xff] %vm1371, %v1440
          %1457 = vst.msk [vmem:[%s352 + $0x18] sm:$0xff] %vm1371, %v1441
          %1458 = vst.msk [vmem:[%s352 + $0x20] sm:$0xff] %vm1371, %v1442
          %1459 = vst.msk [vmem:[%s352 + $0x28] sm:$0xff] %vm1371, %v1443
          %1460 = vst.msk [vmem:[%s352 + $0x30] sm:$0xff] %vm1371, %v1444
          %1461 = vst.msk [vmem:[%s352 + $0x38] sm:$0xff] %vm1371, %v1445
          %1462 = vst.msk [vmem:[%s352 + $0x40] sm:$0xff] %vm1371, %v1446
          %1463 = vst.msk [vmem:[%s352 + $0x48] sm:$0xff] %vm1371, %v1447
          %1464 = vst.msk [vmem:[%s352 + $0x50] sm:$0xff] %vm1371, %v1448
          %1465 = vst.msk [vmem:[%s352 + $0x58] sm:$0xff] %vm1371, %v1449
          %1466 = vst.msk [vmem:[%s352 + $0x60] sm:$0xff] %vm1371, %v1450
          %1467 = vst.msk [vmem:[%s352 + $0x68] sm:$0xff] %vm1371, %v1451
          %1468 = vst.msk [vmem:[%s352 + $0x70] sm:$0xff] %vm1371, %v1452
          %1469 = vst.msk [vmem:[%s352 + $0x78] sm:$0xff] %vm1371, %v1453
        $region67: #{forward.19} parent=54 // pred_fallthru
          _
        %s1470 = smul.u32 16, %s19
        %p1471 = scmp.lt.s32.totalorder %s1470, 15
        %s1472 = scalar_select %p1471, %s1470, 15
        %s1473 = smul.addr %s1472, 8
        %s1474 = scalar_lea.vmem %s4, %s1473
        // Predicated region
        $region68: #{forward.19} parent=54 // pred_check
          %p1475 = pneg %p141
        $region69: #{forward.19} parent=54 // pred_check_branch
          %1477 = sbr.rel (%p1475) target = $region71
        $region70: #{forward.19} parent=54 // pred_region
          %s1478 = smul.u32 16, %s19
        $region71: #{forward.19} parent=54 // pred_fallthru
          _
        // Predicated region
        $region72: #{forward.19} parent=54 // pred_check
          %p1479 = pneg %p141
        $region73: #{forward.19} parent=54 // pred_check_branch
          %1481 = sbr.rel (%p1479) target = $region75
        $region74: #{forward.19} parent=54 // pred_region
          %s1482 = smul.u32 16, %s19
          %p1483 = scmp.lt.s32.totalorder %s1482, 15
          %s1484 = scalar_select %p1483, %s1482, 15
          %s1485 = smul.addr %s1484, 8
          %s1486 = scalar_lea.vmem %s4, %s1485
        $region75: #{forward.19} parent=54 // pred_fallthru
          _
      $region55: #{forward.19} parent=5 // pred_fallthru
        _
      %p1487 = scmp.le.s32.totalorder 2, %s10
      // Predicated region
      $region76: #{forward.19} parent=5 // pred_check
        %p1488 = pneg %p1487
      $region77: #{forward.19} parent=5 // pred_check_branch
        %1490 = sbr.rel (%p1488) target = $region79
      $region78: #{forward.19} parent=5 // pred_region
        %s1491 = ssub.s32 %s10, 2
      $region79: #{forward.19} parent=5 // pred_fallthru
        _
    $region6: #{forward.19} parent=1 // loop_footer
      %s14 = sadd.s32 1, %s10
    $region7: #{forward.19} parent=1 // loop_footer_branch
      %9 = sbr.rel target = $region3
    $region8: #{forward.19} parent=1 // loop_exit
      _

</llo_original>
